<compile_context>
chip_gen: v7x
topology: tpu7x:2x2x1
jax: 0.10.0
libtpu: 0.0.40
codegen_flags: <defaults>
</compile_context>

<pallas_src>
import functools

import numpy as np
import jax
import jax.numpy as jnp
from jax.experimental import pallas as pl
from jax.experimental.pallas import tpu as pltpu

_VMEM_LIMIT = 32 * 1024 * 1024


def _round_up(x, m):
    return (x + m - 1) // m * m


# ---------------------------------------------------------------------------
# Tiled matmul:  C[M,N] = A[M,K] @ B[K,N],  bf16 operands, f32 accumulation.
# ---------------------------------------------------------------------------
def _matmul_kernel(a_ref, b_ref, o_ref, acc_ref, *, act_slope):
    k = pl.program_id(2)

    @pl.when(k == 0)
    def _():
        acc_ref[...] = jnp.zeros_like(acc_ref)

    acc_ref[...] += jnp.dot(a_ref[...], b_ref[...],
                            preferred_element_type=jnp.float32)

    @pl.when(k == pl.num_programs(2) - 1)
    def _():
        r = acc_ref[...]
        if act_slope is not None:            # fused LeakyReLU epilogue
            r = jnp.where(r >= 0, r, act_slope * r)
        o_ref[...] = r.astype(o_ref.dtype)


def pallas_matmul(a, b, *, out_dtype=jnp.bfloat16, act_slope=None):
    M, K = a.shape
    K2, N = b.shape
    assert K == K2
    a = a.astype(jnp.bfloat16)
    b = b.astype(jnp.bfloat16)

    # K tile: larger weight tiles for the small-M (weight-streaming) layers.
    if K <= 512:
        tk = K
    elif M <= 512 and K % 1024 == 0:
        tk = 1024
    else:
        tk = 512
    assert K % tk == 0, (K, tk)
    # N tile.
    tn = N if N <= 256 else 256
    assert N % tn == 0, (N, tn)
    # M tile: big tiles for skinny GEMMs (grid-step overhead dominated otherwise).
    cap = 4096 if (K <= 256 and N <= 256) else 1024
    tm = min(cap, _round_up(M, 256))

    Mp = M
    if M < tm:                               # tiny-M GEMM: pad so one full block covers it
        a = jnp.pad(a, ((0, tm - M), (0, 0)))
        Mp = tm

    grid = (pl.cdiv(Mp, tm), N // tn, K // tk)
    out = pl.pallas_call(
        functools.partial(_matmul_kernel, act_slope=act_slope),
        out_shape=jax.ShapeDtypeStruct((Mp, N), out_dtype),
        grid_spec=pltpu.PrefetchScalarGridSpec(
            num_scalar_prefetch=0,
            grid=grid,
            in_specs=[pl.BlockSpec((tm, tk), lambda i, j, k: (i, k)),
                      pl.BlockSpec((tk, tn), lambda i, j, k: (k, j))],
            out_specs=pl.BlockSpec((tm, tn), lambda i, j, k: (i, j)),
            scratch_shapes=[pltpu.VMEM((tm, tn), jnp.float32)]),
        compiler_params=pltpu.CompilerParams(
            dimension_semantics=("parallel", "parallel", "arbitrary"),
            vmem_limit_bytes=_VMEM_LIMIT),
    )(a, b)
    return out[:M] if Mp != M else out


# ---------------------------------------------------------------------------
# Direct Conv2d(k=4, stride=1, pad=1, bias=False): no im2col in HBM.
# The zero-padded NHWC activation is flattened to rows r = h*(W+2)+w and kept resident
# in VMEM; the 16 (kh,kw) windows are row-shifted views fed straight to the MXU.
# Outputs at the row-wrap columns are garbage and sliced away afterwards.
# ---------------------------------------------------------------------------
def _dconv_kernel(a_ref, w_ref, o_ref, acc_ref, *, wp, act_slope):
    ci = pl.program_id(2)

    @pl.when(ci == 0)
    def _():
        acc_ref[...] = jnp.zeros_like(acc_ref)

    rows = acc_ref.shape[0]
    for kh in range(4):
        for kw in range(4):
            a = a_ref[pl.ds(kh * wp + kw, rows), :]
            acc_ref[...] += jnp.dot(a, w_ref[kh * 4 + kw],
                                    preferred_element_type=jnp.float32)

    @pl.when(ci == pl.num_programs(2) - 1)
    def _():
        r = acc_ref[...]
        if act_slope is not None:            # fused LeakyReLU epilogue
            r = jnp.where(r >= 0, r, act_slope * r)
        o_ref[...] = r.astype(o_ref.dtype)


def conv2d_direct(x, w_taps, *, act_slope=None):
    """x: [N,H,W,Cin]; w_taps: [16, Cin, Cout] (tap = kh*4+kw).  Returns [N,H-1,W-1,Cout]."""
    N, H, W, Cin = x.shape
    Cout = w_taps.shape[2]
    Ho, Wo = H - 1, W - 1
    Hp, Wp = H + 2, W + 2
    L = Hp * Wp
    R = _round_up(Ho * Wp, 8)                 # output rows computed (incl. wrap garbage)
    RA = _round_up(R + 3 * Wp + 3, 8)         # input rows incl. 4x4 window halo
    xp = jnp.pad(x.astype(jnp.bfloat16), ((0, 0), (1, 1), (1, 1), (0, 0)))
    af = xp.reshape(N, L, Cin)
    af = jnp.pad(af, ((0, 0), (0, RA - L), (0, 0)))
    cin_b = min(Cin, 256)
    cout_b = min(Cout, 256)
    assert Cin % cin_b == 0 and Cout % cout_b == 0

    out = pl.pallas_call(
        functools.partial(_dconv_kernel, wp=Wp, act_slope=act_slope),
        out_shape=jax.ShapeDtypeStruct((N, R, Cout), jnp.bfloat16),
        grid_spec=pltpu.PrefetchScalarGridSpec(
            num_scalar_prefetch=0,
            grid=(N, Cout // cout_b, Cin // cin_b),
            in_specs=[pl.BlockSpec((None, RA, cin_b), lambda n, co, ci: (n, 0, ci)),
                      pl.BlockSpec((16, cin_b, cout_b), lambda n, co, ci: (0, ci, co))],
            out_specs=pl.BlockSpec((None, R, cout_b), lambda n, co, ci: (n, 0, co)),
            scratch_shapes=[pltpu.VMEM((R, cout_b), jnp.float32)]),
        compiler_params=pltpu.CompilerParams(
            dimension_semantics=("parallel", "parallel", "arbitrary"),
            vmem_limit_bytes=_VMEM_LIMIT),
    )(af, w_taps.astype(jnp.bfloat16))
    return out[:, :Ho * Wp, :].reshape(N, Ho, Wp, Cout)[:, :, :Wo, :]


def conv2d_gemm(x, w_mat, *, act_slope=None):
    """Conv2d(k=4,s=1,p=1,bias=False) via im2col GEMM -- only used for the tiny-Cin first
    layer.  w_mat: [16*Cin, Cout], rows ordered (kh, kw, ci)."""
    N, H, W, Cin = x.shape
    Cout = w_mat.shape[1]
    xp = jnp.pad(x, ((0, 0), (1, 1), (1, 1), (0, 0)))
    Ho, Wo = H - 1, W - 1
    cols = [xp[:, p:p + Ho, q:q + Wo, :] for p in range(4) for q in range(4)]
    A = jnp.concatenate(cols, axis=-1).reshape(N * Ho * Wo, 16 * Cin)
    y = pallas_matmul(A, w_mat, act_slope=act_slope)
    return y.reshape(N, Ho, Wo, Cout)


# ---------------------------------------------------------------------------
# ConvTranspose2d(k=4, s=2, p=1, bias=False): one tap-stacked GEMM + 4-tap shift-add.
# Output row 2a+r:  r=0 -> P[a]@w[kh=1] + P[a-1]@w[kh=3]
#                   r=1 -> P[a+1]@w[kh=0] + P[a]@w[kh=2]        (same along W)
# ---------------------------------------------------------------------------
_CT_PAIRS = {0: ((1, 1), (3, 0)), 1: ((0, 2), (2, 1))}   # (kh, offset into the 1-padded P)


def conv_transpose2d(x, w_all):
    """x: [N,H,W,Cin]; w_all: [Cin, 16*Cout], columns ordered (kh*4+kw, co)."""
    N, H, W, Cin = x.shape
    Cout = w_all.shape[1] // 16
    P = pallas_matmul(x.reshape(N * H * W, Cin), w_all)
    P = P.reshape(N, H, W, 16, Cout)
    Pp = jnp.pad(P, ((0, 0), (1, 1), (1, 1), (0, 0), (0, 0)))
    phases = []
    for ra in range(2):
        row = []
        for rb in range(2):
            acc = None
            for kh, oh in _CT_PAIRS[ra]:
                for kw, ow in _CT_PAIRS[rb]:
                    t = Pp[:, oh:oh + H, ow:ow + W, kh * 4 + kw, :].astype(jnp.float32)
                    acc = t if acc is None else acc + t
            row.append(acc)
        phases.append(row)
    y = jnp.stack([jnp.stack(phases[0], axis=3), jnp.stack(phases[1], axis=3)], axis=2)
    return y.reshape(N, 2 * H, 2 * W, Cout).astype(jnp.bfloat16)


# ---------------------------------------------------------------------------
# InstanceNorm2d (affine=False) + LeakyReLU/ReLU.
# ---------------------------------------------------------------------------
def _inorm_act_kernel(x_ref, o_ref, *, normalize, slope, eps=1e-5):
    x = x_ref[...].astype(jnp.float32)                 # [H, W, cb]
    if normalize:
        mean = jnp.mean(x, axis=(0, 1), keepdims=True)
        var = jnp.mean(jnp.square(x - mean), axis=(0, 1), keepdims=True)
        x = (x - mean) * jax.lax.rsqrt(var + eps)
    o_ref[...] = jnp.where(x >= 0, x, slope * x).astype(o_ref.dtype)


def instance_norm_act(x, *, normalize, slope):
    N, H, W, C = x.shape
    cb = C if C <= 128 else 128
    return pl.pallas_call(
        functools.partial(_inorm_act_kernel, normalize=normalize, slope=slope),
        out_shape=jax.ShapeDtypeStruct((N, H, W, C), jnp.bfloat16),
        grid=(N, C // cb),
        in_specs=[pl.BlockSpec((None, H, W, cb), lambda n, c: (n, 0, 0, c))],
        out_specs=pl.BlockSpec((None, H, W, cb), lambda n, c: (n, 0, 0, c)),
        compiler_params=pltpu.CompilerParams(
            dimension_semantics=("parallel", "parallel"),
            vmem_limit_bytes=_VMEM_LIMIT),
    )(x)


# ---------------------------------------------------------------------------
# BlurPool (antialiased_cnns, filt_size=4, reflect pad [1,2,1,2], depthwise).
# ---------------------------------------------------------------------------
_BLUR4 = np.outer((1.0, 3.0, 3.0, 1.0), (1.0, 3.0, 3.0, 1.0)) / 64.0


def _blur_s1_kernel(xp_ref, o_ref):
    H, W = o_ref.shape[0], o_ref.shape[1]
    acc = None
    for p in range(4):
        for q in range(4):
            v = xp_ref[p:p + H, q:q + W, :].astype(jnp.float32)
            term = float(_BLUR4[p, q]) * v
            acc = term if acc is None else acc + term
    o_ref[...] = acc.astype(o_ref.dtype)


def blurpool_s1(x):
    """BlurPool(stride=1): reflect pad (1,2) + 4x4 blur, windows formed in-kernel."""
    N, H, W, C = x.shape
    xp = jnp.pad(x, ((0, 0), (1, 2), (1, 2), (0, 0)), mode="reflect")
    cb = C if C <= 128 else 128
    return pl.pallas_call(
        _blur_s1_kernel,
        out_shape=jax.ShapeDtypeStruct((N, H, W, C), jnp.bfloat16),
        grid=(N, C // cb),
        in_specs=[pl.BlockSpec((None, H + 3, W + 3, cb), lambda n, c: (n, 0, 0, c))],
        out_specs=pl.BlockSpec((None, H, W, cb), lambda n, c: (n, 0, 0, c)),
        compiler_params=pltpu.CompilerParams(
            dimension_semantics=("parallel", "parallel"),
            vmem_limit_bytes=_VMEM_LIMIT),
    )(xp)


def _blur_s2_kernel(ph_ref, o_ref):
    Ho, Wo = o_ref.shape[0], o_ref.shape[1]
    Wq = Wo + 1
    acc = None
    for rp in range(2):
        for rq in range(2):
            base = (rp * 2 + rq) * Wq
            for a in range(2):
                for b in range(2):
                    wgt = float(_BLUR4[2 * a + rp, 2 * b + rq])
                    v = ph_ref[a:a + Ho, base + b:base + b + Wo, :].astype(jnp.float32)
                    term = wgt * v
                    acc = term if acc is None else acc + term
    o_ref[...] = acc.astype(o_ref.dtype)


def blurpool_s2(x):
    """BlurPool(stride=2): reflect pad (1,2) + stride-2 4x4 blur via 4 polyphase sub-grids."""
    N, H, W, C = x.shape
    assert H % 2 == 1 and W % 2 == 1, "expected odd spatial size (k=4,p=1 conv output)"
    xp = jnp.pad(x, ((0, 0), (1, 2), (1, 2), (0, 0)), mode="reflect")
    Ho, Wo = (H + 1) // 2, (W + 1) // 2
    phases = jnp.concatenate(
        [xp[:, rp::2, rq::2, :] for rp in range(2) for rq in range(2)], axis=2)
    cb = C if C <= 128 else 128
    return pl.pallas_call(
        _blur_s2_kernel,
        out_shape=jax.ShapeDtypeStruct((N, Ho, Wo, C), jnp.bfloat16),
        grid=(N, C // cb),
        in_specs=[pl.BlockSpec((None, Ho + 1, 4 * (Wo + 1), cb),
                               lambda n, c: (n, 0, 0, c))],
        out_specs=pl.BlockSpec((None, Ho, Wo, cb), lambda n, c: (n, 0, 0, c)),
        compiler_params=pltpu.CompilerParams(
            dimension_semantics=("parallel", "parallel"),
            vmem_limit_bytes=_VMEM_LIMIT),
    )(phases)


# ---------------------------------------------------------------------------
# Final layer: Upsample(x2, nearest) + ZeroPad2d((1,0,1,0)) + Conv2d(128,C,4,p=1) + Tanh,
# folded into 36 taps applied to the un-upsampled activation.
#   output row 2a+r:  r=0 -> (w0+w1)*u[a-1] + (w2+w3)*u[a]
#                     r=1 ->  w0   *u[a-1] + (w1+w2)*u[a] + w3*u[a+1]     (same along W)
# ---------------------------------------------------------------------------
_SH = {(0, 0): (0, 1), (0, 1): (2, 3), (0, 2): (),
       (1, 0): (0,), (1, 1): (1, 2), (1, 2): (3,)}


def fold_final_weight(w, channels):
    """w: [C, Cin, 4, 4] (PyTorch layout).  Returns [Cin, round_up(36*C, 128)] bf16."""
    w = jnp.asarray(w, jnp.float32)
    cin = w.shape[1]
    blocks = []
    for rh in range(2):
        for dh in range(3):
            for rw in range(2):
                for dw in range(3):
                    m = jnp.zeros((cin, channels), jnp.float32)
                    for kh in _SH[(rh, dh)]:
                        for kw in _SH[(rw, dw)]:
                            m = m + w[:, :, kh, kw].T
                    blocks.append(m)
    cols = jnp.concatenate(blocks, axis=1)
    ncol = 36 * channels
    pad = _round_up(ncol, 128) - ncol
    if pad:
        cols = jnp.pad(cols, ((0, 0), (0, pad)))
    return cols.astype(jnp.bfloat16)


def final_layer(x, w_fold, bias):
    """x: [N,H,W,Cin] -> [N,2H,2W,C] f32 (tanh applied)."""
    N, H, W, Cin = x.shape
    C = bias.shape[0]
    xp = jnp.pad(x, ((0, 0), (1, 1), (1, 1), (0, 0)))
    Hp, Wp = H + 2, W + 2
    P = pallas_matmul(xp.reshape(N * Hp * Wp, Cin), w_fold)
    P = P.reshape(N, Hp, Wp, -1)
    phases = [[None, None], [None, None]]
    for rh in range(2):
        for rw in range(2):
            acc = None
            for dh in range(3):
                if not _SH[(rh, dh)]:
                    continue
                for dw in range(3):
                    if not _SH[(rw, dw)]:
                        continue
                    col = (((rh * 3 + dh) * 2 + rw) * 3 + dw) * C
                    t = P[:, dh:dh + H, dw:dw + W, col:col + C].astype(jnp.float32)
                    acc = t if acc is None else acc + t
            phases[rh][rw] = acc
    y = jnp.stack([jnp.stack(phases[0], axis=3), jnp.stack(phases[1], axis=3)], axis=2)
    y = y.reshape(N, 2 * H, 2 * W, C)
    return jnp.tanh(y + bias.astype(jnp.float32))


# ---------------------------------------------------------------------------
# UNet blocks and forward pass.
# ---------------------------------------------------------------------------
def down_block(x, w_taps, *, normalize):
    # Conv2d(4,1,1,bias=False) -> [InstanceNorm2d] -> LeakyReLU(0.2) -> BlurPool(stride=2)
    if normalize:
        h = conv2d_direct(x, w_taps)
        h = instance_norm_act(h, normalize=True, slope=0.2)
    else:
        h = conv2d_direct(x, w_taps, act_slope=0.2)   # LeakyReLU fused in the conv epilogue
    # TODO(synk): nn.Dropout treated as identity (inference-mode forward).
    return blurpool_s2(h)


def up_block(x, skip, w_all):
    # ConvTranspose2d(4,2,1) -> BlurPool(stride=1) -> InstanceNorm2d -> ReLU -> concat
    h = conv_transpose2d(x, w_all)
    h = blurpool_s1(h)
    h = instance_norm_act(h, normalize=True, slope=0.0)
    # TODO(synk): nn.Dropout treated as identity (inference-mode forward).
    return jnp.concatenate([h, skip], axis=-1)


def generator_forward(x, params):
    h = jnp.transpose(x, (0, 2, 3, 1)).astype(jnp.bfloat16)      # NCHW -> NHWC bf16

    # down1 (normalize=False, Cin tiny): im2col GEMM with fused LeakyReLU.
    d1 = blurpool_s2(conv2d_gemm(h, params["d1"], act_slope=0.2))
    d2 = down_block(d1, params["d2"], normalize=True)
    d3 = down_block(d2, params["d3"], normalize=True)
    d4 = down_block(d3, params["d4"], normalize=True)
    d5 = down_block(d4, params["d5"], normalize=False)
    d6 = down_block(d5, params["d6"], normalize=True)

    u1 = up_block(d6, d5, params["u1"])
    u2 = up_block(u1, d4, params["u2"])
    u3 = up_block(u2, d3, params["u3"])
    u4 = up_block(u3, d2, params["u4"])
    u5 = up_block(u4, d1, params["u5"])

    out = final_layer(u5, params["wf"], params["bf"])            # [N, H, W, C] f32
    # torch.cuda.amp.autocast + .type(HalfTensor): emit fp16 NCHW output.
    return jnp.transpose(out, (0, 3, 1, 2)).astype(jnp.float16)


# ---------------------------------------------------------------------------
# Parameter layouts (GEMM/tap-ready, bf16).
# ---------------------------------------------------------------------------
def down_w_taps(w):        # [Cout, Cin, 4, 4] -> [16, Cin, Cout]
    cout, cin = w.shape[0], w.shape[1]
    return jnp.transpose(w, (2, 3, 1, 0)).reshape(16, cin, cout).astype(jnp.bfloat16)


def down_w_im2col(w):      # [Cout, Cin, 4, 4] -> [16*Cin, Cout]
    cout, cin = w.shape[0], w.shape[1]
    return jnp.transpose(w, (2, 3, 1, 0)).reshape(16 * cin, cout).astype(jnp.bfloat16)


def up_w_tapstack(w):      # [Cin, Cout, 4, 4] -> [Cin, 16*Cout]
    cin, cout = w.shape[0], w.shape[1]
    return jnp.transpose(w, (0, 2, 3, 1)).reshape(cin, 16 * cout).astype(jnp.bfloat16)


def init_params(key, channels):
    down_shapes = {"d1": (64, channels), "d2": (128, 64), "d3": (256, 128),
                   "d4": (512, 256), "d5": (512, 512), "d6": (512, 512)}
    up_shapes = {"u1": (512, 512), "u2": (1024, 512), "u3": (1024, 256),
                 "u4": (512, 128), "u5": (256, 64)}
    keys = jax.random.split(key, len(down_shapes) + len(up_shapes) + 1)
    params, ki = {}, 0
    for name, (cout, cin) in down_shapes.items():
        w = jax.random.normal(keys[ki], (cout, cin, 4, 4), jnp.float32) / np.sqrt(cin * 16)
        ki += 1
        params[name] = down_w_im2col(w) if name == "d1" else down_w_taps(w)
    for name, (cin, cout) in up_shapes.items():
        w = jax.random.normal(keys[ki], (cin, cout, 4, 4), jnp.float32) / np.sqrt(cin * 16)
        ki += 1
        params[name] = up_w_tapstack(w)
    wf = jax.random.normal(keys[ki], (channels, 128, 4, 4), jnp.float32) / np.sqrt(128 * 16)
    params["wf"] = fold_final_weight(wf, channels)
    params["bf"] = jnp.zeros((channels,), jnp.float32)
    return params


# ---------------------------------------------------------------------------
# Component correctness checks (bf16 kernel vs f32 reference on the same bf16 inputs).
# ---------------------------------------------------------------------------
def _max_rel_err(a, b):
    a = np.asarray(jnp.asarray(a, jnp.float32))
    b = np.asarray(jnp.asarray(b, jnp.float32))
    return float(np.max(np.abs(a - b))) / (float(np.max(np.abs(b))) + 1e-6)


def _check_direct_conv():
    k1, k2 = jax.random.split(jax.random.PRNGKey(1))
    N, H, W, Ci, Co = 1, 12, 12, 16, 32
    x = jax.random.normal(k1, (N, H, W, Ci), jnp.float32).astype(jnp.bfloat16)
    w = (jax.random.normal(k2, (Co, Ci, 4, 4), jnp.float32) / np.sqrt(Ci * 16.0)
         ).astype(jnp.bfloat16)
    out = conv2d_direct(x, down_w_taps(w))
    ref = jax.lax.conv_general_dilated(
        jnp.transpose(x.astype(jnp.float32), (0, 3, 1, 2)), w.astype(jnp.float32),
        (1, 1), ((1, 1), (1, 1)), dimension_numbers=("NCHW", "OIHW", "NCHW"))
    ref = jnp.transpose(ref, (0, 2, 3, 1))
    err = _max_rel_err(out, ref)
    assert err < 0.03, f"direct conv mismatch: rel err {err}"


def _check_conv_transpose():
    k1, k2 = jax.random.split(jax.random.PRNGKey(2))
    N, H, W, Ci, Co = 1, 6, 6, 16, 16
    x = jax.random.normal(k1, (N, H, W, Ci), jnp.float32).astype(jnp.bfloat16)
    w = (jax.random.normal(k2, (Ci, Co, 4, 4), jnp.float32) / np.sqrt(Ci * 16.0)
         ).astype(jnp.bfloat16)
    out = conv_transpose2d(x, up_w_tapstack(w))
    xf, wf = x.astype(jnp.float32), w.astype(jnp.float32)
    buf = jnp.zeros((N, 2 * H + 2, 2 * W + 2, Co), jnp.float32)
    for kh in range(4):
        for kw in range(4):
            contrib = jnp.einsum("nhwc,cd->nhwd", xf, wf[:, :, kh, kw])
            buf = buf.at[:, kh:kh + 2 * H:2, kw:kw + 2 * W:2, :].add(contrib)
    ref = buf[:, 1:2 * H + 1, 1:2 * W + 1, :]
    err = _max_rel_err(out, ref)
    assert err < 0.03, f"conv transpose mismatch: rel err {err}"


def _check_final_layer():
    k1, k2, k3 = jax.random.split(jax.random.PRNGKey(3), 3)
    N, H, W, Ci, C = 1, 8, 8, 32, 2
    x = jax.random.normal(k1, (N, H, W, Ci), jnp.float32).astype(jnp.bfloat16)
    w = (jax.random.normal(k2, (C, Ci, 4, 4), jnp.float32) / np.sqrt(Ci * 16.0)
         ).astype(jnp.bfloat16)
    bias = jax.random.normal(k3, (C,), jnp.float32) * 0.1
    out = final_layer(x, fold_final_weight(w, C), bias)
    y = jnp.repeat(jnp.repeat(x.astype(jnp.float32), 2, axis=1), 2, axis=2)
    y = jnp.pad(y, ((0, 0), (1, 0), (1, 0), (0, 0)))          # ZeroPad2d((1,0,1,0))
    ref = jax.lax.conv_general_dilated(
        jnp.transpose(y, (0, 3, 1, 2)), w.astype(jnp.float32),
        (1, 1), ((1, 1), (1, 1)), dimension_numbers=("NCHW", "OIHW", "NCHW"))
    ref = jnp.tanh(jnp.transpose(ref, (0, 2, 3, 1)) + bias)
    err = float(jnp.max(jnp.abs(out - ref)))
    assert err < 0.05, f"final layer mismatch: abs err {err}"


# ---------------------------------------------------------------------------
if __name__ == "__main__":
    # Check the nonstandard kernels / weight foldings against pure-JAX references.
    _check_direct_conv()
    _check_conv_transpose()
    _check_final_layer()

    key = jax.random.PRNGKey(0)
    k_x, k_p = jax.random.split(key)
    # 128 is the smallest spatial size the 6-level architecture supports.
    B, C, H, W = 2, 1, 128, 128
    x = jax.random.normal(k_x, (B, C, H, W), jnp.float32)
    params = init_params(k_p, C)

    fwd = jax.jit(generator_forward)
    out = jax.block_until_ready(fwd(x, params))

    assert out.shape == (B, C, H, W), out.shape
    assert out.dtype == jnp.float16, out.dtype
    assert bool(jnp.all(jnp.isfinite(out.astype(jnp.float32))))
    print("KERNEL_OK")
</pallas_src>

<mosaic_0001>
module attributes {stable_mosaic.version = 11 : i64} {
  func.func @_dconv_kernel(%arg0: i32, %arg1: i32, %arg2: i32, %arg3: memref<1x208x16xbf16, #tpu.memory_space<vmem>>, %arg4: memref<16x16x32xbf16, #tpu.memory_space<vmem>>, %arg5: memref<1x160x32xbf16, #tpu.memory_space<vmem>>, %arg6: memref<160x32xf32, #tpu.memory_space<vmem>>) attributes {dimension_semantics = [#tpu.dimension_semantics<parallel>, #tpu.dimension_semantics<parallel>, #tpu.dimension_semantics<arbitrary>], iteration_bounds = array<i64: 1, 1, 1>, scalar_prefetch = 0 : i64, scratch_operands = 1 : i64, tpu.core_type = #tpu.core_type<tc>, window_params = [{transform_indices = @transform_0, window_bounds = array<i64: 1, 208, 16>}, {transform_indices = @transform_1, window_bounds = array<i64: 16, 16, 32>}, {transform_indices = @transform_2, window_bounds = array<i64: 1, 160, 32>}]} {
    %c0_i32 = arith.constant 0 : i32
    %0 = arith.cmpi eq, %arg2, %c0_i32 : i32
    %1 = arith.extui %0 : i1 to i32
    %c0_i32_0 = arith.constant 0 : i32
    %2 = arith.cmpi ne, %1, %c0_i32_0 : i32
    scf.if %2 {
      %cst_152 = arith.constant 0.000000e+00 : f32
      %134 = vector.broadcast %cst_152 : f32 to vector<160x32xf32>
      %c0_153 = arith.constant 0 : index
      %c0_154 = arith.constant 0 : index
      %135 = vector.load %arg6[%c0_153, %c0_154] : memref<160x32xf32, #tpu.memory_space<vmem>>, vector<160x32xf32>
      tpu.vector_store %arg6[%c0_153, %c0_154], %134 {strides = array<i32>} : memref<160x32xf32, #tpu.memory_space<vmem>>, vector<160x32xf32>,
    } else {
    }
    %c0 = arith.constant 0 : index
    %c0_1 = arith.constant 0 : index
    %c0_2 = arith.constant 0 : index
    %3 = vector.load %arg3[%c0, %c0_1, %c0_2] : memref<1x208x16xbf16, #tpu.memory_space<vmem>>, vector<1x160x16xbf16>
    %4 = vector.shape_cast %3 : vector<1x160x16xbf16> to vector<160x16xbf16>
    %c0_3 = arith.constant 0 : index
    %c0_4 = arith.constant 0 : index
    %5 = vector.load %arg6[%c0_3, %c0_4] : memref<160x32xf32, #tpu.memory_space<vmem>>, vector<160x32xf32>
    %c0_5 = arith.constant 0 : index
    %c0_6 = arith.constant 0 : index
    %c0_7 = arith.constant 0 : index
    %6 = vector.load %arg4[%c0_5, %c0_6, %c0_7] : memref<16x16x32xbf16, #tpu.memory_space<vmem>>, vector<1x16x32xbf16>
    %7 = vector.shape_cast %6 : vector<1x16x32xbf16> to vector<16x32xbf16>
    %cst = arith.constant dense<0.000000e+00> : vector<160x32xf32>
    %8 = tpu.matmul %4, %7, %cst {dimension_numbers = #tpu.dot_dimension_numbers<[1], [0], [0], [1], [0, 0, 1, 1], [], []>} : vector<160x16xbf16>, vector<16x32xbf16>, vector<160x32xf32> -> vector<160x32xf32>
    %9 = arith.addf %5, %8 : vector<160x32xf32>
    %c0_8 = arith.constant 0 : index
    %c0_9 = arith.constant 0 : index
    %10 = vector.load %arg6[%c0_8, %c0_9] : memref<160x32xf32, #tpu.memory_space<vmem>>, vector<160x32xf32>
    tpu.vector_store %arg6[%c0_8, %c0_9], %9 {strides = array<i32>} : memref<160x32xf32, #tpu.memory_space<vmem>>, vector<160x32xf32>,
    %c0_10 = arith.constant 0 : index
    %c1 = arith.constant 1 : index
    %c0_11 = arith.constant 0 : index
    %11 = vector.load %arg3[%c0_10, %c1, %c0_11] : memref<1x208x16xbf16, #tpu.memory_space<vmem>>, vector<1x160x16xbf16>
    %12 = vector.shape_cast %11 : vector<1x160x16xbf16> to vector<160x16xbf16>
    %c0_12 = arith.constant 0 : index
    %c0_13 = arith.constant 0 : index
    %13 = vector.load %arg6[%c0_12, %c0_13] : memref<160x32xf32, #tpu.memory_space<vmem>>, vector<160x32xf32>
    %c1_14 = arith.constant 1 : index
    %c0_15 = arith.constant 0 : index
    %c0_16 = arith.constant 0 : index
    %14 = vector.load %arg4[%c1_14, %c0_15, %c0_16] : memref<16x16x32xbf16, #tpu.memory_space<vmem>>, vector<1x16x32xbf16>
    %15 = vector.shape_cast %14 : vector<1x16x32xbf16> to vector<16x32xbf16>
    %cst_17 = arith.constant dense<0.000000e+00> : vector<160x32xf32>
    %16 = tpu.matmul %12, %15, %cst_17 {dimension_numbers = #tpu.dot_dimension_numbers<[1], [0], [0], [1], [0, 0, 1, 1], [], []>} : vector<160x16xbf16>, vector<16x32xbf16>, vector<160x32xf32> -> vector<160x32xf32>
    %17 = arith.addf %13, %16 : vector<160x32xf32>
    %c0_18 = arith.constant 0 : index
    %c0_19 = arith.constant 0 : index
    %18 = vector.load %arg6[%c0_18, %c0_19] : memref<160x32xf32, #tpu.memory_space<vmem>>, vector<160x32xf32>
    tpu.vector_store %arg6[%c0_18, %c0_19], %17 {strides = array<i32>} : memref<160x32xf32, #tpu.memory_space<vmem>>, vector<160x32xf32>,
    %c0_20 = arith.constant 0 : index
    %c2 = arith.constant 2 : index
    %c0_21 = arith.constant 0 : index
    %19 = vector.load %arg3[%c0_20, %c2, %c0_21] : memref<1x208x16xbf16, #tpu.memory_space<vmem>>, vector<1x160x16xbf16>
    %20 = vector.shape_cast %19 : vector<1x160x16xbf16> to vector<160x16xbf16>
    %c0_22 = arith.constant 0 : index
    %c0_23 = arith.constant 0 : index
    %21 = vector.load %arg6[%c0_22, %c0_23] : memref<160x32xf32, #tpu.memory_space<vmem>>, vector<160x32xf32>
    %c2_24 = arith.constant 2 : index
    %c0_25 = arith.constant 0 : index
    %c0_26 = arith.constant 0 : index
    %22 = vector.load %arg4[%c2_24, %c0_25, %c0_26] : memref<16x16x32xbf16, #tpu.memory_space<vmem>>, vector<1x16x32xbf16>
    %23 = vector.shape_cast %22 : vector<1x16x32xbf16> to vector<16x32xbf16>
    %cst_27 = arith.constant dense<0.000000e+00> : vector<160x32xf32>
    %24 = tpu.matmul %20, %23, %cst_27 {dimension_numbers = #tpu.dot_dimension_numbers<[1], [0], [0], [1], [0, 0, 1, 1], [], []>} : vector<160x16xbf16>, vector<16x32xbf16>, vector<160x32xf32> -> vector<160x32xf32>
    %25 = arith.addf %21, %24 : vector<160x32xf32>
    %c0_28 = arith.constant 0 : index
    %c0_29 = arith.constant 0 : index
    %26 = vector.load %arg6[%c0_28, %c0_29] : memref<160x32xf32, #tpu.memory_space<vmem>>, vector<160x32xf32>
    tpu.vector_store %arg6[%c0_28, %c0_29], %25 {strides = array<i32>} : memref<160x32xf32, #tpu.memory_space<vmem>>, vector<160x32xf32>,
    %c0_30 = arith.constant 0 : index
    %c3 = arith.constant 3 : index
    %c0_31 = arith.constant 0 : index
    %27 = vector.load %arg3[%c0_30, %c3, %c0_31] : memref<1x208x16xbf16, #tpu.memory_space<vmem>>, vector<1x160x16xbf16>
    %28 = vector.shape_cast %27 : vector<1x160x16xbf16> to vector<160x16xbf16>
    %c0_32 = arith.constant 0 : index
    %c0_33 = arith.constant 0 : index
    %29 = vector.load %arg6[%c0_32, %c0_33] : memref<160x32xf32, #tpu.memory_space<vmem>>, vector<160x32xf32>
    %c3_34 = arith.constant 3 : index
    %c0_35 = arith.constant 0 : index
    %c0_36 = arith.constant 0 : index
    %30 = vector.load %arg4[%c3_34, %c0_35, %c0_36] : memref<16x16x32xbf16, #tpu.memory_space<vmem>>, vector<1x16x32xbf16>
    %31 = vector.shape_cast %30 : vector<1x16x32xbf16> to vector<16x32xbf16>
    %cst_37 = arith.constant dense<0.000000e+00> : vector<160x32xf32>
    %32 = tpu.matmul %28, %31, %cst_37 {dimension_numbers = #tpu.dot_dimension_numbers<[1], [0], [0], [1], [0, 0, 1, 1], [], []>} : vector<160x16xbf16>, vector<16x32xbf16>, vector<160x32xf32> -> vector<160x32xf32>
    %33 = arith.addf %29, %32 : vector<160x32xf32>
    %c0_38 = arith.constant 0 : index
    %c0_39 = arith.constant 0 : index
    %34 = vector.load %arg6[%c0_38, %c0_39] : memref<160x32xf32, #tpu.memory_space<vmem>>, vector<160x32xf32>
    tpu.vector_store %arg6[%c0_38, %c0_39], %33 {strides = array<i32>} : memref<160x32xf32, #tpu.memory_space<vmem>>, vector<160x32xf32>,
    %c0_40 = arith.constant 0 : index
    %c14 = arith.constant 14 : index
    %c0_41 = arith.constant 0 : index
    %35 = vector.load %arg3[%c0_40, %c14, %c0_41] : memref<1x208x16xbf16, #tpu.memory_space<vmem>>, vector<1x160x16xbf16>
    %36 = vector.shape_cast %35 : vector<1x160x16xbf16> to vector<160x16xbf16>
    %c0_42 = arith.constant 0 : index
    %c0_43 = arith.constant 0 : index
    %37 = vector.load %arg6[%c0_42, %c0_43] : memref<160x32xf32, #tpu.memory_space<vmem>>, vector<160x32xf32>
    %c4 = arith.constant 4 : index
    %c0_44 = arith.constant 0 : index
    %c0_45 = arith.constant 0 : index
    %38 = vector.load %arg4[%c4, %c0_44, %c0_45] : memref<16x16x32xbf16, #tpu.memory_space<vmem>>, vector<1x16x32xbf16>
    %39 = vector.shape_cast %38 : vector<1x16x32xbf16> to vector<16x32xbf16>
    %cst_46 = arith.constant dense<0.000000e+00> : vector<160x32xf32>
    %40 = tpu.matmul %36, %39, %cst_46 {dimension_numbers = #tpu.dot_dimension_numbers<[1], [0], [0], [1], [0, 0, 1, 1], [], []>} : vector<160x16xbf16>, vector<16x32xbf16>, vector<160x32xf32> -> vector<160x32xf32>
    %41 = arith.addf %37, %40 : vector<160x32xf32>
    %c0_47 = arith.constant 0 : index
    %c0_48 = arith.constant 0 : index
    %42 = vector.load %arg6[%c0_47, %c0_48] : memref<160x32xf32, #tpu.memory_space<vmem>>, vector<160x32xf32>
    tpu.vector_store %arg6[%c0_47, %c0_48], %41 {strides = array<i32>} : memref<160x32xf32, #tpu.memory_space<vmem>>, vector<160x32xf32>,
    %c0_49 = arith.constant 0 : index
    %c15 = arith.constant 15 : index
    %c0_50 = arith.constant 0 : index
    %43 = vector.load %arg3[%c0_49, %c15, %c0_50] : memref<1x208x16xbf16, #tpu.memory_space<vmem>>, vector<1x160x16xbf16>
    %44 = vector.shape_cast %43 : vector<1x160x16xbf16> to vector<160x16xbf16>
    %c0_51 = arith.constant 0 : index
    %c0_52 = arith.constant 0 : index
    %45 = vector.load %arg6[%c0_51, %c0_52] : memref<160x32xf32, #tpu.memory_space<vmem>>, vector<160x32xf32>
    %c5 = arith.constant 5 : index
    %c0_53 = arith.constant 0 : index
    %c0_54 = arith.constant 0 : index
    %46 = vector.load %arg4[%c5, %c0_53, %c0_54] : memref<16x16x32xbf16, #tpu.memory_space<vmem>>, vector<1x16x32xbf16>
    %47 = vector.shape_cast %46 : vector<1x16x32xbf16> to vector<16x32xbf16>
    %cst_55 = arith.constant dense<0.000000e+00> : vector<160x32xf32>
    %48 = tpu.matmul %44, %47, %cst_55 {dimension_numbers = #tpu.dot_dimension_numbers<[1], [0], [0], [1], [0, 0, 1, 1], [], []>} : vector<160x16xbf16>, vector<16x32xbf16>, vector<160x32xf32> -> vector<160x32xf32>
    %49 = arith.addf %45, %48 : vector<160x32xf32>
    %c0_56 = arith.constant 0 : index
    %c0_57 = arith.constant 0 : index
    %50 = vector.load %arg6[%c0_56, %c0_57] : memref<160x32xf32, #tpu.memory_space<vmem>>, vector<160x32xf32>
    tpu.vector_store %arg6[%c0_56, %c0_57], %49 {strides = array<i32>} : memref<160x32xf32, #tpu.memory_space<vmem>>, vector<160x32xf32>,
    %c0_58 = arith.constant 0 : index
    %c16 = arith.constant 16 : index
    %c0_59 = arith.constant 0 : index
    %51 = vector.load %arg3[%c0_58, %c16, %c0_59] : memref<1x208x16xbf16, #tpu.memory_space<vmem>>, vector<1x160x16xbf16>
    %52 = vector.shape_cast %51 : vector<1x160x16xbf16> to vector<160x16xbf16>
    %c0_60 = arith.constant 0 : index
    %c0_61 = arith.constant 0 : index
    %53 = vector.load %arg6[%c0_60, %c0_61] : memref<160x32xf32, #tpu.memory_space<vmem>>, vector<160x32xf32>
    %c6 = arith.constant 6 : index
    %c0_62 = arith.constant 0 : index
    %c0_63 = arith.constant 0 : index
    %54 = vector.load %arg4[%c6, %c0_62, %c0_63] : memref<16x16x32xbf16, #tpu.memory_space<vmem>>, vector<1x16x32xbf16>
    %55 = vector.shape_cast %54 : vector<1x16x32xbf16> to vector<16x32xbf16>
    %cst_64 = arith.constant dense<0.000000e+00> : vector<160x32xf32>
    %56 = tpu.matmul %52, %55, %cst_64 {dimension_numbers = #tpu.dot_dimension_numbers<[1], [0], [0], [1], [0, 0, 1, 1], [], []>} : vector<160x16xbf16>, vector<16x32xbf16>, vector<160x32xf32> -> vector<160x32xf32>
    %57 = arith.addf %53, %56 : vector<160x32xf32>
    %c0_65 = arith.constant 0 : index
    %c0_66 = arith.constant 0 : index
    %58 = vector.load %arg6[%c0_65, %c0_66] : memref<160x32xf32, #tpu.memory_space<vmem>>, vector<160x32xf32>
    tpu.vector_store %arg6[%c0_65, %c0_66], %57 {strides = array<i32>} : memref<160x32xf32, #tpu.memory_space<vmem>>, vector<160x32xf32>,
    %c0_67 = arith.constant 0 : index
    %c17 = arith.constant 17 : index
    %c0_68 = arith.constant 0 : index
    %59 = vector.load %arg3[%c0_67, %c17, %c0_68] : memref<1x208x16xbf16, #tpu.memory_space<vmem>>, vector<1x160x16xbf16>
    %60 = vector.shape_cast %59 : vector<1x160x16xbf16> to vector<160x16xbf16>
    %c0_69 = arith.constant 0 : index
    %c0_70 = arith.constant 0 : index
    %61 = vector.load %arg6[%c0_69, %c0_70] : memref<160x32xf32, #tpu.memory_space<vmem>>, vector<160x32xf32>
    %c7 = arith.constant 7 : index
    %c0_71 = arith.constant 0 : index
    %c0_72 = arith.constant 0 : index
    %62 = vector.load %arg4[%c7, %c0_71, %c0_72] : memref<16x16x32xbf16, #tpu.memory_space<vmem>>, vector<1x16x32xbf16>
    %63 = vector.shape_cast %62 : vector<1x16x32xbf16> to vector<16x32xbf16>
    %cst_73 = arith.constant dense<0.000000e+00> : vector<160x32xf32>
    %64 = tpu.matmul %60, %63, %cst_73 {dimension_numbers = #tpu.dot_dimension_numbers<[1], [0], [0], [1], [0, 0, 1, 1], [], []>} : vector<160x16xbf16>, vector<16x32xbf16>, vector<160x32xf32> -> vector<160x32xf32>
    %65 = arith.addf %61, %64 : vector<160x32xf32>
    %c0_74 = arith.constant 0 : index
    %c0_75 = arith.constant 0 : index
    %66 = vector.load %arg6[%c0_74, %c0_75] : memref<160x32xf32, #tpu.memory_space<vmem>>, vector<160x32xf32>
    tpu.vector_store %arg6[%c0_74, %c0_75], %65 {strides = array<i32>} : memref<160x32xf32, #tpu.memory_space<vmem>>, vector<160x32xf32>,
    %c0_76 = arith.constant 0 : index
    %c28 = arith.constant 28 : index
    %c0_77 = arith.constant 0 : index
    %67 = vector.load %arg3[%c0_76, %c28, %c0_77] : memref<1x208x16xbf16, #tpu.memory_space<vmem>>, vector<1x160x16xbf16>
    %68 = vector.shape_cast %67 : vector<1x160x16xbf16> to vector<160x16xbf16>
    %c0_78 = arith.constant 0 : index
    %c0_79 = arith.constant 0 : index
    %69 = vector.load %arg6[%c0_78, %c0_79] : memref<160x32xf32, #tpu.memory_space<vmem>>, vector<160x32xf32>
    %c8 = arith.constant 8 : index
    %c0_80 = arith.constant 0 : index
    %c0_81 = arith.constant 0 : index
    %70 = vector.load %arg4[%c8, %c0_80, %c0_81] : memref<16x16x32xbf16, #tpu.memory_space<vmem>>, vector<1x16x32xbf16>
    %71 = vector.shape_cast %70 : vector<1x16x32xbf16> to vector<16x32xbf16>
    %cst_82 = arith.constant dense<0.000000e+00> : vector<160x32xf32>
    %72 = tpu.matmul %68, %71, %cst_82 {dimension_numbers = #tpu.dot_dimension_numbers<[1], [0], [0], [1], [0, 0, 1, 1], [], []>} : vector<160x16xbf16>, vector<16x32xbf16>, vector<160x32xf32> -> vector<160x32xf32>
    %73 = arith.addf %69, %72 : vector<160x32xf32>
    %c0_83 = arith.constant 0 : index
    %c0_84 = arith.constant 0 : index
    %74 = vector.load %arg6[%c0_83, %c0_84] : memref<160x32xf32, #tpu.memory_space<vmem>>, vector<160x32xf32>
    tpu.vector_store %arg6[%c0_83, %c0_84], %73 {strides = array<i32>} : memref<160x32xf32, #tpu.memory_space<vmem>>, vector<160x32xf32>,
    %c0_85 = arith.constant 0 : index
    %c29 = arith.constant 29 : index
    %c0_86 = arith.constant 0 : index
    %75 = vector.load %arg3[%c0_85, %c29, %c0_86] : memref<1x208x16xbf16, #tpu.memory_space<vmem>>, vector<1x160x16xbf16>
    %76 = vector.shape_cast %75 : vector<1x160x16xbf16> to vector<160x16xbf16>
    %c0_87 = arith.constant 0 : index
    %c0_88 = arith.constant 0 : index
    %77 = vector.load %arg6[%c0_87, %c0_88] : memref<160x32xf32, #tpu.memory_space<vmem>>, vector<160x32xf32>
    %c9 = arith.constant 9 : index
    %c0_89 = arith.constant 0 : index
    %c0_90 = arith.constant 0 : index
    %78 = vector.load %arg4[%c9, %c0_89, %c0_90] : memref<16x16x32xbf16, #tpu.memory_space<vmem>>, vector<1x16x32xbf16>
    %79 = vector.shape_cast %78 : vector<1x16x32xbf16> to vector<16x32xbf16>
    %cst_91 = arith.constant dense<0.000000e+00> : vector<160x32xf32>
    %80 = tpu.matmul %76, %79, %cst_91 {dimension_numbers = #tpu.dot_dimension_numbers<[1], [0], [0], [1], [0, 0, 1, 1], [], []>} : vector<160x16xbf16>, vector<16x32xbf16>, vector<160x32xf32> -> vector<160x32xf32>
    %81 = arith.addf %77, %80 : vector<160x32xf32>
    %c0_92 = arith.constant 0 : index
    %c0_93 = arith.constant 0 : index
    %82 = vector.load %arg6[%c0_92, %c0_93] : memref<160x32xf32, #tpu.memory_space<vmem>>, vector<160x32xf32>
    tpu.vector_store %arg6[%c0_92, %c0_93], %81 {strides = array<i32>} : memref<160x32xf32, #tpu.memory_space<vmem>>, vector<160x32xf32>,
    %c0_94 = arith.constant 0 : index
    %c30 = arith.constant 30 : index
    %c0_95 = arith.constant 0 : index
    %83 = vector.load %arg3[%c0_94, %c30, %c0_95] : memref<1x208x16xbf16, #tpu.memory_space<vmem>>, vector<1x160x16xbf16>
    %84 = vector.shape_cast %83 : vector<1x160x16xbf16> to vector<160x16xbf16>
    %c0_96 = arith.constant 0 : index
    %c0_97 = arith.constant 0 : index
    %85 = vector.load %arg6[%c0_96, %c0_97] : memref<160x32xf32, #tpu.memory_space<vmem>>, vector<160x32xf32>
    %c10 = arith.constant 10 : index
    %c0_98 = arith.constant 0 : index
    %c0_99 = arith.constant 0 : index
    %86 = vector.load %arg4[%c10, %c0_98, %c0_99] : memref<16x16x32xbf16, #tpu.memory_space<vmem>>, vector<1x16x32xbf16>
    %87 = vector.shape_cast %86 : vector<1x16x32xbf16> to vector<16x32xbf16>
    %cst_100 = arith.constant dense<0.000000e+00> : vector<160x32xf32>
    %88 = tpu.matmul %84, %87, %cst_100 {dimension_numbers = #tpu.dot_dimension_numbers<[1], [0], [0], [1], [0, 0, 1, 1], [], []>} : vector<160x16xbf16>, vector<16x32xbf16>, vector<160x32xf32> -> vector<160x32xf32>
    %89 = arith.addf %85, %88 : vector<160x32xf32>
    %c0_101 = arith.constant 0 : index
    %c0_102 = arith.constant 0 : index
    %90 = vector.load %arg6[%c0_101, %c0_102] : memref<160x32xf32, #tpu.memory_space<vmem>>, vector<160x32xf32>
    tpu.vector_store %arg6[%c0_101, %c0_102], %89 {strides = array<i32>} : memref<160x32xf32, #tpu.memory_space<vmem>>, vector<160x32xf32>,
    %c0_103 = arith.constant 0 : index
    %c31 = arith.constant 31 : index
    %c0_104 = arith.constant 0 : index
    %91 = vector.load %arg3[%c0_103, %c31, %c0_104] : memref<1x208x16xbf16, #tpu.memory_space<vmem>>, vector<1x160x16xbf16>
    %92 = vector.shape_cast %91 : vector<1x160x16xbf16> to vector<160x16xbf16>
    %c0_105 = arith.constant 0 : index
    %c0_106 = arith.constant 0 : index
    %93 = vector.load %arg6[%c0_105, %c0_106] : memref<160x32xf32, #tpu.memory_space<vmem>>, vector<160x32xf32>
    %c11 = arith.constant 11 : index
    %c0_107 = arith.constant 0 : index
    %c0_108 = arith.constant 0 : index
    %94 = vector.load %arg4[%c11, %c0_107, %c0_108] : memref<16x16x32xbf16, #tpu.memory_space<vmem>>, vector<1x16x32xbf16>
    %95 = vector.shape_cast %94 : vector<1x16x32xbf16> to vector<16x32xbf16>
    %cst_109 = arith.constant dense<0.000000e+00> : vector<160x32xf32>
    %96 = tpu.matmul %92, %95, %cst_109 {dimension_numbers = #tpu.dot_dimension_numbers<[1], [0], [0], [1], [0, 0, 1, 1], [], []>} : vector<160x16xbf16>, vector<16x32xbf16>, vector<160x32xf32> -> vector<160x32xf32>
    %97 = arith.addf %93, %96 : vector<160x32xf32>
    %c0_110 = arith.constant 0 : index
    %c0_111 = arith.constant 0 : index
    %98 = vector.load %arg6[%c0_110, %c0_111] : memref<160x32xf32, #tpu.memory_space<vmem>>, vector<160x32xf32>
    tpu.vector_store %arg6[%c0_110, %c0_111], %97 {strides = array<i32>} : memref<160x32xf32, #tpu.memory_space<vmem>>, vector<160x32xf32>,
    %c0_112 = arith.constant 0 : index
    %c42 = arith.constant 42 : index
    %c0_113 = arith.constant 0 : index
    %99 = vector.load %arg3[%c0_112, %c42, %c0_113] : memref<1x208x16xbf16, #tpu.memory_space<vmem>>, vector<1x160x16xbf16>
    %100 = vector.shape_cast %99 : vector<1x160x16xbf16> to vector<160x16xbf16>
    %c0_114 = arith.constant 0 : index
    %c0_115 = arith.constant 0 : index
    %101 = vector.load %arg6[%c0_114, %c0_115] : memref<160x32xf32, #tpu.memory_space<vmem>>, vector<160x32xf32>
    %c12 = arith.constant 12 : index
    %c0_116 = arith.constant 0 : index
    %c0_117 = arith.constant 0 : index
    %102 = vector.load %arg4[%c12, %c0_116, %c0_117] : memref<16x16x32xbf16, #tpu.memory_space<vmem>>, vector<1x16x32xbf16>
    %103 = vector.shape_cast %102 : vector<1x16x32xbf16> to vector<16x32xbf16>
    %cst_118 = arith.constant dense<0.000000e+00> : vector<160x32xf32>
    %104 = tpu.matmul %100, %103, %cst_118 {dimension_numbers = #tpu.dot_dimension_numbers<[1], [0], [0], [1], [0, 0, 1, 1], [], []>} : vector<160x16xbf16>, vector<16x32xbf16>, vector<160x32xf32> -> vector<160x32xf32>
    %105 = arith.addf %101, %104 : vector<160x32xf32>
    %c0_119 = arith.constant 0 : index
    %c0_120 = arith.constant 0 : index
    %106 = vector.load %arg6[%c0_119, %c0_120] : memref<160x32xf32, #tpu.memory_space<vmem>>, vector<160x32xf32>
    tpu.vector_store %arg6[%c0_119, %c0_120], %105 {strides = array<i32>} : memref<160x32xf32, #tpu.memory_space<vmem>>, vector<160x32xf32>,
    %c0_121 = arith.constant 0 : index
    %c43 = arith.constant 43 : index
    %c0_122 = arith.constant 0 : index
    %107 = vector.load %arg3[%c0_121, %c43, %c0_122] : memref<1x208x16xbf16, #tpu.memory_space<vmem>>, vector<1x160x16xbf16>
    %108 = vector.shape_cast %107 : vector<1x160x16xbf16> to vector<160x16xbf16>
    %c0_123 = arith.constant 0 : index
    %c0_124 = arith.constant 0 : index
    %109 = vector.load %arg6[%c0_123, %c0_124] : memref<160x32xf32, #tpu.memory_space<vmem>>, vector<160x32xf32>
    %c13 = arith.constant 13 : index
    %c0_125 = arith.constant 0 : index
    %c0_126 = arith.constant 0 : index
    %110 = vector.load %arg4[%c13, %c0_125, %c0_126] : memref<16x16x32xbf16, #tpu.memory_space<vmem>>, vector<1x16x32xbf16>
    %111 = vector.shape_cast %110 : vector<1x16x32xbf16> to vector<16x32xbf16>
    %cst_127 = arith.constant dense<0.000000e+00> : vector<160x32xf32>
    %112 = tpu.matmul %108, %111, %cst_127 {dimension_numbers = #tpu.dot_dimension_numbers<[1], [0], [0], [1], [0, 0, 1, 1], [], []>} : vector<160x16xbf16>, vector<16x32xbf16>, vector<160x32xf32> -> vector<160x32xf32>
    %113 = arith.addf %109, %112 : vector<160x32xf32>
    %c0_128 = arith.constant 0 : index
    %c0_129 = arith.constant 0 : index
    %114 = vector.load %arg6[%c0_128, %c0_129] : memref<160x32xf32, #tpu.memory_space<vmem>>, vector<160x32xf32>
    tpu.vector_store %arg6[%c0_128, %c0_129], %113 {strides = array<i32>} : memref<160x32xf32, #tpu.memory_space<vmem>>, vector<160x32xf32>,
    %c0_130 = arith.constant 0 : index
    %c44 = arith.constant 44 : index
    %c0_131 = arith.constant 0 : index
    %115 = vector.load %arg3[%c0_130, %c44, %c0_131] : memref<1x208x16xbf16, #tpu.memory_space<vmem>>, vector<1x160x16xbf16>
    %116 = vector.shape_cast %115 : vector<1x160x16xbf16> to vector<160x16xbf16>
    %c0_132 = arith.constant 0 : index
    %c0_133 = arith.constant 0 : index
    %117 = vector.load %arg6[%c0_132, %c0_133] : memref<160x32xf32, #tpu.memory_space<vmem>>, vector<160x32xf32>
    %c14_134 = arith.constant 14 : index
    %c0_135 = arith.constant 0 : index
    %c0_136 = arith.constant 0 : index
    %118 = vector.load %arg4[%c14_134, %c0_135, %c0_136] : memref<16x16x32xbf16, #tpu.memory_space<vmem>>, vector<1x16x32xbf16>
    %119 = vector.shape_cast %118 : vector<1x16x32xbf16> to vector<16x32xbf16>
    %cst_137 = arith.constant dense<0.000000e+00> : vector<160x32xf32>
    %120 = tpu.matmul %116, %119, %cst_137 {dimension_numbers = #tpu.dot_dimension_numbers<[1], [0], [0], [1], [0, 0, 1, 1], [], []>} : vector<160x16xbf16>, vector<16x32xbf16>, vector<160x32xf32> -> vector<160x32xf32>
    %121 = arith.addf %117, %120 : vector<160x32xf32>
    %c0_138 = arith.constant 0 : index
    %c0_139 = arith.constant 0 : index
    %122 = vector.load %arg6[%c0_138, %c0_139] : memref<160x32xf32, #tpu.memory_space<vmem>>, vector<160x32xf32>
    tpu.vector_store %arg6[%c0_138, %c0_139], %121 {strides = array<i32>} : memref<160x32xf32, #tpu.memory_space<vmem>>, vector<160x32xf32>,
    %c0_140 = arith.constant 0 : index
    %c45 = arith.constant 45 : index
    %c0_141 = arith.constant 0 : index
    %123 = vector.load %arg3[%c0_140, %c45, %c0_141] : memref<1x208x16xbf16, #tpu.memory_space<vmem>>, vector<1x160x16xbf16>
    %124 = vector.shape_cast %123 : vector<1x160x16xbf16> to vector<160x16xbf16>
    %c0_142 = arith.constant 0 : index
    %c0_143 = arith.constant 0 : index
    %125 = vector.load %arg6[%c0_142, %c0_143] : memref<160x32xf32, #tpu.memory_space<vmem>>, vector<160x32xf32>
    %c15_144 = arith.constant 15 : index
    %c0_145 = arith.constant 0 : index
    %c0_146 = arith.constant 0 : index
    %126 = vector.load %arg4[%c15_144, %c0_145, %c0_146] : memref<16x16x32xbf16, #tpu.memory_space<vmem>>, vector<1x16x32xbf16>
    %127 = vector.shape_cast %126 : vector<1x16x32xbf16> to vector<16x32xbf16>
    %cst_147 = arith.constant dense<0.000000e+00> : vector<160x32xf32>
    %128 = tpu.matmul %124, %127, %cst_147 {dimension_numbers = #tpu.dot_dimension_numbers<[1], [0], [0], [1], [0, 0, 1, 1], [], []>} : vector<160x16xbf16>, vector<16x32xbf16>, vector<160x32xf32> -> vector<160x32xf32>
    %129 = arith.addf %125, %128 : vector<160x32xf32>
    %c0_148 = arith.constant 0 : index
    %c0_149 = arith.constant 0 : index
    %130 = vector.load %arg6[%c0_148, %c0_149] : memref<160x32xf32, #tpu.memory_space<vmem>>, vector<160x32xf32>
    tpu.vector_store %arg6[%c0_148, %c0_149], %129 {strides = array<i32>} : memref<160x32xf32, #tpu.memory_space<vmem>>, vector<160x32xf32>,
    %c0_i32_150 = arith.constant 0 : i32
    %131 = arith.cmpi eq, %arg2, %c0_i32_150 : i32
    %132 = arith.extui %131 : i1 to i32
    %c0_i32_151 = arith.constant 0 : i32
    %133 = arith.cmpi ne, %132, %c0_i32_151 : i32
    scf.if %133 {
      %c0_152 = arith.constant 0 : index
      %c0_153 = arith.constant 0 : index
      %134 = vector.load %arg6[%c0_152, %c0_153] : memref<160x32xf32, #tpu.memory_space<vmem>>, vector<160x32xf32>
      %135 = arith.truncf %134 : vector<160x32xf32> to vector<160x32xbf16>
      %c0_154 = arith.constant 0 : index
      %c0_155 = arith.constant 0 : index
      %c0_156 = arith.constant 0 : index
      %136 = vector.load %arg5[%c0_154, %c0_155, %c0_156] : memref<1x160x32xbf16, #tpu.memory_space<vmem>>, vector<1x160x32xbf16>
      %137 = vector.shape_cast %136 : vector<1x160x32xbf16> to vector<160x32xbf16>
      %138 = vector.shape_cast %135 : vector<160x32xbf16> to vector<1x160x32xbf16>
      tpu.vector_store %arg5[%c0_154, %c0_155, %c0_156], %138 {strides = array<i32>} : memref<1x160x32xbf16, #tpu.memory_space<vmem>>, vector<1x160x32xbf16>,
    } else {
    }
    return
  }
  func.func @transform_0(%arg0: i32, %arg1: i32, %arg2: i32) -> (i32, i32, i32) {
    %c0_i32 = arith.constant 0 : i32
    %c0_i32_0 = arith.constant 0 : i32
    return %arg0, %c0_i32, %arg2 : i32, i32, i32
  }
  func.func @transform_1(%arg0: i32, %arg1: i32, %arg2: i32) -> (i32, i32, i32) {
    %c0_i32 = arith.constant 0 : i32
    %c0_i32_0 = arith.constant 0 : i32
    return %c0_i32, %arg2, %arg1 : i32, i32, i32
  }
  func.func @transform_2(%arg0: i32, %arg1: i32, %arg2: i32) -> (i32, i32, i32) {
    %c0_i32 = arith.constant 0 : i32
    %c0_i32_0 = arith.constant 0 : i32
    return %arg0, %c0_i32, %arg1 : i32, i32, i32
  }
}

</mosaic_0001>

<llo_original>
// kernel: tpu_custom_call.1
$region0: #{tpu_custom_call.1}
  #allocation0 [shape = 'u32[]', space=smem, size = 0x4, offset = 0x4, fixed_abs, tag = 'smem constant byte address 0x4 - core index']
  #allocation1 [shape = 'u32[144,128]{1,0:T(1,128)}', space=vmem, size = 0x12000, scoped, tag = 'internal scratch']
  #allocation2 [shape = 'f32[160,32]{1,0:T(8,128)}', space=vmem, size = 0x14000, scoped, tag = 'scratch operand']
  %s0 = inlined_call_operand.vmem [shape: bf16[1,208,16], index: 0, kind: input, shape index: {}]
  %s1 = inlined_call_operand.hbm [shape: bf16[16,16,32], index: 1, kind: input, shape index: {}]
  %s2 = inlined_call_operand.vmem [shape: bf16[1,160,32], index: 2, kind: output, shape index: {}]
  %s3 = sld [smem:[#allocation0]]
  $region30: #{tpu_custom_call.1} parent=0
    _
  %s5 = ssub.s32 1, %s3
  %s6 = scalar_select 0, %s5, %s3
  $region1: #{tpu_custom_call.1} parent=0
    #allocation3 [shape = 'u8[65536]{0}', space=vmem, size = 0x10000, scoped, tag = 'input window, operand 1, single buffered']
    #allocation4 [shape = 's32[1]{0}', space=sflag, size = 0x4, scoped, tag = 'scoped memory for tpu_custom_call.1']
    %7 = vsyncpa [#allocation4], 0
    // Predicated region
    $region2: #{tpu_custom_call.1} parent=1 // pred_check
      _
    $region3: #{tpu_custom_call.1} parent=1 // pred_check_branch
      %9 = sbr.rel (0) target = $region5
    $region4: #{tpu_custom_call.1} parent=1 // pred_region
      _
    $region5: #{tpu_custom_call.1} parent=1 // pred_fallthru
      _
    // Predicated region
    $region6: #{tpu_custom_call.1} parent=1 // pred_check
      _
    $region7: #{tpu_custom_call.1} parent=1 // pred_check_branch
      %11 = sbr.rel (0) target = $region9
    $region8: #{tpu_custom_call.1} parent=1 // pred_region
      %s13 = ssub.s32 2048, 2048
      %14 = vsyncadd [#allocation4], %s13
      %s15 = sshll.u32 [#allocation3], 4
      %s16 = int_to_ptr.vmem [resolvable:$true] %s15
      %21 = dma.hbm_to_vmem [thread:$0]  %s1, 2048, %s16, [#allocation4], 64, 64, 4
    $region9: #{tpu_custom_call.1} parent=1 // pred_fallthru
      _
    // Predicated region
    $region10: #{tpu_custom_call.1} parent=1 // pred_check
      _
    $region11: #{tpu_custom_call.1} parent=1 // pred_check_branch
      %23 = sbr.rel (0) target = $region13
    $region12: #{tpu_custom_call.1} parent=1 // pred_region
      %24 = dma.done [#allocation4], 2048
    $region13: #{tpu_custom_call.1} parent=1 // pred_fallthru
      _
    %p26 = scmp.eq.s32.totalorder 0, 0
    // Predicated region
    $region14: #{tpu_custom_call.1} parent=1 // pred_check
      %p27 = pneg %p26
    $region15: #{tpu_custom_call.1} parent=1 // pred_check_branch
      %29 = sbr.rel (%p27) target = $region17
    $region16: #{tpu_custom_call.1} parent=1 // pred_region
      %vm30 = vcmask 261120
      %31 = vst.msk [vmem:[#allocation2] sm:$0xff] %vm30, 0.0
      %32 = vst.msk [vmem:[#allocation2 + $0x8] sm:$0xff] %vm30, 0.0
      %33 = vst.msk [vmem:[#allocation2 + $0x10] sm:$0xff] %vm30, 0.0
      %34 = vst.msk [vmem:[#allocation2 + $0x18] sm:$0xff] %vm30, 0.0
      %35 = vst.msk [vmem:[#allocation2 + $0x20] sm:$0xff] %vm30, 0.0
      %36 = vst.msk [vmem:[#allocation2 + $0x28] sm:$0xff] %vm30, 0.0
      %37 = vst.msk [vmem:[#allocation2 + $0x30] sm:$0xff] %vm30, 0.0
      %38 = vst.msk [vmem:[#allocation2 + $0x38] sm:$0xff] %vm30, 0.0
      %39 = vst.msk [vmem:[#allocation2 + $0x40] sm:$0xff] %vm30, 0.0
      %40 = vst.msk [vmem:[#allocation2 + $0x48] sm:$0xff] %vm30, 0.0
      %41 = vst.msk [vmem:[#allocation2 + $0x50] sm:$0xff] %vm30, 0.0
      %42 = vst.msk [vmem:[#allocation2 + $0x58] sm:$0xff] %vm30, 0.0
      %43 = vst.msk [vmem:[#allocation2 + $0x60] sm:$0xff] %vm30, 0.0
      %44 = vst.msk [vmem:[#allocation2 + $0x68] sm:$0xff] %vm30, 0.0
      %45 = vst.msk [vmem:[#allocation2 + $0x70] sm:$0xff] %vm30, 0.0
      %46 = vst.msk [vmem:[#allocation2 + $0x78] sm:$0xff] %vm30, 0.0
      %47 = vst.msk [vmem:[#allocation2 + $0x80] sm:$0xff] %vm30, 0.0
      %48 = vst.msk [vmem:[#allocation2 + $0x88] sm:$0xff] %vm30, 0.0
      %49 = vst.msk [vmem:[#allocation2 + $0x90] sm:$0xff] %vm30, 0.0
      %50 = vst.msk [vmem:[#allocation2 + $0x98] sm:$0xff] %vm30, 0.0
    $region17: #{tpu_custom_call.1} parent=1 // pred_fallthru
      _
    %v51 = vld [vmem:[%s0] sm:$0xf]
    %v52 = vld [vmem:[%s0 + $0x4] sm:$0xf]
    %v53 = vld [vmem:[%s0 + $0x8] sm:$0xf]
    %v54 = vld [vmem:[%s0 + $0xc] sm:$0xf]
    %v55 = vld [vmem:[%s0 + $0x10] sm:$0xf]
    %v56 = vld [vmem:[%s0 + $0x14] sm:$0xf]
    %v57 = vld [vmem:[%s0 + $0x18] sm:$0xf]
    %v58 = vld [vmem:[%s0 + $0x1c] sm:$0xf]
    %v59 = vld [vmem:[%s0 + $0x20] sm:$0xf]
    %v60 = vld [vmem:[%s0 + $0x24] sm:$0xf]
    %v61 = vld [vmem:[%s0 + $0x28] sm:$0xf]
    %v62 = vld [vmem:[%s0 + $0x2c] sm:$0xf]
    %v63 = vld [vmem:[%s0 + $0x30] sm:$0xf]
    %v64 = vld [vmem:[%s0 + $0x34] sm:$0xf]
    %v65 = vld [vmem:[%s0 + $0x38] sm:$0xf]
    %v66 = vld [vmem:[%s0 + $0x3c] sm:$0xf]
    %v67 = vld [vmem:[%s0 + $0x40] sm:$0xf]
    %v68 = vld [vmem:[%s0 + $0x44] sm:$0xf]
    %v69 = vld [vmem:[%s0 + $0x48] sm:$0xf]
    %v70 = vld [vmem:[%s0 + $0x4c] sm:$0xf]
    %v71 = vld [vmem:[#allocation2] sm:$0xff]
    %v72 = vld [vmem:[#allocation2 + $0x8] sm:$0xff]
    %v73 = vld [vmem:[#allocation2 + $0x10] sm:$0xff]
    %v74 = vld [vmem:[#allocation2 + $0x18] sm:$0xff]
    %v75 = vld [vmem:[#allocation2 + $0x20] sm:$0xff]
    %v76 = vld [vmem:[#allocation2 + $0x28] sm:$0xff]
    %v77 = vld [vmem:[#allocation2 + $0x30] sm:$0xff]
    %v78 = vld [vmem:[#allocation2 + $0x38] sm:$0xff]
    %v79 = vld [vmem:[#allocation2 + $0x40] sm:$0xff]
    %v80 = vld [vmem:[#allocation2 + $0x48] sm:$0xff]
    %v81 = vld [vmem:[#allocation2 + $0x50] sm:$0xff]
    %v82 = vld [vmem:[#allocation2 + $0x58] sm:$0xff]
    %v83 = vld [vmem:[#allocation2 + $0x60] sm:$0xff]
    %v84 = vld [vmem:[#allocation2 + $0x68] sm:$0xff]
    %v85 = vld [vmem:[#allocation2 + $0x70] sm:$0xff]
    %v86 = vld [vmem:[#allocation2 + $0x78] sm:$0xff]
    %v87 = vld [vmem:[#allocation2 + $0x80] sm:$0xff]
    %v88 = vld [vmem:[#allocation2 + $0x88] sm:$0xff]
    %v89 = vld [vmem:[#allocation2 + $0x90] sm:$0xff]
    %v90 = vld [vmem:[#allocation2 + $0x98] sm:$0xff]
    %v91 = vld [vmem:[#allocation3] sm:$0xf]
    %v92 = vld [vmem:[#allocation3 + $0x4] sm:$0xf]
    %v113 = vunpack.c.l.b16 %v51
    %v114 = vunpack.c.l.b16 %v52
    %v115 = vunpack.c.l.b16 %v53
    %v116 = vunpack.c.l.b16 %v54
    %v117 = vunpack.c.l.b16 %v55
    %v118 = vunpack.c.l.b16 %v56
    %v119 = vunpack.c.l.b16 %v57
    %v120 = vunpack.c.l.b16 %v58
    %v121 = vunpack.c.l.b16 %v59
    %v122 = vunpack.c.l.b16 %v60
    %v123 = vunpack.c.l.b16 %v61
    %v124 = vunpack.c.l.b16 %v62
    %v125 = vunpack.c.l.b16 %v63
    %v126 = vunpack.c.l.b16 %v64
    %v127 = vunpack.c.l.b16 %v65
    %v128 = vunpack.c.l.b16 %v66
    %v129 = vunpack.c.l.b16 %v67
    %v130 = vunpack.c.l.b16 %v68
    %v131 = vunpack.c.l.b16 %v69
    %v132 = vunpack.c.l.b16 %v70
    %v133 = vpack.c.b16 %v114, %v113
    %v134 = vpack.c.b16 %v116, %v115
    %v135 = vpack.c.b16 %v118, %v117
    %v136 = vpack.c.b16 %v120, %v119
    %v137 = vpack.c.b16 %v122, %v121
    %v138 = vpack.c.b16 %v124, %v123
    %v139 = vpack.c.b16 %v126, %v125
    %v140 = vpack.c.b16 %v128, %v127
    %v141 = vpack.c.b16 %v130, %v129
    %v142 = vpack.c.b16 %v132, %v131
    %v145 = vunpack.c.l.b16 %v91
    %v146 = vunpack.c.l.b16 %v92
    %v147 = vpack.c.b16 %v146, %v145
    %vm149 = vcmask 130048
    %v151 = vsel %vm149, %v133, 0
    %v154 = vsel %vm149, %v134, 0
    %v157 = vsel %vm149, %v135, 0
    %v160 = vsel %vm149, %v136, 0
    %v163 = vsel %vm149, %v137, 0
    %v166 = vsel %vm149, %v138, 0
    %v169 = vsel %vm149, %v139, 0
    %v172 = vsel %vm149, %v140, 0
    %v175 = vsel %vm149, %v141, 0
    %v178 = vsel %vm149, %v142, 0
    %180 = vmatprep.subr.bf16.mxu0 0
    %181 = vmatpush1.bf16.msra.mxu0 %v147
    %182 = vmatprep.subr.bf16.mxu0 0
    %183 = vmatpush1.bf16.msra.mxu0 0
    %184 = vmatprep.subr.bf16.mxu0 0
    %185 = vmatpush1.bf16.msra.mxu0 0
    %186 = vmatprep.subr.bf16.mxu0 0
    %187 = vmatpush1.bf16.msra.mxu0 0
    %188 = vmatprep.subr.bf16.mxu0 0
    %189 = vmatpush1.bf16.msra.mxu0 0
    %190 = vmatprep.subr.bf16.mxu0 0
    %191 = vmatpush1.bf16.msra.mxu0 0
    %192 = vmatprep.subr.bf16.mxu0 0
    %193 = vmatpush1.bf16.msra.mxu0 0
    %194 = vmatprep.subr.bf16.mxu0 0
    %195 = vmatpush1.bf16.msra.mxu0 0
    %196 = vmatprep.subr.bf16.mxu0 0
    %197 = vmatpush1.bf16.msra.mxu0 0
    %198 = vmatprep.subr.bf16.mxu0 0
    %199 = vmatpush1.bf16.msra.mxu0 0
    %200 = vmatprep.subr.bf16.mxu0 0
    %201 = vmatpush1.bf16.msra.mxu0 0
    %202 = vmatprep.subr.bf16.mxu0 0
    %203 = vmatpush1.bf16.msra.mxu0 0
    %204 = vmatprep.subr.bf16.mxu0 0
    %205 = vmatpush1.bf16.msra.mxu0 0
    %206 = vmatprep.subr.bf16.mxu0 0
    %207 = vmatpush1.bf16.msra.mxu0 0
    %208 = vmatprep.subr.bf16.mxu0 0
    %209 = vmatpush1.bf16.msra.mxu0 0
    %210 = vmatprep.subr.bf16.mxu0 0
    %211 = vmatpush1.bf16.msra.mxu0 0
    %212 = vmatprep.mubr.bf16.mxu0 0
    %213 = vmatmul.mubr.bf16.gmra.mrb[0].mxu0 %v151
    %v214 = vpop.f32.mrb[0].mxu0
    %v215 = vadd.f32 0.0, %v214
    %v216 = vpop.f32.mrb[0].mxu0
    %v217 = vpop.f32.mrb[0].mxu0
    %v218 = vadd.f32 0.0, %v217
    %v219 = vpop.f32.mrb[0].mxu0
    %220 = vmatprep.mubr.bf16.mxu0 0
    %221 = vmatmul.mubr.bf16.gmra.mrb[0].mxu0 %v154
    %v222 = vpop.f32.mrb[0].mxu0
    %v223 = vadd.f32 0.0, %v222
    %v224 = vpop.f32.mrb[0].mxu0
    %v225 = vpop.f32.mrb[0].mxu0
    %v226 = vadd.f32 0.0, %v225
    %v227 = vpop.f32.mrb[0].mxu0
    %228 = vmatprep.mubr.bf16.mxu0 0
    %229 = vmatmul.mubr.bf16.gmra.mrb[0].mxu0 %v157
    %v230 = vpop.f32.mrb[0].mxu0
    %v231 = vadd.f32 0.0, %v230
    %v232 = vpop.f32.mrb[0].mxu0
    %v233 = vpop.f32.mrb[0].mxu0
    %v234 = vadd.f32 0.0, %v233
    %v235 = vpop.f32.mrb[0].mxu0
    %236 = vmatprep.mubr.bf16.mxu0 0
    %237 = vmatmul.mubr.bf16.gmra.mrb[0].mxu0 %v160
    %v238 = vpop.f32.mrb[0].mxu0
    %v239 = vadd.f32 0.0, %v238
    %v240 = vpop.f32.mrb[0].mxu0
    %v241 = vpop.f32.mrb[0].mxu0
    %v242 = vadd.f32 0.0, %v241
    %v243 = vpop.f32.mrb[0].mxu0
    %244 = vmatprep.mubr.bf16.mxu0 0
    %245 = vmatmul.mubr.bf16.gmra.mrb[0].mxu0 %v163
    %v246 = vpop.f32.mrb[0].mxu0
    %v247 = vadd.f32 0.0, %v246
    %v248 = vpop.f32.mrb[0].mxu0
    %v249 = vpop.f32.mrb[0].mxu0
    %v250 = vadd.f32 0.0, %v249
    %v251 = vpop.f32.mrb[0].mxu0
    %252 = vmatprep.mubr.bf16.mxu0 0
    %253 = vmatmul.mubr.bf16.gmra.mrb[0].mxu0 %v166
    %v254 = vpop.f32.mrb[0].mxu0
    %v255 = vadd.f32 0.0, %v254
    %v256 = vpop.f32.mrb[0].mxu0
    %v257 = vpop.f32.mrb[0].mxu0
    %v258 = vadd.f32 0.0, %v257
    %v259 = vpop.f32.mrb[0].mxu0
    %260 = vmatprep.mubr.bf16.mxu0 0
    %261 = vmatmul.mubr.bf16.gmra.mrb[0].mxu0 %v169
    %v262 = vpop.f32.mrb[0].mxu0
    %v263 = vadd.f32 0.0, %v262
    %v264 = vpop.f32.mrb[0].mxu0
    %v265 = vpop.f32.mrb[0].mxu0
    %v266 = vadd.f32 0.0, %v265
    %v267 = vpop.f32.mrb[0].mxu0
    %268 = vmatprep.mubr.bf16.mxu0 0
    %269 = vmatmul.mubr.bf16.gmra.mrb[0].mxu0 %v172
    %v270 = vpop.f32.mrb[0].mxu0
    %v271 = vadd.f32 0.0, %v270
    %v272 = vpop.f32.mrb[0].mxu0
    %v273 = vpop.f32.mrb[0].mxu0
    %v274 = vadd.f32 0.0, %v273
    %v275 = vpop.f32.mrb[0].mxu0
    %276 = vmatprep.mubr.bf16.mxu0 0
    %277 = vmatmul.mubr.bf16.gmra.mrb[0].mxu0 %v175
    %v278 = vpop.f32.mrb[0].mxu0
    %v279 = vadd.f32 0.0, %v278
    %v280 = vpop.f32.mrb[0].mxu0
    %v281 = vpop.f32.mrb[0].mxu0
    %v282 = vadd.f32 0.0, %v281
    %v283 = vpop.f32.mrb[0].mxu0
    %284 = vmatprep.mubr.bf16.mxu0 0
    %285 = vmatmul.mubr.bf16.gmra.mrb[0].mxu0 %v178
    %v286 = vpop.f32.mrb[0].mxu0
    %v287 = vadd.f32 0.0, %v286
    %v288 = vpop.f32.mrb[0].mxu0
    %v289 = vpop.f32.mrb[0].mxu0
    %v290 = vadd.f32 0.0, %v289
    %v291 = vpop.f32.mrb[0].mxu0
    %292 = vdwg.mxu0
    %v293 = vadd.f32 %v71, %v215
    %v294 = vadd.f32 %v72, %v218
    %v295 = vadd.f32 %v73, %v223
    %v296 = vadd.f32 %v74, %v226
    %v297 = vadd.f32 %v75, %v231
    %v298 = vadd.f32 %v76, %v234
    %v299 = vadd.f32 %v77, %v239
    %v300 = vadd.f32 %v78, %v242
    %v301 = vadd.f32 %v79, %v247
    %v302 = vadd.f32 %v80, %v250
    %v303 = vadd.f32 %v81, %v255
    %v304 = vadd.f32 %v82, %v258
    %v305 = vadd.f32 %v83, %v263
    %v306 = vadd.f32 %v84, %v266
    %v307 = vadd.f32 %v85, %v271
    %v308 = vadd.f32 %v86, %v274
    %v309 = vadd.f32 %v87, %v279
    %v310 = vadd.f32 %v88, %v282
    %v311 = vadd.f32 %v89, %v287
    %v312 = vadd.f32 %v90, %v290
    %vm313 = vcmask 261120
    %314 = vst.msk [vmem:[#allocation2] sm:$0xff] %vm313, %v293
    %315 = vst.msk [vmem:[#allocation2 + $0x8] sm:$0xff] %vm313, %v294
    %316 = vst.msk [vmem:[#allocation2 + $0x10] sm:$0xff] %vm313, %v295
    %317 = vst.msk [vmem:[#allocation2 + $0x18] sm:$0xff] %vm313, %v296
    %318 = vst.msk [vmem:[#allocation2 + $0x20] sm:$0xff] %vm313, %v297
    %319 = vst.msk [vmem:[#allocation2 + $0x28] sm:$0xff] %vm313, %v298
    %320 = vst.msk [vmem:[#allocation2 + $0x30] sm:$0xff] %vm313, %v299
    %321 = vst.msk [vmem:[#allocation2 + $0x38] sm:$0xff] %vm313, %v300
    %322 = vst.msk [vmem:[#allocation2 + $0x40] sm:$0xff] %vm313, %v301
    %323 = vst.msk [vmem:[#allocation2 + $0x48] sm:$0xff] %vm313, %v302
    %324 = vst.msk [vmem:[#allocation2 + $0x50] sm:$0xff] %vm313, %v303
    %325 = vst.msk [vmem:[#allocation2 + $0x58] sm:$0xff] %vm313, %v304
    %326 = vst.msk [vmem:[#allocation2 + $0x60] sm:$0xff] %vm313, %v305
    %327 = vst.msk [vmem:[#allocation2 + $0x68] sm:$0xff] %vm313, %v306
    %328 = vst.msk [vmem:[#allocation2 + $0x70] sm:$0xff] %vm313, %v307
    %329 = vst.msk [vmem:[#allocation2 + $0x78] sm:$0xff] %vm313, %v308
    %330 = vst.msk [vmem:[#allocation2 + $0x80] sm:$0xff] %vm313, %v309
    %331 = vst.msk [vmem:[#allocation2 + $0x88] sm:$0xff] %vm313, %v310
    %332 = vst.msk [vmem:[#allocation2 + $0x90] sm:$0xff] %vm313, %v311
    %333 = vst.msk [vmem:[#allocation2 + $0x98] sm:$0xff] %vm313, %v312
    %v334 = vld [vmem:[%s0] sm:$0xf]
    %v335 = vld [vmem:[%s0 + $0x4] sm:$0xf]
    %v336 = vld [vmem:[%s0 + $0x8] sm:$0xf]
    %v337 = vld [vmem:[%s0 + $0xc] sm:$0xf]
    %v338 = vld [vmem:[%s0 + $0x10] sm:$0xf]
    %v339 = vld [vmem:[%s0 + $0x14] sm:$0xf]
    %v340 = vld [vmem:[%s0 + $0x18] sm:$0xf]
    %v341 = vld [vmem:[%s0 + $0x1c] sm:$0xf]
    %v342 = vld [vmem:[%s0 + $0x20] sm:$0xf]
    %v343 = vld [vmem:[%s0 + $0x24] sm:$0xf]
    %v344 = vld [vmem:[%s0 + $0x28] sm:$0xf]
    %v345 = vld [vmem:[%s0 + $0x2c] sm:$0xf]
    %v346 = vld [vmem:[%s0 + $0x30] sm:$0xf]
    %v347 = vld [vmem:[%s0 + $0x34] sm:$0xf]
    %v348 = vld [vmem:[%s0 + $0x38] sm:$0xf]
    %v349 = vld [vmem:[%s0 + $0x3c] sm:$0xf]
    %v350 = vld [vmem:[%s0 + $0x40] sm:$0xf]
    %v351 = vld [vmem:[%s0 + $0x44] sm:$0xf]
    %v352 = vld [vmem:[%s0 + $0x48] sm:$0xf]
    %v353 = vld [vmem:[%s0 + $0x4c] sm:$0xf]
    %v354 = vld [vmem:[%s0 + $0x50] sm:$0x1]
    %v355 = vld [vmem:[#allocation2] sm:$0xff]
    %v356 = vld [vmem:[#allocation2 + $0x8] sm:$0xff]
    %v357 = vld [vmem:[#allocation2 + $0x10] sm:$0xff]
    %v358 = vld [vmem:[#allocation2 + $0x18] sm:$0xff]
    %v359 = vld [vmem:[#allocation2 + $0x20] sm:$0xff]
    %v360 = vld [vmem:[#allocation2 + $0x28] sm:$0xff]
    %v361 = vld [vmem:[#allocation2 + $0x30] sm:$0xff]
    %v362 = vld [vmem:[#allocation2 + $0x38] sm:$0xff]
    %v363 = vld [vmem:[#allocation2 + $0x40] sm:$0xff]
    %v364 = vld [vmem:[#allocation2 + $0x48] sm:$0xff]
    %v365 = vld [vmem:[#allocation2 + $0x50] sm:$0xff]
    %v366 = vld [vmem:[#allocation2 + $0x58] sm:$0xff]
    %v367 = vld [vmem:[#allocation2 + $0x60] sm:$0xff]
    %v368 = vld [vmem:[#allocation2 + $0x68] sm:$0xff]
    %v369 = vld [vmem:[#allocation2 + $0x70] sm:$0xff]
    %v370 = vld [vmem:[#allocation2 + $0x78] sm:$0xff]
    %v371 = vld [vmem:[#allocation2 + $0x80] sm:$0xff]
    %v372 = vld [vmem:[#allocation2 + $0x88] sm:$0xff]
    %v373 = vld [vmem:[#allocation2 + $0x90] sm:$0xff]
    %v374 = vld [vmem:[#allocation2 + $0x98] sm:$0xff]
    %s375 = scalar_lea.vmem [#allocation3], 8
    %v376 = vld [vmem:[%s375] sm:$0xf]
    %v377 = vld [vmem:[%s375 + $0x4] sm:$0xf]
    %v399 = vunpack.c.l.b16 %v334
    %v400 = vunpack.c.l.b16 %v335
    %v401 = vunpack.c.l.b16 %v336
    %v402 = vunpack.c.l.b16 %v337
    %v403 = vunpack.c.l.b16 %v338
    %v404 = vunpack.c.l.b16 %v339
    %v405 = vunpack.c.l.b16 %v340
    %v406 = vunpack.c.l.b16 %v341
    %v407 = vunpack.c.l.b16 %v342
    %v408 = vunpack.c.l.b16 %v343
    %v409 = vunpack.c.l.b16 %v344
    %v410 = vunpack.c.l.b16 %v345
    %v411 = vunpack.c.l.b16 %v346
    %v412 = vunpack.c.l.b16 %v347
    %v413 = vunpack.c.l.b16 %v348
    %v414 = vunpack.c.l.b16 %v349
    %v415 = vunpack.c.l.b16 %v350
    %v416 = vunpack.c.l.b16 %v351
    %v417 = vunpack.c.l.b16 %v352
    %v418 = vunpack.c.l.b16 %v353
    %v419 = vunpack.c.l.b16 %v354
    %v420 = vpack.c.b16 %v400, %v399
    %v421 = vpack.c.b16 %v402, %v401
    %v422 = vpack.c.b16 %v404, %v403
    %v423 = vpack.c.b16 %v406, %v405
    %v424 = vpack.c.b16 %v408, %v407
    %v425 = vpack.c.b16 %v410, %v409
    %v426 = vpack.c.b16 %v412, %v411
    %v427 = vpack.c.b16 %v414, %v413
    %v428 = vpack.c.b16 %v416, %v415
    %v429 = vpack.c.b16 %v418, %v417
    %v430 = vpack.c.b16 %v419, %v419
    %vm431 = vsmask.f32 7424
    %v433 = vshrl.u32 %v420, 16
    %v435 = vshll.u32 %v420, 16
    %v437 = vrot.slane %v435, 1
    %v438 = vor.u32 %v433, %v437
    %v440 = vshll.u32 %v421, 16
    %v442 = vrot.slane %v440, 1
    %v443 = vsel %vm431, %v438, %v442
    %v444 = vshrl.u32 %v421, 16
    %v446 = vor.u32 %v444, %v442
    %v448 = vshll.u32 %v422, 16
    %v450 = vrot.slane %v448, 1
    %v451 = vsel %vm431, %v446, %v450
    %v452 = vshrl.u32 %v422, 16
    %v454 = vor.u32 %v452, %v450
    %v456 = vshll.u32 %v423, 16
    %v458 = vrot.slane %v456, 1
    %v459 = vsel %vm431, %v454, %v458
    %v460 = vshrl.u32 %v423, 16
    %v462 = vor.u32 %v460, %v458
    %v464 = vshll.u32 %v424, 16
    %v466 = vrot.slane %v464, 1
    %v467 = vsel %vm431, %v462, %v466
    %v468 = vshrl.u32 %v424, 16
    %v470 = vor.u32 %v468, %v466
    %v472 = vshll.u32 %v425, 16
    %v474 = vrot.slane %v472, 1
    %v475 = vsel %vm431, %v470, %v474
    %v476 = vshrl.u32 %v425, 16
    %v478 = vor.u32 %v476, %v474
    %v480 = vshll.u32 %v426, 16
    %v482 = vrot.slane %v480, 1
    %v483 = vsel %vm431, %v478, %v482
    %v484 = vshrl.u32 %v426, 16
    %v486 = vor.u32 %v484, %v482
    %v488 = vshll.u32 %v427, 16
    %v490 = vrot.slane %v488, 1
    %v491 = vsel %vm431, %v486, %v490
    %v492 = vshrl.u32 %v427, 16
    %v494 = vor.u32 %v492, %v490
    %v496 = vshll.u32 %v428, 16
    %v498 = vrot.slane %v496, 1
    %v499 = vsel %vm431, %v494, %v498
    %v500 = vshrl.u32 %v428, 16
    %v502 = vor.u32 %v500, %v498
    %v504 = vshll.u32 %v429, 16
    %v506 = vrot.slane %v504, 1
    %v507 = vsel %vm431, %v502, %v506
    %v508 = vshrl.u32 %v429, 16
    %v510 = vor.u32 %v508, %v506
    %v512 = vshll.u32 %v430, 16
    %v514 = vrot.slane %v512, 1
    %v515 = vsel %vm431, %v510, %v514
    %v518 = vunpack.c.l.b16 %v376
    %v519 = vunpack.c.l.b16 %v377
    %v520 = vpack.c.b16 %v519, %v518
    %v523 = vsel %vm149, %v443, 0
    %v526 = vsel %vm149, %v451, 0
    %v529 = vsel %vm149, %v459, 0
    %v532 = vsel %vm149, %v467, 0
    %v535 = vsel %vm149, %v475, 0
    %v538 = vsel %vm149, %v483, 0
    %v541 = vsel %vm149, %v491, 0
    %v544 = vsel %vm149, %v499, 0
    %v547 = vsel %vm149, %v507, 0
    %v550 = vsel %vm149, %v515, 0
    %552 = vmatprep.subr.bf16.mxu0 0
    %553 = vmatpush1.bf16.msra.mxu0 %v520
    %554 = vmatprep.subr.bf16.mxu0 0
    %555 = vmatpush1.bf16.msra.mxu0 0
    %556 = vmatprep.subr.bf16.mxu0 0
    %557 = vmatpush1.bf16.msra.mxu0 0
    %558 = vmatprep.subr.bf16.mxu0 0
    %559 = vmatpush1.bf16.msra.mxu0 0
    %560 = vmatprep.subr.bf16.mxu0 0
    %561 = vmatpush1.bf16.msra.mxu0 0
    %562 = vmatprep.subr.bf16.mxu0 0
    %563 = vmatpush1.bf16.msra.mxu0 0
    %564 = vmatprep.subr.bf16.mxu0 0
    %565 = vmatpush1.bf16.msra.mxu0 0
    %566 = vmatprep.subr.bf16.mxu0 0
    %567 = vmatpush1.bf16.msra.mxu0 0
    %568 = vmatprep.subr.bf16.mxu0 0
    %569 = vmatpush1.bf16.msra.mxu0 0
    %570 = vmatprep.subr.bf16.mxu0 0
    %571 = vmatpush1.bf16.msra.mxu0 0
    %572 = vmatprep.subr.bf16.mxu0 0
    %573 = vmatpush1.bf16.msra.mxu0 0
    %574 = vmatprep.subr.bf16.mxu0 0
    %575 = vmatpush1.bf16.msra.mxu0 0
    %576 = vmatprep.subr.bf16.mxu0 0
    %577 = vmatpush1.bf16.msra.mxu0 0
    %578 = vmatprep.subr.bf16.mxu0 0
    %579 = vmatpush1.bf16.msra.mxu0 0
    %580 = vmatprep.subr.bf16.mxu0 0
    %581 = vmatpush1.bf16.msra.mxu0 0
    %582 = vmatprep.subr.bf16.mxu0 0
    %583 = vmatpush1.bf16.msra.mxu0 0
    %584 = vmatprep.mubr.bf16.mxu0 0
    %585 = vmatmul.mubr.bf16.gmra.mrb[0].mxu0 %v523
    %v586 = vpop.f32.mrb[0].mxu0
    %v587 = vadd.f32 0.0, %v586
    %v588 = vpop.f32.mrb[0].mxu0
    %v589 = vpop.f32.mrb[0].mxu0
    %v590 = vadd.f32 0.0, %v589
    %v591 = vpop.f32.mrb[0].mxu0
    %592 = vmatprep.mubr.bf16.mxu0 0
    %593 = vmatmul.mubr.bf16.gmra.mrb[0].mxu0 %v526
    %v594 = vpop.f32.mrb[0].mxu0
    %v595 = vadd.f32 0.0, %v594
    %v596 = vpop.f32.mrb[0].mxu0
    %v597 = vpop.f32.mrb[0].mxu0
    %v598 = vadd.f32 0.0, %v597
    %v599 = vpop.f32.mrb[0].mxu0
    %600 = vmatprep.mubr.bf16.mxu0 0
    %601 = vmatmul.mubr.bf16.gmra.mrb[0].mxu0 %v529
    %v602 = vpop.f32.mrb[0].mxu0
    %v603 = vadd.f32 0.0, %v602
    %v604 = vpop.f32.mrb[0].mxu0
    %v605 = vpop.f32.mrb[0].mxu0
    %v606 = vadd.f32 0.0, %v605
    %v607 = vpop.f32.mrb[0].mxu0
    %608 = vmatprep.mubr.bf16.mxu0 0
    %609 = vmatmul.mubr.bf16.gmra.mrb[0].mxu0 %v532
    %v610 = vpop.f32.mrb[0].mxu0
    %v611 = vadd.f32 0.0, %v610
    %v612 = vpop.f32.mrb[0].mxu0
    %v613 = vpop.f32.mrb[0].mxu0
    %v614 = vadd.f32 0.0, %v613
    %v615 = vpop.f32.mrb[0].mxu0
    %616 = vmatprep.mubr.bf16.mxu0 0
    %617 = vmatmul.mubr.bf16.gmra.mrb[0].mxu0 %v535
    %v618 = vpop.f32.mrb[0].mxu0
    %v619 = vadd.f32 0.0, %v618
    %v620 = vpop.f32.mrb[0].mxu0
    %v621 = vpop.f32.mrb[0].mxu0
    %v622 = vadd.f32 0.0, %v621
    %v623 = vpop.f32.mrb[0].mxu0
    %624 = vmatprep.mubr.bf16.mxu0 0
    %625 = vmatmul.mubr.bf16.gmra.mrb[0].mxu0 %v538
    %v626 = vpop.f32.mrb[0].mxu0
    %v627 = vadd.f32 0.0, %v626
    %v628 = vpop.f32.mrb[0].mxu0
    %v629 = vpop.f32.mrb[0].mxu0
    %v630 = vadd.f32 0.0, %v629
    %v631 = vpop.f32.mrb[0].mxu0
    %632 = vmatprep.mubr.bf16.mxu0 0
    %633 = vmatmul.mubr.bf16.gmra.mrb[0].mxu0 %v541
    %v634 = vpop.f32.mrb[0].mxu0
    %v635 = vadd.f32 0.0, %v634
    %v636 = vpop.f32.mrb[0].mxu0
    %v637 = vpop.f32.mrb[0].mxu0
    %v638 = vadd.f32 0.0, %v637
    %v639 = vpop.f32.mrb[0].mxu0
    %640 = vmatprep.mubr.bf16.mxu0 0
    %641 = vmatmul.mubr.bf16.gmra.mrb[0].mxu0 %v544
    %v642 = vpop.f32.mrb[0].mxu0
    %v643 = vadd.f32 0.0, %v642
    %v644 = vpop.f32.mrb[0].mxu0
    %v645 = vpop.f32.mrb[0].mxu0
    %v646 = vadd.f32 0.0, %v645
    %v647 = vpop.f32.mrb[0].mxu0
    %648 = vmatprep.mubr.bf16.mxu0 0
    %649 = vmatmul.mubr.bf16.gmra.mrb[0].mxu0 %v547
    %v650 = vpop.f32.mrb[0].mxu0
    %v651 = vadd.f32 0.0, %v650
    %v652 = vpop.f32.mrb[0].mxu0
    %v653 = vpop.f32.mrb[0].mxu0
    %v654 = vadd.f32 0.0, %v653
    %v655 = vpop.f32.mrb[0].mxu0
    %656 = vmatprep.mubr.bf16.mxu0 0
    %657 = vmatmul.mubr.bf16.gmra.mrb[0].mxu0 %v550
    %v658 = vpop.f32.mrb[0].mxu0
    %v659 = vadd.f32 0.0, %v658
    %v660 = vpop.f32.mrb[0].mxu0
    %v661 = vpop.f32.mrb[0].mxu0
    %v662 = vadd.f32 0.0, %v661
    %v663 = vpop.f32.mrb[0].mxu0
    %664 = vdwg.mxu0
    %v665 = vadd.f32 %v355, %v587
    %v666 = vadd.f32 %v356, %v590
    %v667 = vadd.f32 %v357, %v595
    %v668 = vadd.f32 %v358, %v598
    %v669 = vadd.f32 %v359, %v603
    %v670 = vadd.f32 %v360, %v606
    %v671 = vadd.f32 %v361, %v611
    %v672 = vadd.f32 %v362, %v614
    %v673 = vadd.f32 %v363, %v619
    %v674 = vadd.f32 %v364, %v622
    %v675 = vadd.f32 %v365, %v627
    %v676 = vadd.f32 %v366, %v630
    %v677 = vadd.f32 %v367, %v635
    %v678 = vadd.f32 %v368, %v638
    %v679 = vadd.f32 %v369, %v643
    %v680 = vadd.f32 %v370, %v646
    %v681 = vadd.f32 %v371, %v651
    %v682 = vadd.f32 %v372, %v654
    %v683 = vadd.f32 %v373, %v659
    %v684 = vadd.f32 %v374, %v662
    %685 = vst.msk [vmem:[#allocation2] sm:$0xff] %vm313, %v665
    %686 = vst.msk [vmem:[#allocation2 + $0x8] sm:$0xff] %vm313, %v666
    %687 = vst.msk [vmem:[#allocation2 + $0x10] sm:$0xff] %vm313, %v667
    %688 = vst.msk [vmem:[#allocation2 + $0x18] sm:$0xff] %vm313, %v668
    %689 = vst.msk [vmem:[#allocation2 + $0x20] sm:$0xff] %vm313, %v669
    %690 = vst.msk [vmem:[#allocation2 + $0x28] sm:$0xff] %vm313, %v670
    %691 = vst.msk [vmem:[#allocation2 + $0x30] sm:$0xff] %vm313, %v671
    %692 = vst.msk [vmem:[#allocation2 + $0x38] sm:$0xff] %vm313, %v672
    %693 = vst.msk [vmem:[#allocation2 + $0x40] sm:$0xff] %vm313, %v673
    %694 = vst.msk [vmem:[#allocation2 + $0x48] sm:$0xff] %vm313, %v674
    %695 = vst.msk [vmem:[#allocation2 + $0x50] sm:$0xff] %vm313, %v675
    %696 = vst.msk [vmem:[#allocation2 + $0x58] sm:$0xff] %vm313, %v676
    %697 = vst.msk [vmem:[#allocation2 + $0x60] sm:$0xff] %vm313, %v677
    %698 = vst.msk [vmem:[#allocation2 + $0x68] sm:$0xff] %vm313, %v678
    %699 = vst.msk [vmem:[#allocation2 + $0x70] sm:$0xff] %vm313, %v679
    %700 = vst.msk [vmem:[#allocation2 + $0x78] sm:$0xff] %vm313, %v680
    %701 = vst.msk [vmem:[#allocation2 + $0x80] sm:$0xff] %vm313, %v681
    %702 = vst.msk [vmem:[#allocation2 + $0x88] sm:$0xff] %vm313, %v682
    %703 = vst.msk [vmem:[#allocation2 + $0x90] sm:$0xff] %vm313, %v683
    %704 = vst.msk [vmem:[#allocation2 + $0x98] sm:$0xff] %vm313, %v684
    %v705 = vld [vmem:[%s0] sm:$0xe]
    %v706 = vld [vmem:[%s0 + $0x4] sm:$0xf]
    %v707 = vld [vmem:[%s0 + $0x8] sm:$0xf]
    %v708 = vld [vmem:[%s0 + $0xc] sm:$0xf]
    %v709 = vld [vmem:[%s0 + $0x10] sm:$0xf]
    %v710 = vld [vmem:[%s0 + $0x14] sm:$0xf]
    %v711 = vld [vmem:[%s0 + $0x18] sm:$0xf]
    %v712 = vld [vmem:[%s0 + $0x1c] sm:$0xf]
    %v713 = vld [vmem:[%s0 + $0x20] sm:$0xf]
    %v714 = vld [vmem:[%s0 + $0x24] sm:$0xf]
    %v715 = vld [vmem:[%s0 + $0x28] sm:$0xf]
    %v716 = vld [vmem:[%s0 + $0x2c] sm:$0xf]
    %v717 = vld [vmem:[%s0 + $0x30] sm:$0xf]
    %v718 = vld [vmem:[%s0 + $0x34] sm:$0xf]
    %v719 = vld [vmem:[%s0 + $0x38] sm:$0xf]
    %v720 = vld [vmem:[%s0 + $0x3c] sm:$0xf]
    %v721 = vld [vmem:[%s0 + $0x40] sm:$0xf]
    %v722 = vld [vmem:[%s0 + $0x44] sm:$0xf]
    %v723 = vld [vmem:[%s0 + $0x48] sm:$0xf]
    %v724 = vld [vmem:[%s0 + $0x4c] sm:$0xf]
    %v725 = vld [vmem:[%s0 + $0x50] sm:$0x1]
    %v726 = vld [vmem:[#allocation2] sm:$0xff]
    %v727 = vld [vmem:[#allocation2 + $0x8] sm:$0xff]
    %v728 = vld [vmem:[#allocation2 + $0x10] sm:$0xff]
    %v729 = vld [vmem:[#allocation2 + $0x18] sm:$0xff]
    %v730 = vld [vmem:[#allocation2 + $0x20] sm:$0xff]
    %v731 = vld [vmem:[#allocation2 + $0x28] sm:$0xff]
    %v732 = vld [vmem:[#allocation2 + $0x30] sm:$0xff]
    %v733 = vld [vmem:[#allocation2 + $0x38] sm:$0xff]
    %v734 = vld [vmem:[#allocation2 + $0x40] sm:$0xff]
    %v735 = vld [vmem:[#allocation2 + $0x48] sm:$0xff]
    %v736 = vld [vmem:[#allocation2 + $0x50] sm:$0xff]
    %v737 = vld [vmem:[#allocation2 + $0x58] sm:$0xff]
    %v738 = vld [vmem:[#allocation2 + $0x60] sm:$0xff]
    %v739 = vld [vmem:[#allocation2 + $0x68] sm:$0xff]
    %v740 = vld [vmem:[#allocation2 + $0x70] sm:$0xff]
    %v741 = vld [vmem:[#allocation2 + $0x78] sm:$0xff]
    %v742 = vld [vmem:[#allocation2 + $0x80] sm:$0xff]
    %v743 = vld [vmem:[#allocation2 + $0x88] sm:$0xff]
    %v744 = vld [vmem:[#allocation2 + $0x90] sm:$0xff]
    %v745 = vld [vmem:[#allocation2 + $0x98] sm:$0xff]
    %s746 = scalar_lea.vmem [#allocation3], 16
    %v747 = vld [vmem:[%s746] sm:$0xf]
    %v748 = vld [vmem:[%s746 + $0x4] sm:$0xf]
    %v770 = vunpack.c.l.b16 %v705
    %v771 = vunpack.c.l.b16 %v706
    %v772 = vunpack.c.l.b16 %v707
    %v773 = vunpack.c.l.b16 %v708
    %v774 = vunpack.c.l.b16 %v709
    %v775 = vunpack.c.l.b16 %v710
    %v776 = vunpack.c.l.b16 %v711
    %v777 = vunpack.c.l.b16 %v712
    %v778 = vunpack.c.l.b16 %v713
    %v779 = vunpack.c.l.b16 %v714
    %v780 = vunpack.c.l.b16 %v715
    %v781 = vunpack.c.l.b16 %v716
    %v782 = vunpack.c.l.b16 %v717
    %v783 = vunpack.c.l.b16 %v718
    %v784 = vunpack.c.l.b16 %v719
    %v785 = vunpack.c.l.b16 %v720
    %v786 = vunpack.c.l.b16 %v721
    %v787 = vunpack.c.l.b16 %v722
    %v788 = vunpack.c.l.b16 %v723
    %v789 = vunpack.c.l.b16 %v724
    %v790 = vunpack.c.l.b16 %v725
    %v791 = vpack.c.b16 %v771, %v770
    %v792 = vpack.c.b16 %v773, %v772
    %v793 = vpack.c.b16 %v775, %v774
    %v794 = vpack.c.b16 %v777, %v776
    %v795 = vpack.c.b16 %v779, %v778
    %v796 = vpack.c.b16 %v781, %v780
    %v797 = vpack.c.b16 %v783, %v782
    %v798 = vpack.c.b16 %v785, %v784
    %v799 = vpack.c.b16 %v787, %v786
    %v800 = vpack.c.b16 %v789, %v788
    %v801 = vpack.c.b16 %v790, %v790
    %vm802 = vcmask 1046528
    %v803 = vrot.slane %v791, 1
    %v804 = vrot.slane %v792, 1
    %v805 = vsel %vm802, %v803, %v804
    %v806 = vrot.slane %v793, 1
    %v807 = vsel %vm802, %v804, %v806
    %v808 = vrot.slane %v794, 1
    %v809 = vsel %vm802, %v806, %v808
    %v810 = vrot.slane %v795, 1
    %v811 = vsel %vm802, %v808, %v810
    %v812 = vrot.slane %v796, 1
    %v813 = vsel %vm802, %v810, %v812
    %v814 = vrot.slane %v797, 1
    %v815 = vsel %vm802, %v812, %v814
    %v816 = vrot.slane %v798, 1
    %v817 = vsel %vm802, %v814, %v816
    %v818 = vrot.slane %v799, 1
    %v819 = vsel %vm802, %v816, %v818
    %v820 = vrot.slane %v800, 1
    %v821 = vsel %vm802, %v818, %v820
    %v822 = vrot.slane %v801, 1
    %v823 = vsel %vm802, %v820, %v822
    %v826 = vunpack.c.l.b16 %v747
    %v827 = vunpack.c.l.b16 %v748
    %v828 = vpack.c.b16 %v827, %v826
    %v831 = vsel %vm149, %v805, 0
    %v834 = vsel %vm149, %v807, 0
    %v837 = vsel %vm149, %v809, 0
    %v840 = vsel %vm149, %v811, 0
    %v843 = vsel %vm149, %v813, 0
    %v846 = vsel %vm149, %v815, 0
    %v849 = vsel %vm149, %v817, 0
    %v852 = vsel %vm149, %v819, 0
    %v855 = vsel %vm149, %v821, 0
    %v858 = vsel %vm149, %v823, 0
    %860 = vmatprep.subr.bf16.mxu0 0
    %861 = vmatpush1.bf16.msra.mxu0 %v828
    %862 = vmatprep.subr.bf16.mxu0 0
    %863 = vmatpush1.bf16.msra.mxu0 0
    %864 = vmatprep.subr.bf16.mxu0 0
    %865 = vmatpush1.bf16.msra.mxu0 0
    %866 = vmatprep.subr.bf16.mxu0 0
    %867 = vmatpush1.bf16.msra.mxu0 0
    %868 = vmatprep.subr.bf16.mxu0 0
    %869 = vmatpush1.bf16.msra.mxu0 0
    %870 = vmatprep.subr.bf16.mxu0 0
    %871 = vmatpush1.bf16.msra.mxu0 0
    %872 = vmatprep.subr.bf16.mxu0 0
    %873 = vmatpush1.bf16.msra.mxu0 0
    %874 = vmatprep.subr.bf16.mxu0 0
    %875 = vmatpush1.bf16.msra.mxu0 0
    %876 = vmatprep.subr.bf16.mxu0 0
    %877 = vmatpush1.bf16.msra.mxu0 0
    %878 = vmatprep.subr.bf16.mxu0 0
    %879 = vmatpush1.bf16.msra.mxu0 0
    %880 = vmatprep.subr.bf16.mxu0 0
    %881 = vmatpush1.bf16.msra.mxu0 0
    %882 = vmatprep.subr.bf16.mxu0 0
    %883 = vmatpush1.bf16.msra.mxu0 0
    %884 = vmatprep.subr.bf16.mxu0 0
    %885 = vmatpush1.bf16.msra.mxu0 0
    %886 = vmatprep.subr.bf16.mxu0 0
    %887 = vmatpush1.bf16.msra.mxu0 0
    %888 = vmatprep.subr.bf16.mxu0 0
    %889 = vmatpush1.bf16.msra.mxu0 0
    %890 = vmatprep.subr.bf16.mxu0 0
    %891 = vmatpush1.bf16.msra.mxu0 0
    %892 = vmatprep.mubr.bf16.mxu0 0
    %893 = vmatmul.mubr.bf16.gmra.mrb[0].mxu0 %v831
    %v894 = vpop.f32.mrb[0].mxu0
    %v895 = vadd.f32 0.0, %v894
    %v896 = vpop.f32.mrb[0].mxu0
    %v897 = vpop.f32.mrb[0].mxu0
    %v898 = vadd.f32 0.0, %v897
    %v899 = vpop.f32.mrb[0].mxu0
    %900 = vmatprep.mubr.bf16.mxu0 0
    %901 = vmatmul.mubr.bf16.gmra.mrb[0].mxu0 %v834
    %v902 = vpop.f32.mrb[0].mxu0
    %v903 = vadd.f32 0.0, %v902
    %v904 = vpop.f32.mrb[0].mxu0
    %v905 = vpop.f32.mrb[0].mxu0
    %v906 = vadd.f32 0.0, %v905
    %v907 = vpop.f32.mrb[0].mxu0
    %908 = vmatprep.mubr.bf16.mxu0 0
    %909 = vmatmul.mubr.bf16.gmra.mrb[0].mxu0 %v837
    %v910 = vpop.f32.mrb[0].mxu0
    %v911 = vadd.f32 0.0, %v910
    %v912 = vpop.f32.mrb[0].mxu0
    %v913 = vpop.f32.mrb[0].mxu0
    %v914 = vadd.f32 0.0, %v913
    %v915 = vpop.f32.mrb[0].mxu0
    %916 = vmatprep.mubr.bf16.mxu0 0
    %917 = vmatmul.mubr.bf16.gmra.mrb[0].mxu0 %v840
    %v918 = vpop.f32.mrb[0].mxu0
    %v919 = vadd.f32 0.0, %v918
    %v920 = vpop.f32.mrb[0].mxu0
    %v921 = vpop.f32.mrb[0].mxu0
    %v922 = vadd.f32 0.0, %v921
    %v923 = vpop.f32.mrb[0].mxu0
    %924 = vmatprep.mubr.bf16.mxu0 0
    %925 = vmatmul.mubr.bf16.gmra.mrb[0].mxu0 %v843
    %v926 = vpop.f32.mrb[0].mxu0
    %v927 = vadd.f32 0.0, %v926
    %v928 = vpop.f32.mrb[0].mxu0
    %v929 = vpop.f32.mrb[0].mxu0
    %v930 = vadd.f32 0.0, %v929
    %v931 = vpop.f32.mrb[0].mxu0
    %932 = vmatprep.mubr.bf16.mxu0 0
    %933 = vmatmul.mubr.bf16.gmra.mrb[0].mxu0 %v846
    %v934 = vpop.f32.mrb[0].mxu0
    %v935 = vadd.f32 0.0, %v934
    %v936 = vpop.f32.mrb[0].mxu0
    %v937 = vpop.f32.mrb[0].mxu0
    %v938 = vadd.f32 0.0, %v937
    %v939 = vpop.f32.mrb[0].mxu0
    %940 = vmatprep.mubr.bf16.mxu0 0
    %941 = vmatmul.mubr.bf16.gmra.mrb[0].mxu0 %v849
    %v942 = vpop.f32.mrb[0].mxu0
    %v943 = vadd.f32 0.0, %v942
    %v944 = vpop.f32.mrb[0].mxu0
    %v945 = vpop.f32.mrb[0].mxu0
    %v946 = vadd.f32 0.0, %v945
    %v947 = vpop.f32.mrb[0].mxu0
    %948 = vmatprep.mubr.bf16.mxu0 0
    %949 = vmatmul.mubr.bf16.gmra.mrb[0].mxu0 %v852
    %v950 = vpop.f32.mrb[0].mxu0
    %v951 = vadd.f32 0.0, %v950
    %v952 = vpop.f32.mrb[0].mxu0
    %v953 = vpop.f32.mrb[0].mxu0
    %v954 = vadd.f32 0.0, %v953
    %v955 = vpop.f32.mrb[0].mxu0
    %956 = vmatprep.mubr.bf16.mxu0 0
    %957 = vmatmul.mubr.bf16.gmra.mrb[0].mxu0 %v855
    %v958 = vpop.f32.mrb[0].mxu0
    %v959 = vadd.f32 0.0, %v958
    %v960 = vpop.f32.mrb[0].mxu0
    %v961 = vpop.f32.mrb[0].mxu0
    %v962 = vadd.f32 0.0, %v961
    %v963 = vpop.f32.mrb[0].mxu0
    %964 = vmatprep.mubr.bf16.mxu0 0
    %965 = vmatmul.mubr.bf16.gmra.mrb[0].mxu0 %v858
    %v966 = vpop.f32.mrb[0].mxu0
    %v967 = vadd.f32 0.0, %v966
    %v968 = vpop.f32.mrb[0].mxu0
    %v969 = vpop.f32.mrb[0].mxu0
    %v970 = vadd.f32 0.0, %v969
    %v971 = vpop.f32.mrb[0].mxu0
    %972 = vdwg.mxu0
    %v973 = vadd.f32 %v726, %v895
    %v974 = vadd.f32 %v727, %v898
    %v975 = vadd.f32 %v728, %v903
    %v976 = vadd.f32 %v729, %v906
    %v977 = vadd.f32 %v730, %v911
    %v978 = vadd.f32 %v731, %v914
    %v979 = vadd.f32 %v732, %v919
    %v980 = vadd.f32 %v733, %v922
    %v981 = vadd.f32 %v734, %v927
    %v982 = vadd.f32 %v735, %v930
    %v983 = vadd.f32 %v736, %v935
    %v984 = vadd.f32 %v737, %v938
    %v985 = vadd.f32 %v738, %v943
    %v986 = vadd.f32 %v739, %v946
    %v987 = vadd.f32 %v740, %v951
    %v988 = vadd.f32 %v741, %v954
    %v989 = vadd.f32 %v742, %v959
    %v990 = vadd.f32 %v743, %v962
    %v991 = vadd.f32 %v744, %v967
    %v992 = vadd.f32 %v745, %v970
    %993 = vst.msk [vmem:[#allocation2] sm:$0xff] %vm313, %v973
    %994 = vst.msk [vmem:[#allocation2 + $0x8] sm:$0xff] %vm313, %v974
    %995 = vst.msk [vmem:[#allocation2 + $0x10] sm:$0xff] %vm313, %v975
    %996 = vst.msk [vmem:[#allocation2 + $0x18] sm:$0xff] %vm313, %v976
    %997 = vst.msk [vmem:[#allocation2 + $0x20] sm:$0xff] %vm313, %v977
    %998 = vst.msk [vmem:[#allocation2 + $0x28] sm:$0xff] %vm313, %v978
    %999 = vst.msk [vmem:[#allocation2 + $0x30] sm:$0xff] %vm313, %v979
    %1000 = vst.msk [vmem:[#allocation2 + $0x38] sm:$0xff] %vm313, %v980
    %1001 = vst.msk [vmem:[#allocation2 + $0x40] sm:$0xff] %vm313, %v981
    %1002 = vst.msk [vmem:[#allocation2 + $0x48] sm:$0xff] %vm313, %v982
    %1003 = vst.msk [vmem:[#allocation2 + $0x50] sm:$0xff] %vm313, %v983
    %1004 = vst.msk [vmem:[#allocation2 + $0x58] sm:$0xff] %vm313, %v984
    %1005 = vst.msk [vmem:[#allocation2 + $0x60] sm:$0xff] %vm313, %v985
    %1006 = vst.msk [vmem:[#allocation2 + $0x68] sm:$0xff] %vm313, %v986
    %1007 = vst.msk [vmem:[#allocation2 + $0x70] sm:$0xff] %vm313, %v987
    %1008 = vst.msk [vmem:[#allocation2 + $0x78] sm:$0xff] %vm313, %v988
    %1009 = vst.msk [vmem:[#allocation2 + $0x80] sm:$0xff] %vm313, %v989
    %1010 = vst.msk [vmem:[#allocation2 + $0x88] sm:$0xff] %vm313, %v990
    %1011 = vst.msk [vmem:[#allocation2 + $0x90] sm:$0xff] %vm313, %v991
    %1012 = vst.msk [vmem:[#allocation2 + $0x98] sm:$0xff] %vm313, %v992
    %v1013 = vld [vmem:[%s0] sm:$0xe]
    %v1014 = vld [vmem:[%s0 + $0x4] sm:$0xf]
    %v1015 = vld [vmem:[%s0 + $0x8] sm:$0xf]
    %v1016 = vld [vmem:[%s0 + $0xc] sm:$0xf]
    %v1017 = vld [vmem:[%s0 + $0x10] sm:$0xf]
    %v1018 = vld [vmem:[%s0 + $0x14] sm:$0xf]
    %v1019 = vld [vmem:[%s0 + $0x18] sm:$0xf]
    %v1020 = vld [vmem:[%s0 + $0x1c] sm:$0xf]
    %v1021 = vld [vmem:[%s0 + $0x20] sm:$0xf]
    %v1022 = vld [vmem:[%s0 + $0x24] sm:$0xf]
    %v1023 = vld [vmem:[%s0 + $0x28] sm:$0xf]
    %v1024 = vld [vmem:[%s0 + $0x2c] sm:$0xf]
    %v1025 = vld [vmem:[%s0 + $0x30] sm:$0xf]
    %v1026 = vld [vmem:[%s0 + $0x34] sm:$0xf]
    %v1027 = vld [vmem:[%s0 + $0x38] sm:$0xf]
    %v1028 = vld [vmem:[%s0 + $0x3c] sm:$0xf]
    %v1029 = vld [vmem:[%s0 + $0x40] sm:$0xf]
    %v1030 = vld [vmem:[%s0 + $0x44] sm:$0xf]
    %v1031 = vld [vmem:[%s0 + $0x48] sm:$0xf]
    %v1032 = vld [vmem:[%s0 + $0x4c] sm:$0xf]
    %v1033 = vld [vmem:[%s0 + $0x50] sm:$0x3]
    %v1034 = vld [vmem:[#allocation2] sm:$0xff]
    %v1035 = vld [vmem:[#allocation2 + $0x8] sm:$0xff]
    %v1036 = vld [vmem:[#allocation2 + $0x10] sm:$0xff]
    %v1037 = vld [vmem:[#allocation2 + $0x18] sm:$0xff]
    %v1038 = vld [vmem:[#allocation2 + $0x20] sm:$0xff]
    %v1039 = vld [vmem:[#allocation2 + $0x28] sm:$0xff]
    %v1040 = vld [vmem:[#allocation2 + $0x30] sm:$0xff]
    %v1041 = vld [vmem:[#allocation2 + $0x38] sm:$0xff]
    %v1042 = vld [vmem:[#allocation2 + $0x40] sm:$0xff]
    %v1043 = vld [vmem:[#allocation2 + $0x48] sm:$0xff]
    %v1044 = vld [vmem:[#allocation2 + $0x50] sm:$0xff]
    %v1045 = vld [vmem:[#allocation2 + $0x58] sm:$0xff]
    %v1046 = vld [vmem:[#allocation2 + $0x60] sm:$0xff]
    %v1047 = vld [vmem:[#allocation2 + $0x68] sm:$0xff]
    %v1048 = vld [vmem:[#allocation2 + $0x70] sm:$0xff]
    %v1049 = vld [vmem:[#allocation2 + $0x78] sm:$0xff]
    %v1050 = vld [vmem:[#allocation2 + $0x80] sm:$0xff]
    %v1051 = vld [vmem:[#allocation2 + $0x88] sm:$0xff]
    %v1052 = vld [vmem:[#allocation2 + $0x90] sm:$0xff]
    %v1053 = vld [vmem:[#allocation2 + $0x98] sm:$0xff]
    %s1054 = scalar_lea.vmem [#allocation3], 24
    %v1055 = vld [vmem:[%s1054] sm:$0xf]
    %v1056 = vld [vmem:[%s1054 + $0x4] sm:$0xf]
    %v1078 = vunpack.c.l.b16 %v1013
    %v1079 = vunpack.c.l.b16 %v1014
    %v1080 = vunpack.c.l.b16 %v1015
    %v1081 = vunpack.c.l.b16 %v1016
    %v1082 = vunpack.c.l.b16 %v1017
    %v1083 = vunpack.c.l.b16 %v1018
    %v1084 = vunpack.c.l.b16 %v1019
    %v1085 = vunpack.c.l.b16 %v1020
    %v1086 = vunpack.c.l.b16 %v1021
    %v1087 = vunpack.c.l.b16 %v1022
    %v1088 = vunpack.c.l.b16 %v1023
    %v1089 = vunpack.c.l.b16 %v1024
    %v1090 = vunpack.c.l.b16 %v1025
    %v1091 = vunpack.c.l.b16 %v1026
    %v1092 = vunpack.c.l.b16 %v1027
    %v1093 = vunpack.c.l.b16 %v1028
    %v1094 = vunpack.c.l.b16 %v1029
    %v1095 = vunpack.c.l.b16 %v1030
    %v1096 = vunpack.c.l.b16 %v1031
    %v1097 = vunpack.c.l.b16 %v1032
    %v1098 = vunpack.c.l.b16 %v1033
    %v1099 = vpack.c.b16 %v1079, %v1078
    %v1100 = vpack.c.b16 %v1081, %v1080
    %v1101 = vpack.c.b16 %v1083, %v1082
    %v1102 = vpack.c.b16 %v1085, %v1084
    %v1103 = vpack.c.b16 %v1087, %v1086
    %v1104 = vpack.c.b16 %v1089, %v1088
    %v1105 = vpack.c.b16 %v1091, %v1090
    %v1106 = vpack.c.b16 %v1093, %v1092
    %v1107 = vpack.c.b16 %v1095, %v1094
    %v1108 = vpack.c.b16 %v1097, %v1096
    %v1109 = vpack.c.b16 %v1098, %v1098
    %vm1110 = vsmask.f32 6400
    %v1112 = vshrl.u32 %v1099, 16
    %v1114 = vrot.slane %v1112, 1
    %v1115 = vshll.u32 %v1099, 16
    %v1117 = vrot.slane %v1115, 2
    %v1118 = vor.u32 %v1114, %v1117
    %v1120 = vshrl.u32 %v1100, 16
    %v1122 = vrot.slane %v1120, 1
    %v1123 = vshll.u32 %v1100, 16
    %v1125 = vrot.slane %v1123, 2
    %v1126 = vor.u32 %v1122, %v1125
    %v1127 = vsel %vm1110, %v1118, %v1126
    %v1129 = vshrl.u32 %v1101, 16
    %v1131 = vrot.slane %v1129, 1
    %v1132 = vshll.u32 %v1101, 16
    %v1134 = vrot.slane %v1132, 2
    %v1135 = vor.u32 %v1131, %v1134
    %v1136 = vsel %vm1110, %v1126, %v1135
    %v1138 = vshrl.u32 %v1102, 16
    %v1140 = vrot.slane %v1138, 1
    %v1141 = vshll.u32 %v1102, 16
    %v1143 = vrot.slane %v1141, 2
    %v1144 = vor.u32 %v1140, %v1143
    %v1145 = vsel %vm1110, %v1135, %v1144
    %v1147 = vshrl.u32 %v1103, 16
    %v1149 = vrot.slane %v1147, 1
    %v1150 = vshll.u32 %v1103, 16
    %v1152 = vrot.slane %v1150, 2
    %v1153 = vor.u32 %v1149, %v1152
    %v1154 = vsel %vm1110, %v1144, %v1153
    %v1156 = vshrl.u32 %v1104, 16
    %v1158 = vrot.slane %v1156, 1
    %v1159 = vshll.u32 %v1104, 16
    %v1161 = vrot.slane %v1159, 2
    %v1162 = vor.u32 %v1158, %v1161
    %v1163 = vsel %vm1110, %v1153, %v1162
    %v1165 = vshrl.u32 %v1105, 16
    %v1167 = vrot.slane %v1165, 1
    %v1168 = vshll.u32 %v1105, 16
    %v1170 = vrot.slane %v1168, 2
    %v1171 = vor.u32 %v1167, %v1170
    %v1172 = vsel %vm1110, %v1162, %v1171
    %v1174 = vshrl.u32 %v1106, 16
    %v1176 = vrot.slane %v1174, 1
    %v1177 = vshll.u32 %v1106, 16
    %v1179 = vrot.slane %v1177, 2
    %v1180 = vor.u32 %v1176, %v1179
    %v1181 = vsel %vm1110, %v1171, %v1180
    %v1183 = vshrl.u32 %v1107, 16
    %v1185 = vrot.slane %v1183, 1
    %v1186 = vshll.u32 %v1107, 16
    %v1188 = vrot.slane %v1186, 2
    %v1189 = vor.u32 %v1185, %v1188
    %v1190 = vsel %vm1110, %v1180, %v1189
    %v1192 = vshrl.u32 %v1108, 16
    %v1194 = vrot.slane %v1192, 1
    %v1195 = vshll.u32 %v1108, 16
    %v1197 = vrot.slane %v1195, 2
    %v1198 = vor.u32 %v1194, %v1197
    %v1199 = vsel %vm1110, %v1189, %v1198
    %v1201 = vshrl.u32 %v1109, 16
    %v1203 = vrot.slane %v1201, 1
    %v1204 = vshll.u32 %v1109, 16
    %v1206 = vrot.slane %v1204, 2
    %v1207 = vor.u32 %v1203, %v1206
    %v1208 = vsel %vm1110, %v1198, %v1207
    %v1211 = vunpack.c.l.b16 %v1055
    %v1212 = vunpack.c.l.b16 %v1056
    %v1213 = vpack.c.b16 %v1212, %v1211
    %v1216 = vsel %vm149, %v1127, 0
    %v1219 = vsel %vm149, %v1136, 0
    %v1222 = vsel %vm149, %v1145, 0
    %v1225 = vsel %vm149, %v1154, 0
    %v1228 = vsel %vm149, %v1163, 0
    %v1231 = vsel %vm149, %v1172, 0
    %v1234 = vsel %vm149, %v1181, 0
    %v1237 = vsel %vm149, %v1190, 0
    %v1240 = vsel %vm149, %v1199, 0
    %v1243 = vsel %vm149, %v1208, 0
    %1245 = vmatprep.subr.bf16.mxu0 0
    %1246 = vmatpush1.bf16.msra.mxu0 %v1213
    %1247 = vmatprep.subr.bf16.mxu0 0
    %1248 = vmatpush1.bf16.msra.mxu0 0
    %1249 = vmatprep.subr.bf16.mxu0 0
    %1250 = vmatpush1.bf16.msra.mxu0 0
    %1251 = vmatprep.subr.bf16.mxu0 0
    %1252 = vmatpush1.bf16.msra.mxu0 0
    %1253 = vmatprep.subr.bf16.mxu0 0
    %1254 = vmatpush1.bf16.msra.mxu0 0
    %1255 = vmatprep.subr.bf16.mxu0 0
    %1256 = vmatpush1.bf16.msra.mxu0 0
    %1257 = vmatprep.subr.bf16.mxu0 0
    %1258 = vmatpush1.bf16.msra.mxu0 0
    %1259 = vmatprep.subr.bf16.mxu0 0
    %1260 = vmatpush1.bf16.msra.mxu0 0
    %1261 = vmatprep.subr.bf16.mxu0 0
    %1262 = vmatpush1.bf16.msra.mxu0 0
    %1263 = vmatprep.subr.bf16.mxu0 0
    %1264 = vmatpush1.bf16.msra.mxu0 0
    %1265 = vmatprep.subr.bf16.mxu0 0
    %1266 = vmatpush1.bf16.msra.mxu0 0
    %1267 = vmatprep.subr.bf16.mxu0 0
    %1268 = vmatpush1.bf16.msra.mxu0 0
    %1269 = vmatprep.subr.bf16.mxu0 0
    %1270 = vmatpush1.bf16.msra.mxu0 0
    %1271 = vmatprep.subr.bf16.mxu0 0
    %1272 = vmatpush1.bf16.msra.mxu0 0
    %1273 = vmatprep.subr.bf16.mxu0 0
    %1274 = vmatpush1.bf16.msra.mxu0 0
    %1275 = vmatprep.subr.bf16.mxu0 0
    %1276 = vmatpush1.bf16.msra.mxu0 0
    %1277 = vmatprep.mubr.bf16.mxu0 0
    %1278 = vmatmul.mubr.bf16.gmra.mrb[0].mxu0 %v1216
    %v1279 = vpop.f32.mrb[0].mxu0
    %v1280 = vadd.f32 0.0, %v1279
    %v1281 = vpop.f32.mrb[0].mxu0
    %v1282 = vpop.f32.mrb[0].mxu0
    %v1283 = vadd.f32 0.0, %v1282
    %v1284 = vpop.f32.mrb[0].mxu0
    %1285 = vmatprep.mubr.bf16.mxu0 0
    %1286 = vmatmul.mubr.bf16.gmra.mrb[0].mxu0 %v1219
    %v1287 = vpop.f32.mrb[0].mxu0
    %v1288 = vadd.f32 0.0, %v1287
    %v1289 = vpop.f32.mrb[0].mxu0
    %v1290 = vpop.f32.mrb[0].mxu0
    %v1291 = vadd.f32 0.0, %v1290
    %v1292 = vpop.f32.mrb[0].mxu0
    %1293 = vmatprep.mubr.bf16.mxu0 0
    %1294 = vmatmul.mubr.bf16.gmra.mrb[0].mxu0 %v1222
    %v1295 = vpop.f32.mrb[0].mxu0
    %v1296 = vadd.f32 0.0, %v1295
    %v1297 = vpop.f32.mrb[0].mxu0
    %v1298 = vpop.f32.mrb[0].mxu0
    %v1299 = vadd.f32 0.0, %v1298
    %v1300 = vpop.f32.mrb[0].mxu0
    %1301 = vmatprep.mubr.bf16.mxu0 0
    %1302 = vmatmul.mubr.bf16.gmra.mrb[0].mxu0 %v1225
    %v1303 = vpop.f32.mrb[0].mxu0
    %v1304 = vadd.f32 0.0, %v1303
    %v1305 = vpop.f32.mrb[0].mxu0
    %v1306 = vpop.f32.mrb[0].mxu0
    %v1307 = vadd.f32 0.0, %v1306
    %v1308 = vpop.f32.mrb[0].mxu0
    %1309 = vmatprep.mubr.bf16.mxu0 0
    %1310 = vmatmul.mubr.bf16.gmra.mrb[0].mxu0 %v1228
    %v1311 = vpop.f32.mrb[0].mxu0
    %v1312 = vadd.f32 0.0, %v1311
    %v1313 = vpop.f32.mrb[0].mxu0
    %v1314 = vpop.f32.mrb[0].mxu0
    %v1315 = vadd.f32 0.0, %v1314
    %v1316 = vpop.f32.mrb[0].mxu0
    %1317 = vmatprep.mubr.bf16.mxu0 0
    %1318 = vmatmul.mubr.bf16.gmra.mrb[0].mxu0 %v1231
    %v1319 = vpop.f32.mrb[0].mxu0
    %v1320 = vadd.f32 0.0, %v1319
    %v1321 = vpop.f32.mrb[0].mxu0
    %v1322 = vpop.f32.mrb[0].mxu0
    %v1323 = vadd.f32 0.0, %v1322
    %v1324 = vpop.f32.mrb[0].mxu0
    %1325 = vmatprep.mubr.bf16.mxu0 0
    %1326 = vmatmul.mubr.bf16.gmra.mrb[0].mxu0 %v1234
    %v1327 = vpop.f32.mrb[0].mxu0
    %v1328 = vadd.f32 0.0, %v1327
    %v1329 = vpop.f32.mrb[0].mxu0
    %v1330 = vpop.f32.mrb[0].mxu0
    %v1331 = vadd.f32 0.0, %v1330
    %v1332 = vpop.f32.mrb[0].mxu0
    %1333 = vmatprep.mubr.bf16.mxu0 0
    %1334 = vmatmul.mubr.bf16.gmra.mrb[0].mxu0 %v1237
    %v1335 = vpop.f32.mrb[0].mxu0
    %v1336 = vadd.f32 0.0, %v1335
    %v1337 = vpop.f32.mrb[0].mxu0
    %v1338 = vpop.f32.mrb[0].mxu0
    %v1339 = vadd.f32 0.0, %v1338
    %v1340 = vpop.f32.mrb[0].mxu0
    %1341 = vmatprep.mubr.bf16.mxu0 0
    %1342 = vmatmul.mubr.bf16.gmra.mrb[0].mxu0 %v1240
    %v1343 = vpop.f32.mrb[0].mxu0
    %v1344 = vadd.f32 0.0, %v1343
    %v1345 = vpop.f32.mrb[0].mxu0
    %v1346 = vpop.f32.mrb[0].mxu0
    %v1347 = vadd.f32 0.0, %v1346
    %v1348 = vpop.f32.mrb[0].mxu0
    %1349 = vmatprep.mubr.bf16.mxu0 0
    %1350 = vmatmul.mubr.bf16.gmra.mrb[0].mxu0 %v1243
    %v1351 = vpop.f32.mrb[0].mxu0
    %v1352 = vadd.f32 0.0, %v1351
    %v1353 = vpop.f32.mrb[0].mxu0
    %v1354 = vpop.f32.mrb[0].mxu0
    %v1355 = vadd.f32 0.0, %v1354
    %v1356 = vpop.f32.mrb[0].mxu0
    %1357 = vdwg.mxu0
    %v1358 = vadd.f32 %v1034, %v1280
    %v1359 = vadd.f32 %v1035, %v1283
    %v1360 = vadd.f32 %v1036, %v1288
    %v1361 = vadd.f32 %v1037, %v1291
    %v1362 = vadd.f32 %v1038, %v1296
    %v1363 = vadd.f32 %v1039, %v1299
    %v1364 = vadd.f32 %v1040, %v1304
    %v1365 = vadd.f32 %v1041, %v1307
    %v1366 = vadd.f32 %v1042, %v1312
    %v1367 = vadd.f32 %v1043, %v1315
    %v1368 = vadd.f32 %v1044, %v1320
    %v1369 = vadd.f32 %v1045, %v1323
    %v1370 = vadd.f32 %v1046, %v1328
    %v1371 = vadd.f32 %v1047, %v1331
    %v1372 = vadd.f32 %v1048, %v1336
    %v1373 = vadd.f32 %v1049, %v1339
    %v1374 = vadd.f32 %v1050, %v1344
    %v1375 = vadd.f32 %v1051, %v1347
    %v1376 = vadd.f32 %v1052, %v1352
    %v1377 = vadd.f32 %v1053, %v1355
    %1378 = vst.msk [vmem:[#allocation2] sm:$0xff] %vm313, %v1358
    %1379 = vst.msk [vmem:[#allocation2 + $0x8] sm:$0xff] %vm313, %v1359
    %1380 = vst.msk [vmem:[#allocation2 + $0x10] sm:$0xff] %vm313, %v1360
    %1381 = vst.msk [vmem:[#allocation2 + $0x18] sm:$0xff] %vm313, %v1361
    %1382 = vst.msk [vmem:[#allocation2 + $0x20] sm:$0xff] %vm313, %v1362
    %1383 = vst.msk [vmem:[#allocation2 + $0x28] sm:$0xff] %vm313, %v1363
    %1384 = vst.msk [vmem:[#allocation2 + $0x30] sm:$0xff] %vm313, %v1364
    %1385 = vst.msk [vmem:[#allocation2 + $0x38] sm:$0xff] %vm313, %v1365
    %1386 = vst.msk [vmem:[#allocation2 + $0x40] sm:$0xff] %vm313, %v1366
    %1387 = vst.msk [vmem:[#allocation2 + $0x48] sm:$0xff] %vm313, %v1367
    %1388 = vst.msk [vmem:[#allocation2 + $0x50] sm:$0xff] %vm313, %v1368
    %1389 = vst.msk [vmem:[#allocation2 + $0x58] sm:$0xff] %vm313, %v1369
    %1390 = vst.msk [vmem:[#allocation2 + $0x60] sm:$0xff] %vm313, %v1370
    %1391 = vst.msk [vmem:[#allocation2 + $0x68] sm:$0xff] %vm313, %v1371
    %1392 = vst.msk [vmem:[#allocation2 + $0x70] sm:$0xff] %vm313, %v1372
    %1393 = vst.msk [vmem:[#allocation2 + $0x78] sm:$0xff] %vm313, %v1373
    %1394 = vst.msk [vmem:[#allocation2 + $0x80] sm:$0xff] %vm313, %v1374
    %1395 = vst.msk [vmem:[#allocation2 + $0x88] sm:$0xff] %vm313, %v1375
    %1396 = vst.msk [vmem:[#allocation2 + $0x90] sm:$0xff] %vm313, %v1376
    %1397 = vst.msk [vmem:[#allocation2 + $0x98] sm:$0xff] %vm313, %v1377
    %v1398 = vld [vmem:[%s0 + $0x4] sm:$0x8]
    %v1399 = vld [vmem:[%s0 + $0x8] sm:$0xf]
    %v1400 = vld [vmem:[%s0 + $0xc] sm:$0xf]
    %v1401 = vld [vmem:[%s0 + $0x10] sm:$0xf]
    %v1402 = vld [vmem:[%s0 + $0x14] sm:$0xf]
    %v1403 = vld [vmem:[%s0 + $0x18] sm:$0xf]
    %v1404 = vld [vmem:[%s0 + $0x1c] sm:$0xf]
    %v1405 = vld [vmem:[%s0 + $0x20] sm:$0xf]
    %v1406 = vld [vmem:[%s0 + $0x24] sm:$0xf]
    %v1407 = vld [vmem:[%s0 + $0x28] sm:$0xf]
    %v1408 = vld [vmem:[%s0 + $0x2c] sm:$0xf]
    %v1409 = vld [vmem:[%s0 + $0x30] sm:$0xf]
    %v1410 = vld [vmem:[%s0 + $0x34] sm:$0xf]
    %v1411 = vld [vmem:[%s0 + $0x38] sm:$0xf]
    %v1412 = vld [vmem:[%s0 + $0x3c] sm:$0xf]
    %v1413 = vld [vmem:[%s0 + $0x40] sm:$0xf]
    %v1414 = vld [vmem:[%s0 + $0x44] sm:$0xf]
    %v1415 = vld [vmem:[%s0 + $0x48] sm:$0xf]
    %v1416 = vld [vmem:[%s0 + $0x4c] sm:$0xf]
    %v1417 = vld [vmem:[%s0 + $0x50] sm:$0xf]
    %v1418 = vld [vmem:[%s0 + $0x54] sm:$0x7]
    %v1419 = vld [vmem:[#allocation2] sm:$0xff]
    %v1420 = vld [vmem:[#allocation2 + $0x8] sm:$0xff]
    %v1421 = vld [vmem:[#allocation2 + $0x10] sm:$0xff]
    %v1422 = vld [vmem:[#allocation2 + $0x18] sm:$0xff]
    %v1423 = vld [vmem:[#allocation2 + $0x20] sm:$0xff]
    %v1424 = vld [vmem:[#allocation2 + $0x28] sm:$0xff]
    %v1425 = vld [vmem:[#allocation2 + $0x30] sm:$0xff]
    %v1426 = vld [vmem:[#allocation2 + $0x38] sm:$0xff]
    %v1427 = vld [vmem:[#allocation2 + $0x40] sm:$0xff]
    %v1428 = vld [vmem:[#allocation2 + $0x48] sm:$0xff]
    %v1429 = vld [vmem:[#allocation2 + $0x50] sm:$0xff]
    %v1430 = vld [vmem:[#allocation2 + $0x58] sm:$0xff]
    %v1431 = vld [vmem:[#allocation2 + $0x60] sm:$0xff]
    %v1432 = vld [vmem:[#allocation2 + $0x68] sm:$0xff]
    %v1433 = vld [vmem:[#allocation2 + $0x70] sm:$0xff]
    %v1434 = vld [vmem:[#allocation2 + $0x78] sm:$0xff]
    %v1435 = vld [vmem:[#allocation2 + $0x80] sm:$0xff]
    %v1436 = vld [vmem:[#allocation2 + $0x88] sm:$0xff]
    %v1437 = vld [vmem:[#allocation2 + $0x90] sm:$0xff]
    %v1438 = vld [vmem:[#allocation2 + $0x98] sm:$0xff]
    %s1439 = scalar_lea.vmem [#allocation3], 32
    %v1440 = vld [vmem:[%s1439] sm:$0xf]
    %v1441 = vld [vmem:[%s1439 + $0x4] sm:$0xf]
    %v1463 = vunpack.c.l.b16 %v1398
    %v1464 = vunpack.c.l.b16 %v1399
    %v1465 = vunpack.c.l.b16 %v1400
    %v1466 = vunpack.c.l.b16 %v1401
    %v1467 = vunpack.c.l.b16 %v1402
    %v1468 = vunpack.c.l.b16 %v1403
    %v1469 = vunpack.c.l.b16 %v1404
    %v1470 = vunpack.c.l.b16 %v1405
    %v1471 = vunpack.c.l.b16 %v1406
    %v1472 = vunpack.c.l.b16 %v1407
    %v1473 = vunpack.c.l.b16 %v1408
    %v1474 = vunpack.c.l.b16 %v1409
    %v1475 = vunpack.c.l.b16 %v1410
    %v1476 = vunpack.c.l.b16 %v1411
    %v1477 = vunpack.c.l.b16 %v1412
    %v1478 = vunpack.c.l.b16 %v1413
    %v1479 = vunpack.c.l.b16 %v1414
    %v1480 = vunpack.c.l.b16 %v1415
    %v1481 = vunpack.c.l.b16 %v1416
    %v1482 = vunpack.c.l.b16 %v1417
    %v1483 = vunpack.c.l.b16 %v1418
    %v1484 = vpack.c.b16 %v1464, %v1463
    %v1485 = vpack.c.b16 %v1466, %v1465
    %v1486 = vpack.c.b16 %v1468, %v1467
    %v1487 = vpack.c.b16 %v1470, %v1469
    %v1488 = vpack.c.b16 %v1472, %v1471
    %v1489 = vpack.c.b16 %v1474, %v1473
    %v1490 = vpack.c.b16 %v1476, %v1475
    %v1491 = vpack.c.b16 %v1478, %v1477
    %v1492 = vpack.c.b16 %v1480, %v1479
    %v1493 = vpack.c.b16 %v1482, %v1481
    %v1494 = vpack.c.b16 %v1483, %v1483
    %vm1495 = vcmask 1044480
    %v1496 = vrot.slane %v1484, 3
    %v1497 = vrot.slane %v1485, 3
    %v1498 = vsel %vm1495, %v1496, %v1497
    %v1499 = vrot.slane %v1486, 3
    %v1500 = vsel %vm1495, %v1497, %v1499
    %v1501 = vrot.slane %v1487, 3
    %v1502 = vsel %vm1495, %v1499, %v1501
    %v1503 = vrot.slane %v1488, 3
    %v1504 = vsel %vm1495, %v1501, %v1503
    %v1505 = vrot.slane %v1489, 3
    %v1506 = vsel %vm1495, %v1503, %v1505
    %v1507 = vrot.slane %v1490, 3
    %v1508 = vsel %vm1495, %v1505, %v1507
    %v1509 = vrot.slane %v1491, 3
    %v1510 = vsel %vm1495, %v1507, %v1509
    %v1511 = vrot.slane %v1492, 3
    %v1512 = vsel %vm1495, %v1509, %v1511
    %v1513 = vrot.slane %v1493, 3
    %v1514 = vsel %vm1495, %v1511, %v1513
    %v1515 = vrot.slane %v1494, 3
    %v1516 = vsel %vm1495, %v1513, %v1515
    %v1519 = vunpack.c.l.b16 %v1440
    %v1520 = vunpack.c.l.b16 %v1441
    %v1521 = vpack.c.b16 %v1520, %v1519
    %v1524 = vsel %vm149, %v1498, 0
    %v1527 = vsel %vm149, %v1500, 0
    %v1530 = vsel %vm149, %v1502, 0
    %v1533 = vsel %vm149, %v1504, 0
    %v1536 = vsel %vm149, %v1506, 0
    %v1539 = vsel %vm149, %v1508, 0
    %v1542 = vsel %vm149, %v1510, 0
    %v1545 = vsel %vm149, %v1512, 0
    %v1548 = vsel %vm149, %v1514, 0
    %v1551 = vsel %vm149, %v1516, 0
    %1553 = vmatprep.subr.bf16.mxu0 0
    %1554 = vmatpush1.bf16.msra.mxu0 %v1521
    %1555 = vmatprep.subr.bf16.mxu0 0
    %1556 = vmatpush1.bf16.msra.mxu0 0
    %1557 = vmatprep.subr.bf16.mxu0 0
    %1558 = vmatpush1.bf16.msra.mxu0 0
    %1559 = vmatprep.subr.bf16.mxu0 0
    %1560 = vmatpush1.bf16.msra.mxu0 0
    %1561 = vmatprep.subr.bf16.mxu0 0
    %1562 = vmatpush1.bf16.msra.mxu0 0
    %1563 = vmatprep.subr.bf16.mxu0 0
    %1564 = vmatpush1.bf16.msra.mxu0 0
    %1565 = vmatprep.subr.bf16.mxu0 0
    %1566 = vmatpush1.bf16.msra.mxu0 0
    %1567 = vmatprep.subr.bf16.mxu0 0
    %1568 = vmatpush1.bf16.msra.mxu0 0
    %1569 = vmatprep.subr.bf16.mxu0 0
    %1570 = vmatpush1.bf16.msra.mxu0 0
    %1571 = vmatprep.subr.bf16.mxu0 0
    %1572 = vmatpush1.bf16.msra.mxu0 0
    %1573 = vmatprep.subr.bf16.mxu0 0
    %1574 = vmatpush1.bf16.msra.mxu0 0
    %1575 = vmatprep.subr.bf16.mxu0 0
    %1576 = vmatpush1.bf16.msra.mxu0 0
    %1577 = vmatprep.subr.bf16.mxu0 0
    %1578 = vmatpush1.bf16.msra.mxu0 0
    %1579 = vmatprep.subr.bf16.mxu0 0
    %1580 = vmatpush1.bf16.msra.mxu0 0
    %1581 = vmatprep.subr.bf16.mxu0 0
    %1582 = vmatpush1.bf16.msra.mxu0 0
    %1583 = vmatprep.subr.bf16.mxu0 0
    %1584 = vmatpush1.bf16.msra.mxu0 0
    %1585 = vmatprep.mubr.bf16.mxu0 0
    %1586 = vmatmul.mubr.bf16.gmra.mrb[0].mxu0 %v1524
    %v1587 = vpop.f32.mrb[0].mxu0
    %v1588 = vadd.f32 0.0, %v1587
    %v1589 = vpop.f32.mrb[0].mxu0
    %v1590 = vpop.f32.mrb[0].mxu0
    %v1591 = vadd.f32 0.0, %v1590
    %v1592 = vpop.f32.mrb[0].mxu0
    %1593 = vmatprep.mubr.bf16.mxu0 0
    %1594 = vmatmul.mubr.bf16.gmra.mrb[0].mxu0 %v1527
    %v1595 = vpop.f32.mrb[0].mxu0
    %v1596 = vadd.f32 0.0, %v1595
    %v1597 = vpop.f32.mrb[0].mxu0
    %v1598 = vpop.f32.mrb[0].mxu0
    %v1599 = vadd.f32 0.0, %v1598
    %v1600 = vpop.f32.mrb[0].mxu0
    %1601 = vmatprep.mubr.bf16.mxu0 0
    %1602 = vmatmul.mubr.bf16.gmra.mrb[0].mxu0 %v1530
    %v1603 = vpop.f32.mrb[0].mxu0
    %v1604 = vadd.f32 0.0, %v1603
    %v1605 = vpop.f32.mrb[0].mxu0
    %v1606 = vpop.f32.mrb[0].mxu0
    %v1607 = vadd.f32 0.0, %v1606
    %v1608 = vpop.f32.mrb[0].mxu0
    %1609 = vmatprep.mubr.bf16.mxu0 0
    %1610 = vmatmul.mubr.bf16.gmra.mrb[0].mxu0 %v1533
    %v1611 = vpop.f32.mrb[0].mxu0
    %v1612 = vadd.f32 0.0, %v1611
    %v1613 = vpop.f32.mrb[0].mxu0
    %v1614 = vpop.f32.mrb[0].mxu0
    %v1615 = vadd.f32 0.0, %v1614
    %v1616 = vpop.f32.mrb[0].mxu0
    %1617 = vmatprep.mubr.bf16.mxu0 0
    %1618 = vmatmul.mubr.bf16.gmra.mrb[0].mxu0 %v1536
    %v1619 = vpop.f32.mrb[0].mxu0
    %v1620 = vadd.f32 0.0, %v1619
    %v1621 = vpop.f32.mrb[0].mxu0
    %v1622 = vpop.f32.mrb[0].mxu0
    %v1623 = vadd.f32 0.0, %v1622
    %v1624 = vpop.f32.mrb[0].mxu0
    %1625 = vmatprep.mubr.bf16.mxu0 0
    %1626 = vmatmul.mubr.bf16.gmra.mrb[0].mxu0 %v1539
    %v1627 = vpop.f32.mrb[0].mxu0
    %v1628 = vadd.f32 0.0, %v1627
    %v1629 = vpop.f32.mrb[0].mxu0
    %v1630 = vpop.f32.mrb[0].mxu0
    %v1631 = vadd.f32 0.0, %v1630
    %v1632 = vpop.f32.mrb[0].mxu0
    %1633 = vmatprep.mubr.bf16.mxu0 0
    %1634 = vmatmul.mubr.bf16.gmra.mrb[0].mxu0 %v1542
    %v1635 = vpop.f32.mrb[0].mxu0
    %v1636 = vadd.f32 0.0, %v1635
    %v1637 = vpop.f32.mrb[0].mxu0
    %v1638 = vpop.f32.mrb[0].mxu0
    %v1639 = vadd.f32 0.0, %v1638
    %v1640 = vpop.f32.mrb[0].mxu0
    %1641 = vmatprep.mubr.bf16.mxu0 0
    %1642 = vmatmul.mubr.bf16.gmra.mrb[0].mxu0 %v1545
    %v1643 = vpop.f32.mrb[0].mxu0
    %v1644 = vadd.f32 0.0, %v1643
    %v1645 = vpop.f32.mrb[0].mxu0
    %v1646 = vpop.f32.mrb[0].mxu0
    %v1647 = vadd.f32 0.0, %v1646
    %v1648 = vpop.f32.mrb[0].mxu0
    %1649 = vmatprep.mubr.bf16.mxu0 0
    %1650 = vmatmul.mubr.bf16.gmra.mrb[0].mxu0 %v1548
    %v1651 = vpop.f32.mrb[0].mxu0
    %v1652 = vadd.f32 0.0, %v1651
    %v1653 = vpop.f32.mrb[0].mxu0
    %v1654 = vpop.f32.mrb[0].mxu0
    %v1655 = vadd.f32 0.0, %v1654
    %v1656 = vpop.f32.mrb[0].mxu0
    %1657 = vmatprep.mubr.bf16.mxu0 0
    %1658 = vmatmul.mubr.bf16.gmra.mrb[0].mxu0 %v1551
    %v1659 = vpop.f32.mrb[0].mxu0
    %v1660 = vadd.f32 0.0, %v1659
    %v1661 = vpop.f32.mrb[0].mxu0
    %v1662 = vpop.f32.mrb[0].mxu0
    %v1663 = vadd.f32 0.0, %v1662
    %v1664 = vpop.f32.mrb[0].mxu0
    %1665 = vdwg.mxu0
    %v1666 = vadd.f32 %v1419, %v1588
    %v1667 = vadd.f32 %v1420, %v1591
    %v1668 = vadd.f32 %v1421, %v1596
    %v1669 = vadd.f32 %v1422, %v1599
    %v1670 = vadd.f32 %v1423, %v1604
    %v1671 = vadd.f32 %v1424, %v1607
    %v1672 = vadd.f32 %v1425, %v1612
    %v1673 = vadd.f32 %v1426, %v1615
    %v1674 = vadd.f32 %v1427, %v1620
    %v1675 = vadd.f32 %v1428, %v1623
    %v1676 = vadd.f32 %v1429, %v1628
    %v1677 = vadd.f32 %v1430, %v1631
    %v1678 = vadd.f32 %v1431, %v1636
    %v1679 = vadd.f32 %v1432, %v1639
    %v1680 = vadd.f32 %v1433, %v1644
    %v1681 = vadd.f32 %v1434, %v1647
    %v1682 = vadd.f32 %v1435, %v1652
    %v1683 = vadd.f32 %v1436, %v1655
    %v1684 = vadd.f32 %v1437, %v1660
    %v1685 = vadd.f32 %v1438, %v1663
    %1686 = vst.msk [vmem:[#allocation2] sm:$0xff] %vm313, %v1666
    %1687 = vst.msk [vmem:[#allocation2 + $0x8] sm:$0xff] %vm313, %v1667
    %1688 = vst.msk [vmem:[#allocation2 + $0x10] sm:$0xff] %vm313, %v1668
    %1689 = vst.msk [vmem:[#allocation2 + $0x18] sm:$0xff] %vm313, %v1669
    %1690 = vst.msk [vmem:[#allocation2 + $0x20] sm:$0xff] %vm313, %v1670
    %1691 = vst.msk [vmem:[#allocation2 + $0x28] sm:$0xff] %vm313, %v1671
    %1692 = vst.msk [vmem:[#allocation2 + $0x30] sm:$0xff] %vm313, %v1672
    %1693 = vst.msk [vmem:[#allocation2 + $0x38] sm:$0xff] %vm313, %v1673
    %1694 = vst.msk [vmem:[#allocation2 + $0x40] sm:$0xff] %vm313, %v1674
    %1695 = vst.msk [vmem:[#allocation2 + $0x48] sm:$0xff] %vm313, %v1675
    %1696 = vst.msk [vmem:[#allocation2 + $0x50] sm:$0xff] %vm313, %v1676
    %1697 = vst.msk [vmem:[#allocation2 + $0x58] sm:$0xff] %vm313, %v1677
    %1698 = vst.msk [vmem:[#allocation2 + $0x60] sm:$0xff] %vm313, %v1678
    %1699 = vst.msk [vmem:[#allocation2 + $0x68] sm:$0xff] %vm313, %v1679
    %1700 = vst.msk [vmem:[#allocation2 + $0x70] sm:$0xff] %vm313, %v1680
    %1701 = vst.msk [vmem:[#allocation2 + $0x78] sm:$0xff] %vm313, %v1681
    %1702 = vst.msk [vmem:[#allocation2 + $0x80] sm:$0xff] %vm313, %v1682
    %1703 = vst.msk [vmem:[#allocation2 + $0x88] sm:$0xff] %vm313, %v1683
    %1704 = vst.msk [vmem:[#allocation2 + $0x90] sm:$0xff] %vm313, %v1684
    %1705 = vst.msk [vmem:[#allocation2 + $0x98] sm:$0xff] %vm313, %v1685
    %v1706 = vld [vmem:[%s0 + $0x4] sm:$0x8]
    %v1707 = vld [vmem:[%s0 + $0x8] sm:$0xf]
    %v1708 = vld [vmem:[%s0 + $0xc] sm:$0xf]
    %v1709 = vld [vmem:[%s0 + $0x10] sm:$0xf]
    %v1710 = vld [vmem:[%s0 + $0x14] sm:$0xf]
    %v1711 = vld [vmem:[%s0 + $0x18] sm:$0xf]
    %v1712 = vld [vmem:[%s0 + $0x1c] sm:$0xf]
    %v1713 = vld [vmem:[%s0 + $0x20] sm:$0xf]
    %v1714 = vld [vmem:[%s0 + $0x24] sm:$0xf]
    %v1715 = vld [vmem:[%s0 + $0x28] sm:$0xf]
    %v1716 = vld [vmem:[%s0 + $0x2c] sm:$0xf]
    %v1717 = vld [vmem:[%s0 + $0x30] sm:$0xf]
    %v1718 = vld [vmem:[%s0 + $0x34] sm:$0xf]
    %v1719 = vld [vmem:[%s0 + $0x38] sm:$0xf]
    %v1720 = vld [vmem:[%s0 + $0x3c] sm:$0xf]
    %v1721 = vld [vmem:[%s0 + $0x40] sm:$0xf]
    %v1722 = vld [vmem:[%s0 + $0x44] sm:$0xf]
    %v1723 = vld [vmem:[%s0 + $0x48] sm:$0xf]
    %v1724 = vld [vmem:[%s0 + $0x4c] sm:$0xf]
    %v1725 = vld [vmem:[%s0 + $0x50] sm:$0xf]
    %v1726 = vld [vmem:[%s0 + $0x54] sm:$0xf]
    %v1727 = vld [vmem:[#allocation2] sm:$0xff]
    %v1728 = vld [vmem:[#allocation2 + $0x8] sm:$0xff]
    %v1729 = vld [vmem:[#allocation2 + $0x10] sm:$0xff]
    %v1730 = vld [vmem:[#allocation2 + $0x18] sm:$0xff]
    %v1731 = vld [vmem:[#allocation2 + $0x20] sm:$0xff]
    %v1732 = vld [vmem:[#allocation2 + $0x28] sm:$0xff]
    %v1733 = vld [vmem:[#allocation2 + $0x30] sm:$0xff]
    %v1734 = vld [vmem:[#allocation2 + $0x38] sm:$0xff]
    %v1735 = vld [vmem:[#allocation2 + $0x40] sm:$0xff]
    %v1736 = vld [vmem:[#allocation2 + $0x48] sm:$0xff]
    %v1737 = vld [vmem:[#allocation2 + $0x50] sm:$0xff]
    %v1738 = vld [vmem:[#allocation2 + $0x58] sm:$0xff]
    %v1739 = vld [vmem:[#allocation2 + $0x60] sm:$0xff]
    %v1740 = vld [vmem:[#allocation2 + $0x68] sm:$0xff]
    %v1741 = vld [vmem:[#allocation2 + $0x70] sm:$0xff]
    %v1742 = vld [vmem:[#allocation2 + $0x78] sm:$0xff]
    %v1743 = vld [vmem:[#allocation2 + $0x80] sm:$0xff]
    %v1744 = vld [vmem:[#allocation2 + $0x88] sm:$0xff]
    %v1745 = vld [vmem:[#allocation2 + $0x90] sm:$0xff]
    %v1746 = vld [vmem:[#allocation2 + $0x98] sm:$0xff]
    %s1747 = scalar_lea.vmem [#allocation3], 40
    %v1748 = vld [vmem:[%s1747] sm:$0xf]
    %v1749 = vld [vmem:[%s1747 + $0x4] sm:$0xf]
    %v1771 = vunpack.c.l.b16 %v1706
    %v1772 = vunpack.c.l.b16 %v1707
    %v1773 = vunpack.c.l.b16 %v1708
    %v1774 = vunpack.c.l.b16 %v1709
    %v1775 = vunpack.c.l.b16 %v1710
    %v1776 = vunpack.c.l.b16 %v1711
    %v1777 = vunpack.c.l.b16 %v1712
    %v1778 = vunpack.c.l.b16 %v1713
    %v1779 = vunpack.c.l.b16 %v1714
    %v1780 = vunpack.c.l.b16 %v1715
    %v1781 = vunpack.c.l.b16 %v1716
    %v1782 = vunpack.c.l.b16 %v1717
    %v1783 = vunpack.c.l.b16 %v1718
    %v1784 = vunpack.c.l.b16 %v1719
    %v1785 = vunpack.c.l.b16 %v1720
    %v1786 = vunpack.c.l.b16 %v1721
    %v1787 = vunpack.c.l.b16 %v1722
    %v1788 = vunpack.c.l.b16 %v1723
    %v1789 = vunpack.c.l.b16 %v1724
    %v1790 = vunpack.c.l.b16 %v1725
    %v1791 = vunpack.c.l.b16 %v1726
    %v1792 = vpack.c.b16 %v1772, %v1771
    %v1793 = vpack.c.b16 %v1774, %v1773
    %v1794 = vpack.c.b16 %v1776, %v1775
    %v1795 = vpack.c.b16 %v1778, %v1777
    %v1796 = vpack.c.b16 %v1780, %v1779
    %v1797 = vpack.c.b16 %v1782, %v1781
    %v1798 = vpack.c.b16 %v1784, %v1783
    %v1799 = vpack.c.b16 %v1786, %v1785
    %v1800 = vpack.c.b16 %v1788, %v1787
    %v1801 = vpack.c.b16 %v1790, %v1789
    %v1802 = vpack.c.b16 %v1791, %v1791
    %vm1803 = vsmask.f32 4352
    %v1805 = vshrl.u32 %v1792, 16
    %v1807 = vrot.slane %v1805, 3
    %v1808 = vshll.u32 %v1792, 16
    %v1810 = vrot.slane %v1808, 4
    %v1811 = vor.u32 %v1807, %v1810
    %v1813 = vshrl.u32 %v1793, 16
    %v1815 = vrot.slane %v1813, 3
    %v1816 = vshll.u32 %v1793, 16
    %v1818 = vrot.slane %v1816, 4
    %v1819 = vor.u32 %v1815, %v1818
    %v1820 = vsel %vm1803, %v1811, %v1819
    %v1822 = vshrl.u32 %v1794, 16
    %v1824 = vrot.slane %v1822, 3
    %v1825 = vshll.u32 %v1794, 16
    %v1827 = vrot.slane %v1825, 4
    %v1828 = vor.u32 %v1824, %v1827
    %v1829 = vsel %vm1803, %v1819, %v1828
    %v1831 = vshrl.u32 %v1795, 16
    %v1833 = vrot.slane %v1831, 3
    %v1834 = vshll.u32 %v1795, 16
    %v1836 = vrot.slane %v1834, 4
    %v1837 = vor.u32 %v1833, %v1836
    %v1838 = vsel %vm1803, %v1828, %v1837
    %v1840 = vshrl.u32 %v1796, 16
    %v1842 = vrot.slane %v1840, 3
    %v1843 = vshll.u32 %v1796, 16
    %v1845 = vrot.slane %v1843, 4
    %v1846 = vor.u32 %v1842, %v1845
    %v1847 = vsel %vm1803, %v1837, %v1846
    %v1849 = vshrl.u32 %v1797, 16
    %v1851 = vrot.slane %v1849, 3
    %v1852 = vshll.u32 %v1797, 16
    %v1854 = vrot.slane %v1852, 4
    %v1855 = vor.u32 %v1851, %v1854
    %v1856 = vsel %vm1803, %v1846, %v1855
    %v1858 = vshrl.u32 %v1798, 16
    %v1860 = vrot.slane %v1858, 3
    %v1861 = vshll.u32 %v1798, 16
    %v1863 = vrot.slane %v1861, 4
    %v1864 = vor.u32 %v1860, %v1863
    %v1865 = vsel %vm1803, %v1855, %v1864
    %v1867 = vshrl.u32 %v1799, 16
    %v1869 = vrot.slane %v1867, 3
    %v1870 = vshll.u32 %v1799, 16
    %v1872 = vrot.slane %v1870, 4
    %v1873 = vor.u32 %v1869, %v1872
    %v1874 = vsel %vm1803, %v1864, %v1873
    %v1876 = vshrl.u32 %v1800, 16
    %v1878 = vrot.slane %v1876, 3
    %v1879 = vshll.u32 %v1800, 16
    %v1881 = vrot.slane %v1879, 4
    %v1882 = vor.u32 %v1878, %v1881
    %v1883 = vsel %vm1803, %v1873, %v1882
    %v1885 = vshrl.u32 %v1801, 16
    %v1887 = vrot.slane %v1885, 3
    %v1888 = vshll.u32 %v1801, 16
    %v1890 = vrot.slane %v1888, 4
    %v1891 = vor.u32 %v1887, %v1890
    %v1892 = vsel %vm1803, %v1882, %v1891
    %v1894 = vshrl.u32 %v1802, 16
    %v1896 = vrot.slane %v1894, 3
    %v1897 = vshll.u32 %v1802, 16
    %v1899 = vrot.slane %v1897, 4
    %v1900 = vor.u32 %v1896, %v1899
    %v1901 = vsel %vm1803, %v1891, %v1900
    %v1904 = vunpack.c.l.b16 %v1748
    %v1905 = vunpack.c.l.b16 %v1749
    %v1906 = vpack.c.b16 %v1905, %v1904
    %v1909 = vsel %vm149, %v1820, 0
    %v1912 = vsel %vm149, %v1829, 0
    %v1915 = vsel %vm149, %v1838, 0
    %v1918 = vsel %vm149, %v1847, 0
    %v1921 = vsel %vm149, %v1856, 0
    %v1924 = vsel %vm149, %v1865, 0
    %v1927 = vsel %vm149, %v1874, 0
    %v1930 = vsel %vm149, %v1883, 0
    %v1933 = vsel %vm149, %v1892, 0
    %v1936 = vsel %vm149, %v1901, 0
    %1938 = vmatprep.subr.bf16.mxu0 0
    %1939 = vmatpush1.bf16.msra.mxu0 %v1906
    %1940 = vmatprep.subr.bf16.mxu0 0
    %1941 = vmatpush1.bf16.msra.mxu0 0
    %1942 = vmatprep.subr.bf16.mxu0 0
    %1943 = vmatpush1.bf16.msra.mxu0 0
    %1944 = vmatprep.subr.bf16.mxu0 0
    %1945 = vmatpush1.bf16.msra.mxu0 0
    %1946 = vmatprep.subr.bf16.mxu0 0
    %1947 = vmatpush1.bf16.msra.mxu0 0
    %1948 = vmatprep.subr.bf16.mxu0 0
    %1949 = vmatpush1.bf16.msra.mxu0 0
    %1950 = vmatprep.subr.bf16.mxu0 0
    %1951 = vmatpush1.bf16.msra.mxu0 0
    %1952 = vmatprep.subr.bf16.mxu0 0
    %1953 = vmatpush1.bf16.msra.mxu0 0
    %1954 = vmatprep.subr.bf16.mxu0 0
    %1955 = vmatpush1.bf16.msra.mxu0 0
    %1956 = vmatprep.subr.bf16.mxu0 0
    %1957 = vmatpush1.bf16.msra.mxu0 0
    %1958 = vmatprep.subr.bf16.mxu0 0
    %1959 = vmatpush1.bf16.msra.mxu0 0
    %1960 = vmatprep.subr.bf16.mxu0 0
    %1961 = vmatpush1.bf16.msra.mxu0 0
    %1962 = vmatprep.subr.bf16.mxu0 0
    %1963 = vmatpush1.bf16.msra.mxu0 0
    %1964 = vmatprep.subr.bf16.mxu0 0
    %1965 = vmatpush1.bf16.msra.mxu0 0
    %1966 = vmatprep.subr.bf16.mxu0 0
    %1967 = vmatpush1.bf16.msra.mxu0 0
    %1968 = vmatprep.subr.bf16.mxu0 0
    %1969 = vmatpush1.bf16.msra.mxu0 0
    %1970 = vmatprep.mubr.bf16.mxu0 0
    %1971 = vmatmul.mubr.bf16.gmra.mrb[0].mxu0 %v1909
    %v1972 = vpop.f32.mrb[0].mxu0
    %v1973 = vadd.f32 0.0, %v1972
    %v1974 = vpop.f32.mrb[0].mxu0
    %v1975 = vpop.f32.mrb[0].mxu0
    %v1976 = vadd.f32 0.0, %v1975
    %v1977 = vpop.f32.mrb[0].mxu0
    %1978 = vmatprep.mubr.bf16.mxu0 0
    %1979 = vmatmul.mubr.bf16.gmra.mrb[0].mxu0 %v1912
    %v1980 = vpop.f32.mrb[0].mxu0
    %v1981 = vadd.f32 0.0, %v1980
    %v1982 = vpop.f32.mrb[0].mxu0
    %v1983 = vpop.f32.mrb[0].mxu0
    %v1984 = vadd.f32 0.0, %v1983
    %v1985 = vpop.f32.mrb[0].mxu0
    %1986 = vmatprep.mubr.bf16.mxu0 0
    %1987 = vmatmul.mubr.bf16.gmra.mrb[0].mxu0 %v1915
    %v1988 = vpop.f32.mrb[0].mxu0
    %v1989 = vadd.f32 0.0, %v1988
    %v1990 = vpop.f32.mrb[0].mxu0
    %v1991 = vpop.f32.mrb[0].mxu0
    %v1992 = vadd.f32 0.0, %v1991
    %v1993 = vpop.f32.mrb[0].mxu0
    %1994 = vmatprep.mubr.bf16.mxu0 0
    %1995 = vmatmul.mubr.bf16.gmra.mrb[0].mxu0 %v1918
    %v1996 = vpop.f32.mrb[0].mxu0
    %v1997 = vadd.f32 0.0, %v1996
    %v1998 = vpop.f32.mrb[0].mxu0
    %v1999 = vpop.f32.mrb[0].mxu0
    %v2000 = vadd.f32 0.0, %v1999
    %v2001 = vpop.f32.mrb[0].mxu0
    %2002 = vmatprep.mubr.bf16.mxu0 0
    %2003 = vmatmul.mubr.bf16.gmra.mrb[0].mxu0 %v1921
    %v2004 = vpop.f32.mrb[0].mxu0
    %v2005 = vadd.f32 0.0, %v2004
    %v2006 = vpop.f32.mrb[0].mxu0
    %v2007 = vpop.f32.mrb[0].mxu0
    %v2008 = vadd.f32 0.0, %v2007
    %v2009 = vpop.f32.mrb[0].mxu0
    %2010 = vmatprep.mubr.bf16.mxu0 0
    %2011 = vmatmul.mubr.bf16.gmra.mrb[0].mxu0 %v1924
    %v2012 = vpop.f32.mrb[0].mxu0
    %v2013 = vadd.f32 0.0, %v2012
    %v2014 = vpop.f32.mrb[0].mxu0
    %v2015 = vpop.f32.mrb[0].mxu0
    %v2016 = vadd.f32 0.0, %v2015
    %v2017 = vpop.f32.mrb[0].mxu0
    %2018 = vmatprep.mubr.bf16.mxu0 0
    %2019 = vmatmul.mubr.bf16.gmra.mrb[0].mxu0 %v1927
    %v2020 = vpop.f32.mrb[0].mxu0
    %v2021 = vadd.f32 0.0, %v2020
    %v2022 = vpop.f32.mrb[0].mxu0
    %v2023 = vpop.f32.mrb[0].mxu0
    %v2024 = vadd.f32 0.0, %v2023
    %v2025 = vpop.f32.mrb[0].mxu0
    %2026 = vmatprep.mubr.bf16.mxu0 0
    %2027 = vmatmul.mubr.bf16.gmra.mrb[0].mxu0 %v1930
    %v2028 = vpop.f32.mrb[0].mxu0
    %v2029 = vadd.f32 0.0, %v2028
    %v2030 = vpop.f32.mrb[0].mxu0
    %v2031 = vpop.f32.mrb[0].mxu0
    %v2032 = vadd.f32 0.0, %v2031
    %v2033 = vpop.f32.mrb[0].mxu0
    %2034 = vmatprep.mubr.bf16.mxu0 0
    %2035 = vmatmul.mubr.bf16.gmra.mrb[0].mxu0 %v1933
    %v2036 = vpop.f32.mrb[0].mxu0
    %v2037 = vadd.f32 0.0, %v2036
    %v2038 = vpop.f32.mrb[0].mxu0
    %v2039 = vpop.f32.mrb[0].mxu0
    %v2040 = vadd.f32 0.0, %v2039
    %v2041 = vpop.f32.mrb[0].mxu0
    %2042 = vmatprep.mubr.bf16.mxu0 0
    %2043 = vmatmul.mubr.bf16.gmra.mrb[0].mxu0 %v1936
    %v2044 = vpop.f32.mrb[0].mxu0
    %v2045 = vadd.f32 0.0, %v2044
    %v2046 = vpop.f32.mrb[0].mxu0
    %v2047 = vpop.f32.mrb[0].mxu0
    %v2048 = vadd.f32 0.0, %v2047
    %v2049 = vpop.f32.mrb[0].mxu0
    %2050 = vdwg.mxu0
    %v2051 = vadd.f32 %v1727, %v1973
    %v2052 = vadd.f32 %v1728, %v1976
    %v2053 = vadd.f32 %v1729, %v1981
    %v2054 = vadd.f32 %v1730, %v1984
    %v2055 = vadd.f32 %v1731, %v1989
    %v2056 = vadd.f32 %v1732, %v1992
    %v2057 = vadd.f32 %v1733, %v1997
    %v2058 = vadd.f32 %v1734, %v2000
    %v2059 = vadd.f32 %v1735, %v2005
    %v2060 = vadd.f32 %v1736, %v2008
    %v2061 = vadd.f32 %v1737, %v2013
    %v2062 = vadd.f32 %v1738, %v2016
    %v2063 = vadd.f32 %v1739, %v2021
    %v2064 = vadd.f32 %v1740, %v2024
    %v2065 = vadd.f32 %v1741, %v2029
    %v2066 = vadd.f32 %v1742, %v2032
    %v2067 = vadd.f32 %v1743, %v2037
    %v2068 = vadd.f32 %v1744, %v2040
    %v2069 = vadd.f32 %v1745, %v2045
    %v2070 = vadd.f32 %v1746, %v2048
    %2071 = vst.msk [vmem:[#allocation2] sm:$0xff] %vm313, %v2051
    %2072 = vst.msk [vmem:[#allocation2 + $0x8] sm:$0xff] %vm313, %v2052
    %2073 = vst.msk [vmem:[#allocation2 + $0x10] sm:$0xff] %vm313, %v2053
    %2074 = vst.msk [vmem:[#allocation2 + $0x18] sm:$0xff] %vm313, %v2054
    %2075 = vst.msk [vmem:[#allocation2 + $0x20] sm:$0xff] %vm313, %v2055
    %2076 = vst.msk [vmem:[#allocation2 + $0x28] sm:$0xff] %vm313, %v2056
    %2077 = vst.msk [vmem:[#allocation2 + $0x30] sm:$0xff] %vm313, %v2057
    %2078 = vst.msk [vmem:[#allocation2 + $0x38] sm:$0xff] %vm313, %v2058
    %2079 = vst.msk [vmem:[#allocation2 + $0x40] sm:$0xff] %vm313, %v2059
    %2080 = vst.msk [vmem:[#allocation2 + $0x48] sm:$0xff] %vm313, %v2060
    %2081 = vst.msk [vmem:[#allocation2 + $0x50] sm:$0xff] %vm313, %v2061
    %2082 = vst.msk [vmem:[#allocation2 + $0x58] sm:$0xff] %vm313, %v2062
    %2083 = vst.msk [vmem:[#allocation2 + $0x60] sm:$0xff] %vm313, %v2063
    %2084 = vst.msk [vmem:[#allocation2 + $0x68] sm:$0xff] %vm313, %v2064
    %2085 = vst.msk [vmem:[#allocation2 + $0x70] sm:$0xff] %vm313, %v2065
    %2086 = vst.msk [vmem:[#allocation2 + $0x78] sm:$0xff] %vm313, %v2066
    %2087 = vst.msk [vmem:[#allocation2 + $0x80] sm:$0xff] %vm313, %v2067
    %2088 = vst.msk [vmem:[#allocation2 + $0x88] sm:$0xff] %vm313, %v2068
    %2089 = vst.msk [vmem:[#allocation2 + $0x90] sm:$0xff] %vm313, %v2069
    %2090 = vst.msk [vmem:[#allocation2 + $0x98] sm:$0xff] %vm313, %v2070
    %v2091 = vld [vmem:[%s0 + $0x8] sm:$0xf]
    %v2092 = vld [vmem:[%s0 + $0xc] sm:$0xf]
    %v2093 = vld [vmem:[%s0 + $0x10] sm:$0xf]
    %v2094 = vld [vmem:[%s0 + $0x14] sm:$0xf]
    %v2095 = vld [vmem:[%s0 + $0x18] sm:$0xf]
    %v2096 = vld [vmem:[%s0 + $0x1c] sm:$0xf]
    %v2097 = vld [vmem:[%s0 + $0x20] sm:$0xf]
    %v2098 = vld [vmem:[%s0 + $0x24] sm:$0xf]
    %v2099 = vld [vmem:[%s0 + $0x28] sm:$0xf]
    %v2100 = vld [vmem:[%s0 + $0x2c] sm:$0xf]
    %v2101 = vld [vmem:[%s0 + $0x30] sm:$0xf]
    %v2102 = vld [vmem:[%s0 + $0x34] sm:$0xf]
    %v2103 = vld [vmem:[%s0 + $0x38] sm:$0xf]
    %v2104 = vld [vmem:[%s0 + $0x3c] sm:$0xf]
    %v2105 = vld [vmem:[%s0 + $0x40] sm:$0xf]
    %v2106 = vld [vmem:[%s0 + $0x44] sm:$0xf]
    %v2107 = vld [vmem:[%s0 + $0x48] sm:$0xf]
    %v2108 = vld [vmem:[%s0 + $0x4c] sm:$0xf]
    %v2109 = vld [vmem:[%s0 + $0x50] sm:$0xf]
    %v2110 = vld [vmem:[%s0 + $0x54] sm:$0xf]
    %v2111 = vld [vmem:[#allocation2] sm:$0xff]
    %v2112 = vld [vmem:[#allocation2 + $0x8] sm:$0xff]
    %v2113 = vld [vmem:[#allocation2 + $0x10] sm:$0xff]
    %v2114 = vld [vmem:[#allocation2 + $0x18] sm:$0xff]
    %v2115 = vld [vmem:[#allocation2 + $0x20] sm:$0xff]
    %v2116 = vld [vmem:[#allocation2 + $0x28] sm:$0xff]
    %v2117 = vld [vmem:[#allocation2 + $0x30] sm:$0xff]
    %v2118 = vld [vmem:[#allocation2 + $0x38] sm:$0xff]
    %v2119 = vld [vmem:[#allocation2 + $0x40] sm:$0xff]
    %v2120 = vld [vmem:[#allocation2 + $0x48] sm:$0xff]
    %v2121 = vld [vmem:[#allocation2 + $0x50] sm:$0xff]
    %v2122 = vld [vmem:[#allocation2 + $0x58] sm:$0xff]
    %v2123 = vld [vmem:[#allocation2 + $0x60] sm:$0xff]
    %v2124 = vld [vmem:[#allocation2 + $0x68] sm:$0xff]
    %v2125 = vld [vmem:[#allocation2 + $0x70] sm:$0xff]
    %v2126 = vld [vmem:[#allocation2 + $0x78] sm:$0xff]
    %v2127 = vld [vmem:[#allocation2 + $0x80] sm:$0xff]
    %v2128 = vld [vmem:[#allocation2 + $0x88] sm:$0xff]
    %v2129 = vld [vmem:[#allocation2 + $0x90] sm:$0xff]
    %v2130 = vld [vmem:[#allocation2 + $0x98] sm:$0xff]
    %s2131 = scalar_lea.vmem [#allocation3], 48
    %v2132 = vld [vmem:[%s2131] sm:$0xf]
    %v2133 = vld [vmem:[%s2131 + $0x4] sm:$0xf]
    %v2154 = vunpack.c.l.b16 %v2091
    %v2155 = vunpack.c.l.b16 %v2092
    %v2156 = vunpack.c.l.b16 %v2093
    %v2157 = vunpack.c.l.b16 %v2094
    %v2158 = vunpack.c.l.b16 %v2095
    %v2159 = vunpack.c.l.b16 %v2096
    %v2160 = vunpack.c.l.b16 %v2097
    %v2161 = vunpack.c.l.b16 %v2098
    %v2162 = vunpack.c.l.b16 %v2099
    %v2163 = vunpack.c.l.b16 %v2100
    %v2164 = vunpack.c.l.b16 %v2101
    %v2165 = vunpack.c.l.b16 %v2102
    %v2166 = vunpack.c.l.b16 %v2103
    %v2167 = vunpack.c.l.b16 %v2104
    %v2168 = vunpack.c.l.b16 %v2105
    %v2169 = vunpack.c.l.b16 %v2106
    %v2170 = vunpack.c.l.b16 %v2107
    %v2171 = vunpack.c.l.b16 %v2108
    %v2172 = vunpack.c.l.b16 %v2109
    %v2173 = vunpack.c.l.b16 %v2110
    %v2174 = vpack.c.b16 %v2155, %v2154
    %v2175 = vpack.c.b16 %v2157, %v2156
    %v2176 = vpack.c.b16 %v2159, %v2158
    %v2177 = vpack.c.b16 %v2161, %v2160
    %v2178 = vpack.c.b16 %v2163, %v2162
    %v2179 = vpack.c.b16 %v2165, %v2164
    %v2180 = vpack.c.b16 %v2167, %v2166
    %v2181 = vpack.c.b16 %v2169, %v2168
    %v2182 = vpack.c.b16 %v2171, %v2170
    %v2183 = vpack.c.b16 %v2173, %v2172
    %v2186 = vunpack.c.l.b16 %v2132
    %v2187 = vunpack.c.l.b16 %v2133
    %v2188 = vpack.c.b16 %v2187, %v2186
    %v2191 = vsel %vm149, %v2174, 0
    %v2194 = vsel %vm149, %v2175, 0
    %v2197 = vsel %vm149, %v2176, 0
    %v2200 = vsel %vm149, %v2177, 0
    %v2203 = vsel %vm149, %v2178, 0
    %v2206 = vsel %vm149, %v2179, 0
    %v2209 = vsel %vm149, %v2180, 0
    %v2212 = vsel %vm149, %v2181, 0
    %v2215 = vsel %vm149, %v2182, 0
    %v2218 = vsel %vm149, %v2183, 0
    %2220 = vmatprep.subr.bf16.mxu0 0
    %2221 = vmatpush1.bf16.msra.mxu0 %v2188
    %2222 = vmatprep.subr.bf16.mxu0 0
    %2223 = vmatpush1.bf16.msra.mxu0 0
    %2224 = vmatprep.subr.bf16.mxu0 0
    %2225 = vmatpush1.bf16.msra.mxu0 0
    %2226 = vmatprep.subr.bf16.mxu0 0
    %2227 = vmatpush1.bf16.msra.mxu0 0
    %2228 = vmatprep.subr.bf16.mxu0 0
    %2229 = vmatpush1.bf16.msra.mxu0 0
    %2230 = vmatprep.subr.bf16.mxu0 0
    %2231 = vmatpush1.bf16.msra.mxu0 0
    %2232 = vmatprep.subr.bf16.mxu0 0
    %2233 = vmatpush1.bf16.msra.mxu0 0
    %2234 = vmatprep.subr.bf16.mxu0 0
    %2235 = vmatpush1.bf16.msra.mxu0 0
    %2236 = vmatprep.subr.bf16.mxu0 0
    %2237 = vmatpush1.bf16.msra.mxu0 0
    %2238 = vmatprep.subr.bf16.mxu0 0
    %2239 = vmatpush1.bf16.msra.mxu0 0
    %2240 = vmatprep.subr.bf16.mxu0 0
    %2241 = vmatpush1.bf16.msra.mxu0 0
    %2242 = vmatprep.subr.bf16.mxu0 0
    %2243 = vmatpush1.bf16.msra.mxu0 0
    %2244 = vmatprep.subr.bf16.mxu0 0
    %2245 = vmatpush1.bf16.msra.mxu0 0
    %2246 = vmatprep.subr.bf16.mxu0 0
    %2247 = vmatpush1.bf16.msra.mxu0 0
    %2248 = vmatprep.subr.bf16.mxu0 0
    %2249 = vmatpush1.bf16.msra.mxu0 0
    %2250 = vmatprep.subr.bf16.mxu0 0
    %2251 = vmatpush1.bf16.msra.mxu0 0
    %2252 = vmatprep.mubr.bf16.mxu0 0
    %2253 = vmatmul.mubr.bf16.gmra.mrb[0].mxu0 %v2191
    %v2254 = vpop.f32.mrb[0].mxu0
    %v2255 = vadd.f32 0.0, %v2254
    %v2256 = vpop.f32.mrb[0].mxu0
    %v2257 = vpop.f32.mrb[0].mxu0
    %v2258 = vadd.f32 0.0, %v2257
    %v2259 = vpop.f32.mrb[0].mxu0
    %2260 = vmatprep.mubr.bf16.mxu0 0
    %2261 = vmatmul.mubr.bf16.gmra.mrb[0].mxu0 %v2194
    %v2262 = vpop.f32.mrb[0].mxu0
    %v2263 = vadd.f32 0.0, %v2262
    %v2264 = vpop.f32.mrb[0].mxu0
    %v2265 = vpop.f32.mrb[0].mxu0
    %v2266 = vadd.f32 0.0, %v2265
    %v2267 = vpop.f32.mrb[0].mxu0
    %2268 = vmatprep.mubr.bf16.mxu0 0
    %2269 = vmatmul.mubr.bf16.gmra.mrb[0].mxu0 %v2197
    %v2270 = vpop.f32.mrb[0].mxu0
    %v2271 = vadd.f32 0.0, %v2270
    %v2272 = vpop.f32.mrb[0].mxu0
    %v2273 = vpop.f32.mrb[0].mxu0
    %v2274 = vadd.f32 0.0, %v2273
    %v2275 = vpop.f32.mrb[0].mxu0
    %2276 = vmatprep.mubr.bf16.mxu0 0
    %2277 = vmatmul.mubr.bf16.gmra.mrb[0].mxu0 %v2200
    %v2278 = vpop.f32.mrb[0].mxu0
    %v2279 = vadd.f32 0.0, %v2278
    %v2280 = vpop.f32.mrb[0].mxu0
    %v2281 = vpop.f32.mrb[0].mxu0
    %v2282 = vadd.f32 0.0, %v2281
    %v2283 = vpop.f32.mrb[0].mxu0
    %2284 = vmatprep.mubr.bf16.mxu0 0
    %2285 = vmatmul.mubr.bf16.gmra.mrb[0].mxu0 %v2203
    %v2286 = vpop.f32.mrb[0].mxu0
    %v2287 = vadd.f32 0.0, %v2286
    %v2288 = vpop.f32.mrb[0].mxu0
    %v2289 = vpop.f32.mrb[0].mxu0
    %v2290 = vadd.f32 0.0, %v2289
    %v2291 = vpop.f32.mrb[0].mxu0
    %2292 = vmatprep.mubr.bf16.mxu0 0
    %2293 = vmatmul.mubr.bf16.gmra.mrb[0].mxu0 %v2206
    %v2294 = vpop.f32.mrb[0].mxu0
    %v2295 = vadd.f32 0.0, %v2294
    %v2296 = vpop.f32.mrb[0].mxu0
    %v2297 = vpop.f32.mrb[0].mxu0
    %v2298 = vadd.f32 0.0, %v2297
    %v2299 = vpop.f32.mrb[0].mxu0
    %2300 = vmatprep.mubr.bf16.mxu0 0
    %2301 = vmatmul.mubr.bf16.gmra.mrb[0].mxu0 %v2209
    %v2302 = vpop.f32.mrb[0].mxu0
    %v2303 = vadd.f32 0.0, %v2302
    %v2304 = vpop.f32.mrb[0].mxu0
    %v2305 = vpop.f32.mrb[0].mxu0
    %v2306 = vadd.f32 0.0, %v2305
    %v2307 = vpop.f32.mrb[0].mxu0
    %2308 = vmatprep.mubr.bf16.mxu0 0
    %2309 = vmatmul.mubr.bf16.gmra.mrb[0].mxu0 %v2212
    %v2310 = vpop.f32.mrb[0].mxu0
    %v2311 = vadd.f32 0.0, %v2310
    %v2312 = vpop.f32.mrb[0].mxu0
    %v2313 = vpop.f32.mrb[0].mxu0
    %v2314 = vadd.f32 0.0, %v2313
    %v2315 = vpop.f32.mrb[0].mxu0
    %2316 = vmatprep.mubr.bf16.mxu0 0
    %2317 = vmatmul.mubr.bf16.gmra.mrb[0].mxu0 %v2215
    %v2318 = vpop.f32.mrb[0].mxu0
    %v2319 = vadd.f32 0.0, %v2318
    %v2320 = vpop.f32.mrb[0].mxu0
    %v2321 = vpop.f32.mrb[0].mxu0
    %v2322 = vadd.f32 0.0, %v2321
    %v2323 = vpop.f32.mrb[0].mxu0
    %2324 = vmatprep.mubr.bf16.mxu0 0
    %2325 = vmatmul.mubr.bf16.gmra.mrb[0].mxu0 %v2218
    %v2326 = vpop.f32.mrb[0].mxu0
    %v2327 = vadd.f32 0.0, %v2326
    %v2328 = vpop.f32.mrb[0].mxu0
    %v2329 = vpop.f32.mrb[0].mxu0
    %v2330 = vadd.f32 0.0, %v2329
    %v2331 = vpop.f32.mrb[0].mxu0
    %2332 = vdwg.mxu0
    %v2333 = vadd.f32 %v2111, %v2255
    %v2334 = vadd.f32 %v2112, %v2258
    %v2335 = vadd.f32 %v2113, %v2263
    %v2336 = vadd.f32 %v2114, %v2266
    %v2337 = vadd.f32 %v2115, %v2271
    %v2338 = vadd.f32 %v2116, %v2274
    %v2339 = vadd.f32 %v2117, %v2279
    %v2340 = vadd.f32 %v2118, %v2282
    %v2341 = vadd.f32 %v2119, %v2287
    %v2342 = vadd.f32 %v2120, %v2290
    %v2343 = vadd.f32 %v2121, %v2295
    %v2344 = vadd.f32 %v2122, %v2298
    %v2345 = vadd.f32 %v2123, %v2303
    %v2346 = vadd.f32 %v2124, %v2306
    %v2347 = vadd.f32 %v2125, %v2311
    %v2348 = vadd.f32 %v2126, %v2314
    %v2349 = vadd.f32 %v2127, %v2319
    %v2350 = vadd.f32 %v2128, %v2322
    %v2351 = vadd.f32 %v2129, %v2327
    %v2352 = vadd.f32 %v2130, %v2330
    %2353 = vst.msk [vmem:[#allocation2] sm:$0xff] %vm313, %v2333
    %2354 = vst.msk [vmem:[#allocation2 + $0x8] sm:$0xff] %vm313, %v2334
    %2355 = vst.msk [vmem:[#allocation2 + $0x10] sm:$0xff] %vm313, %v2335
    %2356 = vst.msk [vmem:[#allocation2 + $0x18] sm:$0xff] %vm313, %v2336
    %2357 = vst.msk [vmem:[#allocation2 + $0x20] sm:$0xff] %vm313, %v2337
    %2358 = vst.msk [vmem:[#allocation2 + $0x28] sm:$0xff] %vm313, %v2338
    %2359 = vst.msk [vmem:[#allocation2 + $0x30] sm:$0xff] %vm313, %v2339
    %2360 = vst.msk [vmem:[#allocation2 + $0x38] sm:$0xff] %vm313, %v2340
    %2361 = vst.msk [vmem:[#allocation2 + $0x40] sm:$0xff] %vm313, %v2341
    %2362 = vst.msk [vmem:[#allocation2 + $0x48] sm:$0xff] %vm313, %v2342
    %2363 = vst.msk [vmem:[#allocation2 + $0x50] sm:$0xff] %vm313, %v2343
    %2364 = vst.msk [vmem:[#allocation2 + $0x58] sm:$0xff] %vm313, %v2344
    %2365 = vst.msk [vmem:[#allocation2 + $0x60] sm:$0xff] %vm313, %v2345
    %2366 = vst.msk [vmem:[#allocation2 + $0x68] sm:$0xff] %vm313, %v2346
    %2367 = vst.msk [vmem:[#allocation2 + $0x70] sm:$0xff] %vm313, %v2347
    %2368 = vst.msk [vmem:[#allocation2 + $0x78] sm:$0xff] %vm313, %v2348
    %2369 = vst.msk [vmem:[#allocation2 + $0x80] sm:$0xff] %vm313, %v2349
    %2370 = vst.msk [vmem:[#allocation2 + $0x88] sm:$0xff] %vm313, %v2350
    %2371 = vst.msk [vmem:[#allocation2 + $0x90] sm:$0xff] %vm313, %v2351
    %2372 = vst.msk [vmem:[#allocation2 + $0x98] sm:$0xff] %vm313, %v2352
    %v2373 = vld [vmem:[%s0 + $0x8] sm:$0xf]
    %v2374 = vld [vmem:[%s0 + $0xc] sm:$0xf]
    %v2375 = vld [vmem:[%s0 + $0x10] sm:$0xf]
    %v2376 = vld [vmem:[%s0 + $0x14] sm:$0xf]
    %v2377 = vld [vmem:[%s0 + $0x18] sm:$0xf]
    %v2378 = vld [vmem:[%s0 + $0x1c] sm:$0xf]
    %v2379 = vld [vmem:[%s0 + $0x20] sm:$0xf]
    %v2380 = vld [vmem:[%s0 + $0x24] sm:$0xf]
    %v2381 = vld [vmem:[%s0 + $0x28] sm:$0xf]
    %v2382 = vld [vmem:[%s0 + $0x2c] sm:$0xf]
    %v2383 = vld [vmem:[%s0 + $0x30] sm:$0xf]
    %v2384 = vld [vmem:[%s0 + $0x34] sm:$0xf]
    %v2385 = vld [vmem:[%s0 + $0x38] sm:$0xf]
    %v2386 = vld [vmem:[%s0 + $0x3c] sm:$0xf]
    %v2387 = vld [vmem:[%s0 + $0x40] sm:$0xf]
    %v2388 = vld [vmem:[%s0 + $0x44] sm:$0xf]
    %v2389 = vld [vmem:[%s0 + $0x48] sm:$0xf]
    %v2390 = vld [vmem:[%s0 + $0x4c] sm:$0xf]
    %v2391 = vld [vmem:[%s0 + $0x50] sm:$0xf]
    %v2392 = vld [vmem:[%s0 + $0x54] sm:$0xf]
    %v2393 = vld [vmem:[%s0 + $0x58] sm:$0x1]
    %v2394 = vld [vmem:[#allocation2] sm:$0xff]
    %v2395 = vld [vmem:[#allocation2 + $0x8] sm:$0xff]
    %v2396 = vld [vmem:[#allocation2 + $0x10] sm:$0xff]
    %v2397 = vld [vmem:[#allocation2 + $0x18] sm:$0xff]
    %v2398 = vld [vmem:[#allocation2 + $0x20] sm:$0xff]
    %v2399 = vld [vmem:[#allocation2 + $0x28] sm:$0xff]
    %v2400 = vld [vmem:[#allocation2 + $0x30] sm:$0xff]
    %v2401 = vld [vmem:[#allocation2 + $0x38] sm:$0xff]
    %v2402 = vld [vmem:[#allocation2 + $0x40] sm:$0xff]
    %v2403 = vld [vmem:[#allocation2 + $0x48] sm:$0xff]
    %v2404 = vld [vmem:[#allocation2 + $0x50] sm:$0xff]
    %v2405 = vld [vmem:[#allocation2 + $0x58] sm:$0xff]
    %v2406 = vld [vmem:[#allocation2 + $0x60] sm:$0xff]
    %v2407 = vld [vmem:[#allocation2 + $0x68] sm:$0xff]
    %v2408 = vld [vmem:[#allocation2 + $0x70] sm:$0xff]
    %v2409 = vld [vmem:[#allocation2 + $0x78] sm:$0xff]
    %v2410 = vld [vmem:[#allocation2 + $0x80] sm:$0xff]
    %v2411 = vld [vmem:[#allocation2 + $0x88] sm:$0xff]
    %v2412 = vld [vmem:[#allocation2 + $0x90] sm:$0xff]
    %v2413 = vld [vmem:[#allocation2 + $0x98] sm:$0xff]
    %s2414 = scalar_lea.vmem [#allocation3], 56
    %v2415 = vld [vmem:[%s2414] sm:$0xf]
    %v2416 = vld [vmem:[%s2414 + $0x4] sm:$0xf]
    %v2438 = vunpack.c.l.b16 %v2373
    %v2439 = vunpack.c.l.b16 %v2374
    %v2440 = vunpack.c.l.b16 %v2375
    %v2441 = vunpack.c.l.b16 %v2376
    %v2442 = vunpack.c.l.b16 %v2377
    %v2443 = vunpack.c.l.b16 %v2378
    %v2444 = vunpack.c.l.b16 %v2379
    %v2445 = vunpack.c.l.b16 %v2380
    %v2446 = vunpack.c.l.b16 %v2381
    %v2447 = vunpack.c.l.b16 %v2382
    %v2448 = vunpack.c.l.b16 %v2383
    %v2449 = vunpack.c.l.b16 %v2384
    %v2450 = vunpack.c.l.b16 %v2385
    %v2451 = vunpack.c.l.b16 %v2386
    %v2452 = vunpack.c.l.b16 %v2387
    %v2453 = vunpack.c.l.b16 %v2388
    %v2454 = vunpack.c.l.b16 %v2389
    %v2455 = vunpack.c.l.b16 %v2390
    %v2456 = vunpack.c.l.b16 %v2391
    %v2457 = vunpack.c.l.b16 %v2392
    %v2458 = vunpack.c.l.b16 %v2393
    %v2459 = vpack.c.b16 %v2439, %v2438
    %v2460 = vpack.c.b16 %v2441, %v2440
    %v2461 = vpack.c.b16 %v2443, %v2442
    %v2462 = vpack.c.b16 %v2445, %v2444
    %v2463 = vpack.c.b16 %v2447, %v2446
    %v2464 = vpack.c.b16 %v2449, %v2448
    %v2465 = vpack.c.b16 %v2451, %v2450
    %v2466 = vpack.c.b16 %v2453, %v2452
    %v2467 = vpack.c.b16 %v2455, %v2454
    %v2468 = vpack.c.b16 %v2457, %v2456
    %v2469 = vpack.c.b16 %v2458, %v2458
    %v2471 = vshrl.u32 %v2459, 16
    %v2473 = vshll.u32 %v2459, 16
    %v2475 = vrot.slane %v2473, 1
    %v2476 = vor.u32 %v2471, %v2475
    %v2478 = vshll.u32 %v2460, 16
    %v2480 = vrot.slane %v2478, 1
    %v2481 = vsel %vm431, %v2476, %v2480
    %v2482 = vshrl.u32 %v2460, 16
    %v2484 = vor.u32 %v2482, %v2480
    %v2486 = vshll.u32 %v2461, 16
    %v2488 = vrot.slane %v2486, 1
    %v2489 = vsel %vm431, %v2484, %v2488
    %v2490 = vshrl.u32 %v2461, 16
    %v2492 = vor.u32 %v2490, %v2488
    %v2494 = vshll.u32 %v2462, 16
    %v2496 = vrot.slane %v2494, 1
    %v2497 = vsel %vm431, %v2492, %v2496
    %v2498 = vshrl.u32 %v2462, 16
    %v2500 = vor.u32 %v2498, %v2496
    %v2502 = vshll.u32 %v2463, 16
    %v2504 = vrot.slane %v2502, 1
    %v2505 = vsel %vm431, %v2500, %v2504
    %v2506 = vshrl.u32 %v2463, 16
    %v2508 = vor.u32 %v2506, %v2504
    %v2510 = vshll.u32 %v2464, 16
    %v2512 = vrot.slane %v2510, 1
    %v2513 = vsel %vm431, %v2508, %v2512
    %v2514 = vshrl.u32 %v2464, 16
    %v2516 = vor.u32 %v2514, %v2512
    %v2518 = vshll.u32 %v2465, 16
    %v2520 = vrot.slane %v2518, 1
    %v2521 = vsel %vm431, %v2516, %v2520
    %v2522 = vshrl.u32 %v2465, 16
    %v2524 = vor.u32 %v2522, %v2520
    %v2526 = vshll.u32 %v2466, 16
    %v2528 = vrot.slane %v2526, 1
    %v2529 = vsel %vm431, %v2524, %v2528
    %v2530 = vshrl.u32 %v2466, 16
    %v2532 = vor.u32 %v2530, %v2528
    %v2534 = vshll.u32 %v2467, 16
    %v2536 = vrot.slane %v2534, 1
    %v2537 = vsel %vm431, %v2532, %v2536
    %v2538 = vshrl.u32 %v2467, 16
    %v2540 = vor.u32 %v2538, %v2536
    %v2542 = vshll.u32 %v2468, 16
    %v2544 = vrot.slane %v2542, 1
    %v2545 = vsel %vm431, %v2540, %v2544
    %v2546 = vshrl.u32 %v2468, 16
    %v2548 = vor.u32 %v2546, %v2544
    %v2550 = vshll.u32 %v2469, 16
    %v2552 = vrot.slane %v2550, 1
    %v2553 = vsel %vm431, %v2548, %v2552
    %v2556 = vunpack.c.l.b16 %v2415
    %v2557 = vunpack.c.l.b16 %v2416
    %v2558 = vpack.c.b16 %v2557, %v2556
    %v2561 = vsel %vm149, %v2481, 0
    %v2564 = vsel %vm149, %v2489, 0
    %v2567 = vsel %vm149, %v2497, 0
    %v2570 = vsel %vm149, %v2505, 0
    %v2573 = vsel %vm149, %v2513, 0
    %v2576 = vsel %vm149, %v2521, 0
    %v2579 = vsel %vm149, %v2529, 0
    %v2582 = vsel %vm149, %v2537, 0
    %v2585 = vsel %vm149, %v2545, 0
    %v2588 = vsel %vm149, %v2553, 0
    %2590 = vmatprep.subr.bf16.mxu0 0
    %2591 = vmatpush1.bf16.msra.mxu0 %v2558
    %2592 = vmatprep.subr.bf16.mxu0 0
    %2593 = vmatpush1.bf16.msra.mxu0 0
    %2594 = vmatprep.subr.bf16.mxu0 0
    %2595 = vmatpush1.bf16.msra.mxu0 0
    %2596 = vmatprep.subr.bf16.mxu0 0
    %2597 = vmatpush1.bf16.msra.mxu0 0
    %2598 = vmatprep.subr.bf16.mxu0 0
    %2599 = vmatpush1.bf16.msra.mxu0 0
    %2600 = vmatprep.subr.bf16.mxu0 0
    %2601 = vmatpush1.bf16.msra.mxu0 0
    %2602 = vmatprep.subr.bf16.mxu0 0
    %2603 = vmatpush1.bf16.msra.mxu0 0
    %2604 = vmatprep.subr.bf16.mxu0 0
    %2605 = vmatpush1.bf16.msra.mxu0 0
    %2606 = vmatprep.subr.bf16.mxu0 0
    %2607 = vmatpush1.bf16.msra.mxu0 0
    %2608 = vmatprep.subr.bf16.mxu0 0
    %2609 = vmatpush1.bf16.msra.mxu0 0
    %2610 = vmatprep.subr.bf16.mxu0 0
    %2611 = vmatpush1.bf16.msra.mxu0 0
    %2612 = vmatprep.subr.bf16.mxu0 0
    %2613 = vmatpush1.bf16.msra.mxu0 0
    %2614 = vmatprep.subr.bf16.mxu0 0
    %2615 = vmatpush1.bf16.msra.mxu0 0
    %2616 = vmatprep.subr.bf16.mxu0 0
    %2617 = vmatpush1.bf16.msra.mxu0 0
    %2618 = vmatprep.subr.bf16.mxu0 0
    %2619 = vmatpush1.bf16.msra.mxu0 0
    %2620 = vmatprep.subr.bf16.mxu0 0
    %2621 = vmatpush1.bf16.msra.mxu0 0
    %2622 = vmatprep.mubr.bf16.mxu0 0
    %2623 = vmatmul.mubr.bf16.gmra.mrb[0].mxu0 %v2561
    %v2624 = vpop.f32.mrb[0].mxu0
    %v2625 = vadd.f32 0.0, %v2624
    %v2626 = vpop.f32.mrb[0].mxu0
    %v2627 = vpop.f32.mrb[0].mxu0
    %v2628 = vadd.f32 0.0, %v2627
    %v2629 = vpop.f32.mrb[0].mxu0
    %2630 = vmatprep.mubr.bf16.mxu0 0
    %2631 = vmatmul.mubr.bf16.gmra.mrb[0].mxu0 %v2564
    %v2632 = vpop.f32.mrb[0].mxu0
    %v2633 = vadd.f32 0.0, %v2632
    %v2634 = vpop.f32.mrb[0].mxu0
    %v2635 = vpop.f32.mrb[0].mxu0
    %v2636 = vadd.f32 0.0, %v2635
    %v2637 = vpop.f32.mrb[0].mxu0
    %2638 = vmatprep.mubr.bf16.mxu0 0
    %2639 = vmatmul.mubr.bf16.gmra.mrb[0].mxu0 %v2567
    %v2640 = vpop.f32.mrb[0].mxu0
    %v2641 = vadd.f32 0.0, %v2640
    %v2642 = vpop.f32.mrb[0].mxu0
    %v2643 = vpop.f32.mrb[0].mxu0
    %v2644 = vadd.f32 0.0, %v2643
    %v2645 = vpop.f32.mrb[0].mxu0
    %2646 = vmatprep.mubr.bf16.mxu0 0
    %2647 = vmatmul.mubr.bf16.gmra.mrb[0].mxu0 %v2570
    %v2648 = vpop.f32.mrb[0].mxu0
    %v2649 = vadd.f32 0.0, %v2648
    %v2650 = vpop.f32.mrb[0].mxu0
    %v2651 = vpop.f32.mrb[0].mxu0
    %v2652 = vadd.f32 0.0, %v2651
    %v2653 = vpop.f32.mrb[0].mxu0
    %2654 = vmatprep.mubr.bf16.mxu0 0
    %2655 = vmatmul.mubr.bf16.gmra.mrb[0].mxu0 %v2573
    %v2656 = vpop.f32.mrb[0].mxu0
    %v2657 = vadd.f32 0.0, %v2656
    %v2658 = vpop.f32.mrb[0].mxu0
    %v2659 = vpop.f32.mrb[0].mxu0
    %v2660 = vadd.f32 0.0, %v2659
    %v2661 = vpop.f32.mrb[0].mxu0
    %2662 = vmatprep.mubr.bf16.mxu0 0
    %2663 = vmatmul.mubr.bf16.gmra.mrb[0].mxu0 %v2576
    %v2664 = vpop.f32.mrb[0].mxu0
    %v2665 = vadd.f32 0.0, %v2664
    %v2666 = vpop.f32.mrb[0].mxu0
    %v2667 = vpop.f32.mrb[0].mxu0
    %v2668 = vadd.f32 0.0, %v2667
    %v2669 = vpop.f32.mrb[0].mxu0
    %2670 = vmatprep.mubr.bf16.mxu0 0
    %2671 = vmatmul.mubr.bf16.gmra.mrb[0].mxu0 %v2579
    %v2672 = vpop.f32.mrb[0].mxu0
    %v2673 = vadd.f32 0.0, %v2672
    %v2674 = vpop.f32.mrb[0].mxu0
    %v2675 = vpop.f32.mrb[0].mxu0
    %v2676 = vadd.f32 0.0, %v2675
    %v2677 = vpop.f32.mrb[0].mxu0
    %2678 = vmatprep.mubr.bf16.mxu0 0
    %2679 = vmatmul.mubr.bf16.gmra.mrb[0].mxu0 %v2582
    %v2680 = vpop.f32.mrb[0].mxu0
    %v2681 = vadd.f32 0.0, %v2680
    %v2682 = vpop.f32.mrb[0].mxu0
    %v2683 = vpop.f32.mrb[0].mxu0
    %v2684 = vadd.f32 0.0, %v2683
    %v2685 = vpop.f32.mrb[0].mxu0
    %2686 = vmatprep.mubr.bf16.mxu0 0
    %2687 = vmatmul.mubr.bf16.gmra.mrb[0].mxu0 %v2585
    %v2688 = vpop.f32.mrb[0].mxu0
    %v2689 = vadd.f32 0.0, %v2688
    %v2690 = vpop.f32.mrb[0].mxu0
    %v2691 = vpop.f32.mrb[0].mxu0
    %v2692 = vadd.f32 0.0, %v2691
    %v2693 = vpop.f32.mrb[0].mxu0
    %2694 = vmatprep.mubr.bf16.mxu0 0
    %2695 = vmatmul.mubr.bf16.gmra.mrb[0].mxu0 %v2588
    %v2696 = vpop.f32.mrb[0].mxu0
    %v2697 = vadd.f32 0.0, %v2696
    %v2698 = vpop.f32.mrb[0].mxu0
    %v2699 = vpop.f32.mrb[0].mxu0
    %v2700 = vadd.f32 0.0, %v2699
    %v2701 = vpop.f32.mrb[0].mxu0
    %2702 = vdwg.mxu0
    %v2703 = vadd.f32 %v2394, %v2625
    %v2704 = vadd.f32 %v2395, %v2628
    %v2705 = vadd.f32 %v2396, %v2633
    %v2706 = vadd.f32 %v2397, %v2636
    %v2707 = vadd.f32 %v2398, %v2641
    %v2708 = vadd.f32 %v2399, %v2644
    %v2709 = vadd.f32 %v2400, %v2649
    %v2710 = vadd.f32 %v2401, %v2652
    %v2711 = vadd.f32 %v2402, %v2657
    %v2712 = vadd.f32 %v2403, %v2660
    %v2713 = vadd.f32 %v2404, %v2665
    %v2714 = vadd.f32 %v2405, %v2668
    %v2715 = vadd.f32 %v2406, %v2673
    %v2716 = vadd.f32 %v2407, %v2676
    %v2717 = vadd.f32 %v2408, %v2681
    %v2718 = vadd.f32 %v2409, %v2684
    %v2719 = vadd.f32 %v2410, %v2689
    %v2720 = vadd.f32 %v2411, %v2692
    %v2721 = vadd.f32 %v2412, %v2697
    %v2722 = vadd.f32 %v2413, %v2700
    %2723 = vst.msk [vmem:[#allocation2] sm:$0xff] %vm313, %v2703
    %2724 = vst.msk [vmem:[#allocation2 + $0x8] sm:$0xff] %vm313, %v2704
    %2725 = vst.msk [vmem:[#allocation2 + $0x10] sm:$0xff] %vm313, %v2705
    %2726 = vst.msk [vmem:[#allocation2 + $0x18] sm:$0xff] %vm313, %v2706
    %2727 = vst.msk [vmem:[#allocation2 + $0x20] sm:$0xff] %vm313, %v2707
    %2728 = vst.msk [vmem:[#allocation2 + $0x28] sm:$0xff] %vm313, %v2708
    %2729 = vst.msk [vmem:[#allocation2 + $0x30] sm:$0xff] %vm313, %v2709
    %2730 = vst.msk [vmem:[#allocation2 + $0x38] sm:$0xff] %vm313, %v2710
    %2731 = vst.msk [vmem:[#allocation2 + $0x40] sm:$0xff] %vm313, %v2711
    %2732 = vst.msk [vmem:[#allocation2 + $0x48] sm:$0xff] %vm313, %v2712
    %2733 = vst.msk [vmem:[#allocation2 + $0x50] sm:$0xff] %vm313, %v2713
    %2734 = vst.msk [vmem:[#allocation2 + $0x58] sm:$0xff] %vm313, %v2714
    %2735 = vst.msk [vmem:[#allocation2 + $0x60] sm:$0xff] %vm313, %v2715
    %2736 = vst.msk [vmem:[#allocation2 + $0x68] sm:$0xff] %vm313, %v2716
    %2737 = vst.msk [vmem:[#allocation2 + $0x70] sm:$0xff] %vm313, %v2717
    %2738 = vst.msk [vmem:[#allocation2 + $0x78] sm:$0xff] %vm313, %v2718
    %2739 = vst.msk [vmem:[#allocation2 + $0x80] sm:$0xff] %vm313, %v2719
    %2740 = vst.msk [vmem:[#allocation2 + $0x88] sm:$0xff] %vm313, %v2720
    %2741 = vst.msk [vmem:[#allocation2 + $0x90] sm:$0xff] %vm313, %v2721
    %2742 = vst.msk [vmem:[#allocation2 + $0x98] sm:$0xff] %vm313, %v2722
    %v2743 = vld [vmem:[%s0 + $0xc] sm:$0xc]
    %v2744 = vld [vmem:[%s0 + $0x10] sm:$0xf]
    %v2745 = vld [vmem:[%s0 + $0x14] sm:$0xf]
    %v2746 = vld [vmem:[%s0 + $0x18] sm:$0xf]
    %v2747 = vld [vmem:[%s0 + $0x1c] sm:$0xf]
    %v2748 = vld [vmem:[%s0 + $0x20] sm:$0xf]
    %v2749 = vld [vmem:[%s0 + $0x24] sm:$0xf]
    %v2750 = vld [vmem:[%s0 + $0x28] sm:$0xf]
    %v2751 = vld [vmem:[%s0 + $0x2c] sm:$0xf]
    %v2752 = vld [vmem:[%s0 + $0x30] sm:$0xf]
    %v2753 = vld [vmem:[%s0 + $0x34] sm:$0xf]
    %v2754 = vld [vmem:[%s0 + $0x38] sm:$0xf]
    %v2755 = vld [vmem:[%s0 + $0x3c] sm:$0xf]
    %v2756 = vld [vmem:[%s0 + $0x40] sm:$0xf]
    %v2757 = vld [vmem:[%s0 + $0x44] sm:$0xf]
    %v2758 = vld [vmem:[%s0 + $0x48] sm:$0xf]
    %v2759 = vld [vmem:[%s0 + $0x4c] sm:$0xf]
    %v2760 = vld [vmem:[%s0 + $0x50] sm:$0xf]
    %v2761 = vld [vmem:[%s0 + $0x54] sm:$0xf]
    %v2762 = vld [vmem:[%s0 + $0x58] sm:$0xf]
    %v2763 = vld [vmem:[%s0 + $0x5c] sm:$0x3]
    %v2764 = vld [vmem:[#allocation2] sm:$0xff]
    %v2765 = vld [vmem:[#allocation2 + $0x8] sm:$0xff]
    %v2766 = vld [vmem:[#allocation2 + $0x10] sm:$0xff]
    %v2767 = vld [vmem:[#allocation2 + $0x18] sm:$0xff]
    %v2768 = vld [vmem:[#allocation2 + $0x20] sm:$0xff]
    %v2769 = vld [vmem:[#allocation2 + $0x28] sm:$0xff]
    %v2770 = vld [vmem:[#allocation2 + $0x30] sm:$0xff]
    %v2771 = vld [vmem:[#allocation2 + $0x38] sm:$0xff]
    %v2772 = vld [vmem:[#allocation2 + $0x40] sm:$0xff]
    %v2773 = vld [vmem:[#allocation2 + $0x48] sm:$0xff]
    %v2774 = vld [vmem:[#allocation2 + $0x50] sm:$0xff]
    %v2775 = vld [vmem:[#allocation2 + $0x58] sm:$0xff]
    %v2776 = vld [vmem:[#allocation2 + $0x60] sm:$0xff]
    %v2777 = vld [vmem:[#allocation2 + $0x68] sm:$0xff]
    %v2778 = vld [vmem:[#allocation2 + $0x70] sm:$0xff]
    %v2779 = vld [vmem:[#allocation2 + $0x78] sm:$0xff]
    %v2780 = vld [vmem:[#allocation2 + $0x80] sm:$0xff]
    %v2781 = vld [vmem:[#allocation2 + $0x88] sm:$0xff]
    %v2782 = vld [vmem:[#allocation2 + $0x90] sm:$0xff]
    %v2783 = vld [vmem:[#allocation2 + $0x98] sm:$0xff]
    %s2784 = scalar_lea.vmem [#allocation3], 64
    %v2785 = vld [vmem:[%s2784] sm:$0xf]
    %v2786 = vld [vmem:[%s2784 + $0x4] sm:$0xf]
    %v2808 = vunpack.c.l.b16 %v2743
    %v2809 = vunpack.c.l.b16 %v2744
    %v2810 = vunpack.c.l.b16 %v2745
    %v2811 = vunpack.c.l.b16 %v2746
    %v2812 = vunpack.c.l.b16 %v2747
    %v2813 = vunpack.c.l.b16 %v2748
    %v2814 = vunpack.c.l.b16 %v2749
    %v2815 = vunpack.c.l.b16 %v2750
    %v2816 = vunpack.c.l.b16 %v2751
    %v2817 = vunpack.c.l.b16 %v2752
    %v2818 = vunpack.c.l.b16 %v2753
    %v2819 = vunpack.c.l.b16 %v2754
    %v2820 = vunpack.c.l.b16 %v2755
    %v2821 = vunpack.c.l.b16 %v2756
    %v2822 = vunpack.c.l.b16 %v2757
    %v2823 = vunpack.c.l.b16 %v2758
    %v2824 = vunpack.c.l.b16 %v2759
    %v2825 = vunpack.c.l.b16 %v2760
    %v2826 = vunpack.c.l.b16 %v2761
    %v2827 = vunpack.c.l.b16 %v2762
    %v2828 = vunpack.c.l.b16 %v2763
    %v2829 = vpack.c.b16 %v2809, %v2808
    %v2830 = vpack.c.b16 %v2811, %v2810
    %v2831 = vpack.c.b16 %v2813, %v2812
    %v2832 = vpack.c.b16 %v2815, %v2814
    %v2833 = vpack.c.b16 %v2817, %v2816
    %v2834 = vpack.c.b16 %v2819, %v2818
    %v2835 = vpack.c.b16 %v2821, %v2820
    %v2836 = vpack.c.b16 %v2823, %v2822
    %v2837 = vpack.c.b16 %v2825, %v2824
    %v2838 = vpack.c.b16 %v2827, %v2826
    %v2839 = vpack.c.b16 %v2828, %v2828
    %vm2840 = vcmask 1045504
    %v2841 = vrot.slane %v2829, 2
    %v2842 = vrot.slane %v2830, 2
    %v2843 = vsel %vm2840, %v2841, %v2842
    %v2844 = vrot.slane %v2831, 2
    %v2845 = vsel %vm2840, %v2842, %v2844
    %v2846 = vrot.slane %v2832, 2
    %v2847 = vsel %vm2840, %v2844, %v2846
    %v2848 = vrot.slane %v2833, 2
    %v2849 = vsel %vm2840, %v2846, %v2848
    %v2850 = vrot.slane %v2834, 2
    %v2851 = vsel %vm2840, %v2848, %v2850
    %v2852 = vrot.slane %v2835, 2
    %v2853 = vsel %vm2840, %v2850, %v2852
    %v2854 = vrot.slane %v2836, 2
    %v2855 = vsel %vm2840, %v2852, %v2854
    %v2856 = vrot.slane %v2837, 2
    %v2857 = vsel %vm2840, %v2854, %v2856
    %v2858 = vrot.slane %v2838, 2
    %v2859 = vsel %vm2840, %v2856, %v2858
    %v2860 = vrot.slane %v2839, 2
    %v2861 = vsel %vm2840, %v2858, %v2860
    %v2864 = vunpack.c.l.b16 %v2785
    %v2865 = vunpack.c.l.b16 %v2786
    %v2866 = vpack.c.b16 %v2865, %v2864
    %v2869 = vsel %vm149, %v2843, 0
    %v2872 = vsel %vm149, %v2845, 0
    %v2875 = vsel %vm149, %v2847, 0
    %v2878 = vsel %vm149, %v2849, 0
    %v2881 = vsel %vm149, %v2851, 0
    %v2884 = vsel %vm149, %v2853, 0
    %v2887 = vsel %vm149, %v2855, 0
    %v2890 = vsel %vm149, %v2857, 0
    %v2893 = vsel %vm149, %v2859, 0
    %v2896 = vsel %vm149, %v2861, 0
    %2898 = vmatprep.subr.bf16.mxu0 0
    %2899 = vmatpush1.bf16.msra.mxu0 %v2866
    %2900 = vmatprep.subr.bf16.mxu0 0
    %2901 = vmatpush1.bf16.msra.mxu0 0
    %2902 = vmatprep.subr.bf16.mxu0 0
    %2903 = vmatpush1.bf16.msra.mxu0 0
    %2904 = vmatprep.subr.bf16.mxu0 0
    %2905 = vmatpush1.bf16.msra.mxu0 0
    %2906 = vmatprep.subr.bf16.mxu0 0
    %2907 = vmatpush1.bf16.msra.mxu0 0
    %2908 = vmatprep.subr.bf16.mxu0 0
    %2909 = vmatpush1.bf16.msra.mxu0 0
    %2910 = vmatprep.subr.bf16.mxu0 0
    %2911 = vmatpush1.bf16.msra.mxu0 0
    %2912 = vmatprep.subr.bf16.mxu0 0
    %2913 = vmatpush1.bf16.msra.mxu0 0
    %2914 = vmatprep.subr.bf16.mxu0 0
    %2915 = vmatpush1.bf16.msra.mxu0 0
    %2916 = vmatprep.subr.bf16.mxu0 0
    %2917 = vmatpush1.bf16.msra.mxu0 0
    %2918 = vmatprep.subr.bf16.mxu0 0
    %2919 = vmatpush1.bf16.msra.mxu0 0
    %2920 = vmatprep.subr.bf16.mxu0 0
    %2921 = vmatpush1.bf16.msra.mxu0 0
    %2922 = vmatprep.subr.bf16.mxu0 0
    %2923 = vmatpush1.bf16.msra.mxu0 0
    %2924 = vmatprep.subr.bf16.mxu0 0
    %2925 = vmatpush1.bf16.msra.mxu0 0
    %2926 = vmatprep.subr.bf16.mxu0 0
    %2927 = vmatpush1.bf16.msra.mxu0 0
    %2928 = vmatprep.subr.bf16.mxu0 0
    %2929 = vmatpush1.bf16.msra.mxu0 0
    %2930 = vmatprep.mubr.bf16.mxu0 0
    %2931 = vmatmul.mubr.bf16.gmra.mrb[0].mxu0 %v2869
    %v2932 = vpop.f32.mrb[0].mxu0
    %v2933 = vadd.f32 0.0, %v2932
    %v2934 = vpop.f32.mrb[0].mxu0
    %v2935 = vpop.f32.mrb[0].mxu0
    %v2936 = vadd.f32 0.0, %v2935
    %v2937 = vpop.f32.mrb[0].mxu0
    %2938 = vmatprep.mubr.bf16.mxu0 0
    %2939 = vmatmul.mubr.bf16.gmra.mrb[0].mxu0 %v2872
    %v2940 = vpop.f32.mrb[0].mxu0
    %v2941 = vadd.f32 0.0, %v2940
    %v2942 = vpop.f32.mrb[0].mxu0
    %v2943 = vpop.f32.mrb[0].mxu0
    %v2944 = vadd.f32 0.0, %v2943
    %v2945 = vpop.f32.mrb[0].mxu0
    %2946 = vmatprep.mubr.bf16.mxu0 0
    %2947 = vmatmul.mubr.bf16.gmra.mrb[0].mxu0 %v2875
    %v2948 = vpop.f32.mrb[0].mxu0
    %v2949 = vadd.f32 0.0, %v2948
    %v2950 = vpop.f32.mrb[0].mxu0
    %v2951 = vpop.f32.mrb[0].mxu0
    %v2952 = vadd.f32 0.0, %v2951
    %v2953 = vpop.f32.mrb[0].mxu0
    %2954 = vmatprep.mubr.bf16.mxu0 0
    %2955 = vmatmul.mubr.bf16.gmra.mrb[0].mxu0 %v2878
    %v2956 = vpop.f32.mrb[0].mxu0
    %v2957 = vadd.f32 0.0, %v2956
    %v2958 = vpop.f32.mrb[0].mxu0
    %v2959 = vpop.f32.mrb[0].mxu0
    %v2960 = vadd.f32 0.0, %v2959
    %v2961 = vpop.f32.mrb[0].mxu0
    %2962 = vmatprep.mubr.bf16.mxu0 0
    %2963 = vmatmul.mubr.bf16.gmra.mrb[0].mxu0 %v2881
    %v2964 = vpop.f32.mrb[0].mxu0
    %v2965 = vadd.f32 0.0, %v2964
    %v2966 = vpop.f32.mrb[0].mxu0
    %v2967 = vpop.f32.mrb[0].mxu0
    %v2968 = vadd.f32 0.0, %v2967
    %v2969 = vpop.f32.mrb[0].mxu0
    %2970 = vmatprep.mubr.bf16.mxu0 0
    %2971 = vmatmul.mubr.bf16.gmra.mrb[0].mxu0 %v2884
    %v2972 = vpop.f32.mrb[0].mxu0
    %v2973 = vadd.f32 0.0, %v2972
    %v2974 = vpop.f32.mrb[0].mxu0
    %v2975 = vpop.f32.mrb[0].mxu0
    %v2976 = vadd.f32 0.0, %v2975
    %v2977 = vpop.f32.mrb[0].mxu0
    %2978 = vmatprep.mubr.bf16.mxu0 0
    %2979 = vmatmul.mubr.bf16.gmra.mrb[0].mxu0 %v2887
    %v2980 = vpop.f32.mrb[0].mxu0
    %v2981 = vadd.f32 0.0, %v2980
    %v2982 = vpop.f32.mrb[0].mxu0
    %v2983 = vpop.f32.mrb[0].mxu0
    %v2984 = vadd.f32 0.0, %v2983
    %v2985 = vpop.f32.mrb[0].mxu0
    %2986 = vmatprep.mubr.bf16.mxu0 0
    %2987 = vmatmul.mubr.bf16.gmra.mrb[0].mxu0 %v2890
    %v2988 = vpop.f32.mrb[0].mxu0
    %v2989 = vadd.f32 0.0, %v2988
    %v2990 = vpop.f32.mrb[0].mxu0
    %v2991 = vpop.f32.mrb[0].mxu0
    %v2992 = vadd.f32 0.0, %v2991
    %v2993 = vpop.f32.mrb[0].mxu0
    %2994 = vmatprep.mubr.bf16.mxu0 0
    %2995 = vmatmul.mubr.bf16.gmra.mrb[0].mxu0 %v2893
    %v2996 = vpop.f32.mrb[0].mxu0
    %v2997 = vadd.f32 0.0, %v2996
    %v2998 = vpop.f32.mrb[0].mxu0
    %v2999 = vpop.f32.mrb[0].mxu0
    %v3000 = vadd.f32 0.0, %v2999
    %v3001 = vpop.f32.mrb[0].mxu0
    %3002 = vmatprep.mubr.bf16.mxu0 0
    %3003 = vmatmul.mubr.bf16.gmra.mrb[0].mxu0 %v2896
    %v3004 = vpop.f32.mrb[0].mxu0
    %v3005 = vadd.f32 0.0, %v3004
    %v3006 = vpop.f32.mrb[0].mxu0
    %v3007 = vpop.f32.mrb[0].mxu0
    %v3008 = vadd.f32 0.0, %v3007
    %v3009 = vpop.f32.mrb[0].mxu0
    %3010 = vdwg.mxu0
    %v3011 = vadd.f32 %v2764, %v2933
    %v3012 = vadd.f32 %v2765, %v2936
    %v3013 = vadd.f32 %v2766, %v2941
    %v3014 = vadd.f32 %v2767, %v2944
    %v3015 = vadd.f32 %v2768, %v2949
    %v3016 = vadd.f32 %v2769, %v2952
    %v3017 = vadd.f32 %v2770, %v2957
    %v3018 = vadd.f32 %v2771, %v2960
    %v3019 = vadd.f32 %v2772, %v2965
    %v3020 = vadd.f32 %v2773, %v2968
    %v3021 = vadd.f32 %v2774, %v2973
    %v3022 = vadd.f32 %v2775, %v2976
    %v3023 = vadd.f32 %v2776, %v2981
    %v3024 = vadd.f32 %v2777, %v2984
    %v3025 = vadd.f32 %v2778, %v2989
    %v3026 = vadd.f32 %v2779, %v2992
    %v3027 = vadd.f32 %v2780, %v2997
    %v3028 = vadd.f32 %v2781, %v3000
    %v3029 = vadd.f32 %v2782, %v3005
    %v3030 = vadd.f32 %v2783, %v3008
    %3031 = vst.msk [vmem:[#allocation2] sm:$0xff] %vm313, %v3011
    %3032 = vst.msk [vmem:[#allocation2 + $0x8] sm:$0xff] %vm313, %v3012
    %3033 = vst.msk [vmem:[#allocation2 + $0x10] sm:$0xff] %vm313, %v3013
    %3034 = vst.msk [vmem:[#allocation2 + $0x18] sm:$0xff] %vm313, %v3014
    %3035 = vst.msk [vmem:[#allocation2 + $0x20] sm:$0xff] %vm313, %v3015
    %3036 = vst.msk [vmem:[#allocation2 + $0x28] sm:$0xff] %vm313, %v3016
    %3037 = vst.msk [vmem:[#allocation2 + $0x30] sm:$0xff] %vm313, %v3017
    %3038 = vst.msk [vmem:[#allocation2 + $0x38] sm:$0xff] %vm313, %v3018
    %3039 = vst.msk [vmem:[#allocation2 + $0x40] sm:$0xff] %vm313, %v3019
    %3040 = vst.msk [vmem:[#allocation2 + $0x48] sm:$0xff] %vm313, %v3020
    %3041 = vst.msk [vmem:[#allocation2 + $0x50] sm:$0xff] %vm313, %v3021
    %3042 = vst.msk [vmem:[#allocation2 + $0x58] sm:$0xff] %vm313, %v3022
    %3043 = vst.msk [vmem:[#allocation2 + $0x60] sm:$0xff] %vm313, %v3023
    %3044 = vst.msk [vmem:[#allocation2 + $0x68] sm:$0xff] %vm313, %v3024
    %3045 = vst.msk [vmem:[#allocation2 + $0x70] sm:$0xff] %vm313, %v3025
    %3046 = vst.msk [vmem:[#allocation2 + $0x78] sm:$0xff] %vm313, %v3026
    %3047 = vst.msk [vmem:[#allocation2 + $0x80] sm:$0xff] %vm313, %v3027
    %3048 = vst.msk [vmem:[#allocation2 + $0x88] sm:$0xff] %vm313, %v3028
    %3049 = vst.msk [vmem:[#allocation2 + $0x90] sm:$0xff] %vm313, %v3029
    %3050 = vst.msk [vmem:[#allocation2 + $0x98] sm:$0xff] %vm313, %v3030
    %v3051 = vld [vmem:[%s0 + $0xc] sm:$0xc]
    %v3052 = vld [vmem:[%s0 + $0x10] sm:$0xf]
    %v3053 = vld [vmem:[%s0 + $0x14] sm:$0xf]
    %v3054 = vld [vmem:[%s0 + $0x18] sm:$0xf]
    %v3055 = vld [vmem:[%s0 + $0x1c] sm:$0xf]
    %v3056 = vld [vmem:[%s0 + $0x20] sm:$0xf]
    %v3057 = vld [vmem:[%s0 + $0x24] sm:$0xf]
    %v3058 = vld [vmem:[%s0 + $0x28] sm:$0xf]
    %v3059 = vld [vmem:[%s0 + $0x2c] sm:$0xf]
    %v3060 = vld [vmem:[%s0 + $0x30] sm:$0xf]
    %v3061 = vld [vmem:[%s0 + $0x34] sm:$0xf]
    %v3062 = vld [vmem:[%s0 + $0x38] sm:$0xf]
    %v3063 = vld [vmem:[%s0 + $0x3c] sm:$0xf]
    %v3064 = vld [vmem:[%s0 + $0x40] sm:$0xf]
    %v3065 = vld [vmem:[%s0 + $0x44] sm:$0xf]
    %v3066 = vld [vmem:[%s0 + $0x48] sm:$0xf]
    %v3067 = vld [vmem:[%s0 + $0x4c] sm:$0xf]
    %v3068 = vld [vmem:[%s0 + $0x50] sm:$0xf]
    %v3069 = vld [vmem:[%s0 + $0x54] sm:$0xf]
    %v3070 = vld [vmem:[%s0 + $0x58] sm:$0xf]
    %v3071 = vld [vmem:[%s0 + $0x5c] sm:$0x7]
    %v3072 = vld [vmem:[#allocation2] sm:$0xff]
    %v3073 = vld [vmem:[#allocation2 + $0x8] sm:$0xff]
    %v3074 = vld [vmem:[#allocation2 + $0x10] sm:$0xff]
    %v3075 = vld [vmem:[#allocation2 + $0x18] sm:$0xff]
    %v3076 = vld [vmem:[#allocation2 + $0x20] sm:$0xff]
    %v3077 = vld [vmem:[#allocation2 + $0x28] sm:$0xff]
    %v3078 = vld [vmem:[#allocation2 + $0x30] sm:$0xff]
    %v3079 = vld [vmem:[#allocation2 + $0x38] sm:$0xff]
    %v3080 = vld [vmem:[#allocation2 + $0x40] sm:$0xff]
    %v3081 = vld [vmem:[#allocation2 + $0x48] sm:$0xff]
    %v3082 = vld [vmem:[#allocation2 + $0x50] sm:$0xff]
    %v3083 = vld [vmem:[#allocation2 + $0x58] sm:$0xff]
    %v3084 = vld [vmem:[#allocation2 + $0x60] sm:$0xff]
    %v3085 = vld [vmem:[#allocation2 + $0x68] sm:$0xff]
    %v3086 = vld [vmem:[#allocation2 + $0x70] sm:$0xff]
    %v3087 = vld [vmem:[#allocation2 + $0x78] sm:$0xff]
    %v3088 = vld [vmem:[#allocation2 + $0x80] sm:$0xff]
    %v3089 = vld [vmem:[#allocation2 + $0x88] sm:$0xff]
    %v3090 = vld [vmem:[#allocation2 + $0x90] sm:$0xff]
    %v3091 = vld [vmem:[#allocation2 + $0x98] sm:$0xff]
    %s3092 = scalar_lea.vmem [#allocation3], 72
    %v3093 = vld [vmem:[%s3092] sm:$0xf]
    %v3094 = vld [vmem:[%s3092 + $0x4] sm:$0xf]
    %v3116 = vunpack.c.l.b16 %v3051
    %v3117 = vunpack.c.l.b16 %v3052
    %v3118 = vunpack.c.l.b16 %v3053
    %v3119 = vunpack.c.l.b16 %v3054
    %v3120 = vunpack.c.l.b16 %v3055
    %v3121 = vunpack.c.l.b16 %v3056
    %v3122 = vunpack.c.l.b16 %v3057
    %v3123 = vunpack.c.l.b16 %v3058
    %v3124 = vunpack.c.l.b16 %v3059
    %v3125 = vunpack.c.l.b16 %v3060
    %v3126 = vunpack.c.l.b16 %v3061
    %v3127 = vunpack.c.l.b16 %v3062
    %v3128 = vunpack.c.l.b16 %v3063
    %v3129 = vunpack.c.l.b16 %v3064
    %v3130 = vunpack.c.l.b16 %v3065
    %v3131 = vunpack.c.l.b16 %v3066
    %v3132 = vunpack.c.l.b16 %v3067
    %v3133 = vunpack.c.l.b16 %v3068
    %v3134 = vunpack.c.l.b16 %v3069
    %v3135 = vunpack.c.l.b16 %v3070
    %v3136 = vunpack.c.l.b16 %v3071
    %v3137 = vpack.c.b16 %v3117, %v3116
    %v3138 = vpack.c.b16 %v3119, %v3118
    %v3139 = vpack.c.b16 %v3121, %v3120
    %v3140 = vpack.c.b16 %v3123, %v3122
    %v3141 = vpack.c.b16 %v3125, %v3124
    %v3142 = vpack.c.b16 %v3127, %v3126
    %v3143 = vpack.c.b16 %v3129, %v3128
    %v3144 = vpack.c.b16 %v3131, %v3130
    %v3145 = vpack.c.b16 %v3133, %v3132
    %v3146 = vpack.c.b16 %v3135, %v3134
    %v3147 = vpack.c.b16 %v3136, %v3136
    %vm3148 = vsmask.f32 5376
    %v3150 = vshrl.u32 %v3137, 16
    %v3152 = vrot.slane %v3150, 2
    %v3153 = vshll.u32 %v3137, 16
    %v3155 = vrot.slane %v3153, 3
    %v3156 = vor.u32 %v3152, %v3155
    %v3158 = vshrl.u32 %v3138, 16
    %v3160 = vrot.slane %v3158, 2
    %v3161 = vshll.u32 %v3138, 16
    %v3163 = vrot.slane %v3161, 3
    %v3164 = vor.u32 %v3160, %v3163
    %v3165 = vsel %vm3148, %v3156, %v3164
    %v3167 = vshrl.u32 %v3139, 16
    %v3169 = vrot.slane %v3167, 2
    %v3170 = vshll.u32 %v3139, 16
    %v3172 = vrot.slane %v3170, 3
    %v3173 = vor.u32 %v3169, %v3172
    %v3174 = vsel %vm3148, %v3164, %v3173
    %v3176 = vshrl.u32 %v3140, 16
    %v3178 = vrot.slane %v3176, 2
    %v3179 = vshll.u32 %v3140, 16
    %v3181 = vrot.slane %v3179, 3
    %v3182 = vor.u32 %v3178, %v3181
    %v3183 = vsel %vm3148, %v3173, %v3182
    %v3185 = vshrl.u32 %v3141, 16
    %v3187 = vrot.slane %v3185, 2
    %v3188 = vshll.u32 %v3141, 16
    %v3190 = vrot.slane %v3188, 3
    %v3191 = vor.u32 %v3187, %v3190
    %v3192 = vsel %vm3148, %v3182, %v3191
    %v3194 = vshrl.u32 %v3142, 16
    %v3196 = vrot.slane %v3194, 2
    %v3197 = vshll.u32 %v3142, 16
    %v3199 = vrot.slane %v3197, 3
    %v3200 = vor.u32 %v3196, %v3199
    %v3201 = vsel %vm3148, %v3191, %v3200
    %v3203 = vshrl.u32 %v3143, 16
    %v3205 = vrot.slane %v3203, 2
    %v3206 = vshll.u32 %v3143, 16
    %v3208 = vrot.slane %v3206, 3
    %v3209 = vor.u32 %v3205, %v3208
    %v3210 = vsel %vm3148, %v3200, %v3209
    %v3212 = vshrl.u32 %v3144, 16
    %v3214 = vrot.slane %v3212, 2
    %v3215 = vshll.u32 %v3144, 16
    %v3217 = vrot.slane %v3215, 3
    %v3218 = vor.u32 %v3214, %v3217
    %v3219 = vsel %vm3148, %v3209, %v3218
    %v3221 = vshrl.u32 %v3145, 16
    %v3223 = vrot.slane %v3221, 2
    %v3224 = vshll.u32 %v3145, 16
    %v3226 = vrot.slane %v3224, 3
    %v3227 = vor.u32 %v3223, %v3226
    %v3228 = vsel %vm3148, %v3218, %v3227
    %v3230 = vshrl.u32 %v3146, 16
    %v3232 = vrot.slane %v3230, 2
    %v3233 = vshll.u32 %v3146, 16
    %v3235 = vrot.slane %v3233, 3
    %v3236 = vor.u32 %v3232, %v3235
    %v3237 = vsel %vm3148, %v3227, %v3236
    %v3239 = vshrl.u32 %v3147, 16
    %v3241 = vrot.slane %v3239, 2
    %v3242 = vshll.u32 %v3147, 16
    %v3244 = vrot.slane %v3242, 3
    %v3245 = vor.u32 %v3241, %v3244
    %v3246 = vsel %vm3148, %v3236, %v3245
    %v3249 = vunpack.c.l.b16 %v3093
    %v3250 = vunpack.c.l.b16 %v3094
    %v3251 = vpack.c.b16 %v3250, %v3249
    %v3254 = vsel %vm149, %v3165, 0
    %v3257 = vsel %vm149, %v3174, 0
    %v3260 = vsel %vm149, %v3183, 0
    %v3263 = vsel %vm149, %v3192, 0
    %v3266 = vsel %vm149, %v3201, 0
    %v3269 = vsel %vm149, %v3210, 0
    %v3272 = vsel %vm149, %v3219, 0
    %v3275 = vsel %vm149, %v3228, 0
    %v3278 = vsel %vm149, %v3237, 0
    %v3281 = vsel %vm149, %v3246, 0
    %3283 = vmatprep.subr.bf16.mxu0 0
    %3284 = vmatpush1.bf16.msra.mxu0 %v3251
    %3285 = vmatprep.subr.bf16.mxu0 0
    %3286 = vmatpush1.bf16.msra.mxu0 0
    %3287 = vmatprep.subr.bf16.mxu0 0
    %3288 = vmatpush1.bf16.msra.mxu0 0
    %3289 = vmatprep.subr.bf16.mxu0 0
    %3290 = vmatpush1.bf16.msra.mxu0 0
    %3291 = vmatprep.subr.bf16.mxu0 0
    %3292 = vmatpush1.bf16.msra.mxu0 0
    %3293 = vmatprep.subr.bf16.mxu0 0
    %3294 = vmatpush1.bf16.msra.mxu0 0
    %3295 = vmatprep.subr.bf16.mxu0 0
    %3296 = vmatpush1.bf16.msra.mxu0 0
    %3297 = vmatprep.subr.bf16.mxu0 0
    %3298 = vmatpush1.bf16.msra.mxu0 0
    %3299 = vmatprep.subr.bf16.mxu0 0
    %3300 = vmatpush1.bf16.msra.mxu0 0
    %3301 = vmatprep.subr.bf16.mxu0 0
    %3302 = vmatpush1.bf16.msra.mxu0 0
    %3303 = vmatprep.subr.bf16.mxu0 0
    %3304 = vmatpush1.bf16.msra.mxu0 0
    %3305 = vmatprep.subr.bf16.mxu0 0
    %3306 = vmatpush1.bf16.msra.mxu0 0
    %3307 = vmatprep.subr.bf16.mxu0 0
    %3308 = vmatpush1.bf16.msra.mxu0 0
    %3309 = vmatprep.subr.bf16.mxu0 0
    %3310 = vmatpush1.bf16.msra.mxu0 0
    %3311 = vmatprep.subr.bf16.mxu0 0
    %3312 = vmatpush1.bf16.msra.mxu0 0
    %3313 = vmatprep.subr.bf16.mxu0 0
    %3314 = vmatpush1.bf16.msra.mxu0 0
    %3315 = vmatprep.mubr.bf16.mxu0 0
    %3316 = vmatmul.mubr.bf16.gmra.mrb[0].mxu0 %v3254
    %v3317 = vpop.f32.mrb[0].mxu0
    %v3318 = vadd.f32 0.0, %v3317
    %v3319 = vpop.f32.mrb[0].mxu0
    %v3320 = vpop.f32.mrb[0].mxu0
    %v3321 = vadd.f32 0.0, %v3320
    %v3322 = vpop.f32.mrb[0].mxu0
    %3323 = vmatprep.mubr.bf16.mxu0 0
    %3324 = vmatmul.mubr.bf16.gmra.mrb[0].mxu0 %v3257
    %v3325 = vpop.f32.mrb[0].mxu0
    %v3326 = vadd.f32 0.0, %v3325
    %v3327 = vpop.f32.mrb[0].mxu0
    %v3328 = vpop.f32.mrb[0].mxu0
    %v3329 = vadd.f32 0.0, %v3328
    %v3330 = vpop.f32.mrb[0].mxu0
    %3331 = vmatprep.mubr.bf16.mxu0 0
    %3332 = vmatmul.mubr.bf16.gmra.mrb[0].mxu0 %v3260
    %v3333 = vpop.f32.mrb[0].mxu0
    %v3334 = vadd.f32 0.0, %v3333
    %v3335 = vpop.f32.mrb[0].mxu0
    %v3336 = vpop.f32.mrb[0].mxu0
    %v3337 = vadd.f32 0.0, %v3336
    %v3338 = vpop.f32.mrb[0].mxu0
    %3339 = vmatprep.mubr.bf16.mxu0 0
    %3340 = vmatmul.mubr.bf16.gmra.mrb[0].mxu0 %v3263
    %v3341 = vpop.f32.mrb[0].mxu0
    %v3342 = vadd.f32 0.0, %v3341
    %v3343 = vpop.f32.mrb[0].mxu0
    %v3344 = vpop.f32.mrb[0].mxu0
    %v3345 = vadd.f32 0.0, %v3344
    %v3346 = vpop.f32.mrb[0].mxu0
    %3347 = vmatprep.mubr.bf16.mxu0 0
    %3348 = vmatmul.mubr.bf16.gmra.mrb[0].mxu0 %v3266
    %v3349 = vpop.f32.mrb[0].mxu0
    %v3350 = vadd.f32 0.0, %v3349
    %v3351 = vpop.f32.mrb[0].mxu0
    %v3352 = vpop.f32.mrb[0].mxu0
    %v3353 = vadd.f32 0.0, %v3352
    %v3354 = vpop.f32.mrb[0].mxu0
    %3355 = vmatprep.mubr.bf16.mxu0 0
    %3356 = vmatmul.mubr.bf16.gmra.mrb[0].mxu0 %v3269
    %v3357 = vpop.f32.mrb[0].mxu0
    %v3358 = vadd.f32 0.0, %v3357
    %v3359 = vpop.f32.mrb[0].mxu0
    %v3360 = vpop.f32.mrb[0].mxu0
    %v3361 = vadd.f32 0.0, %v3360
    %v3362 = vpop.f32.mrb[0].mxu0
    %3363 = vmatprep.mubr.bf16.mxu0 0
    %3364 = vmatmul.mubr.bf16.gmra.mrb[0].mxu0 %v3272
    %v3365 = vpop.f32.mrb[0].mxu0
    %v3366 = vadd.f32 0.0, %v3365
    %v3367 = vpop.f32.mrb[0].mxu0
    %v3368 = vpop.f32.mrb[0].mxu0
    %v3369 = vadd.f32 0.0, %v3368
    %v3370 = vpop.f32.mrb[0].mxu0
    %3371 = vmatprep.mubr.bf16.mxu0 0
    %3372 = vmatmul.mubr.bf16.gmra.mrb[0].mxu0 %v3275
    %v3373 = vpop.f32.mrb[0].mxu0
    %v3374 = vadd.f32 0.0, %v3373
    %v3375 = vpop.f32.mrb[0].mxu0
    %v3376 = vpop.f32.mrb[0].mxu0
    %v3377 = vadd.f32 0.0, %v3376
    %v3378 = vpop.f32.mrb[0].mxu0
    %3379 = vmatprep.mubr.bf16.mxu0 0
    %3380 = vmatmul.mubr.bf16.gmra.mrb[0].mxu0 %v3278
    %v3381 = vpop.f32.mrb[0].mxu0
    %v3382 = vadd.f32 0.0, %v3381
    %v3383 = vpop.f32.mrb[0].mxu0
    %v3384 = vpop.f32.mrb[0].mxu0
    %v3385 = vadd.f32 0.0, %v3384
    %v3386 = vpop.f32.mrb[0].mxu0
    %3387 = vmatprep.mubr.bf16.mxu0 0
    %3388 = vmatmul.mubr.bf16.gmra.mrb[0].mxu0 %v3281
    %v3389 = vpop.f32.mrb[0].mxu0
    %v3390 = vadd.f32 0.0, %v3389
    %v3391 = vpop.f32.mrb[0].mxu0
    %v3392 = vpop.f32.mrb[0].mxu0
    %v3393 = vadd.f32 0.0, %v3392
    %v3394 = vpop.f32.mrb[0].mxu0
    %3395 = vdwg.mxu0
    %v3396 = vadd.f32 %v3072, %v3318
    %v3397 = vadd.f32 %v3073, %v3321
    %v3398 = vadd.f32 %v3074, %v3326
    %v3399 = vadd.f32 %v3075, %v3329
    %v3400 = vadd.f32 %v3076, %v3334
    %v3401 = vadd.f32 %v3077, %v3337
    %v3402 = vadd.f32 %v3078, %v3342
    %v3403 = vadd.f32 %v3079, %v3345
    %v3404 = vadd.f32 %v3080, %v3350
    %v3405 = vadd.f32 %v3081, %v3353
    %v3406 = vadd.f32 %v3082, %v3358
    %v3407 = vadd.f32 %v3083, %v3361
    %v3408 = vadd.f32 %v3084, %v3366
    %v3409 = vadd.f32 %v3085, %v3369
    %v3410 = vadd.f32 %v3086, %v3374
    %v3411 = vadd.f32 %v3087, %v3377
    %v3412 = vadd.f32 %v3088, %v3382
    %v3413 = vadd.f32 %v3089, %v3385
    %v3414 = vadd.f32 %v3090, %v3390
    %v3415 = vadd.f32 %v3091, %v3393
    %3416 = vst.msk [vmem:[#allocation2] sm:$0xff] %vm313, %v3396
    %3417 = vst.msk [vmem:[#allocation2 + $0x8] sm:$0xff] %vm313, %v3397
    %3418 = vst.msk [vmem:[#allocation2 + $0x10] sm:$0xff] %vm313, %v3398
    %3419 = vst.msk [vmem:[#allocation2 + $0x18] sm:$0xff] %vm313, %v3399
    %3420 = vst.msk [vmem:[#allocation2 + $0x20] sm:$0xff] %vm313, %v3400
    %3421 = vst.msk [vmem:[#allocation2 + $0x28] sm:$0xff] %vm313, %v3401
    %3422 = vst.msk [vmem:[#allocation2 + $0x30] sm:$0xff] %vm313, %v3402
    %3423 = vst.msk [vmem:[#allocation2 + $0x38] sm:$0xff] %vm313, %v3403
    %3424 = vst.msk [vmem:[#allocation2 + $0x40] sm:$0xff] %vm313, %v3404
    %3425 = vst.msk [vmem:[#allocation2 + $0x48] sm:$0xff] %vm313, %v3405
    %3426 = vst.msk [vmem:[#allocation2 + $0x50] sm:$0xff] %vm313, %v3406
    %3427 = vst.msk [vmem:[#allocation2 + $0x58] sm:$0xff] %vm313, %v3407
    %3428 = vst.msk [vmem:[#allocation2 + $0x60] sm:$0xff] %vm313, %v3408
    %3429 = vst.msk [vmem:[#allocation2 + $0x68] sm:$0xff] %vm313, %v3409
    %3430 = vst.msk [vmem:[#allocation2 + $0x70] sm:$0xff] %vm313, %v3410
    %3431 = vst.msk [vmem:[#allocation2 + $0x78] sm:$0xff] %vm313, %v3411
    %3432 = vst.msk [vmem:[#allocation2 + $0x80] sm:$0xff] %vm313, %v3412
    %3433 = vst.msk [vmem:[#allocation2 + $0x88] sm:$0xff] %vm313, %v3413
    %3434 = vst.msk [vmem:[#allocation2 + $0x90] sm:$0xff] %vm313, %v3414
    %3435 = vst.msk [vmem:[#allocation2 + $0x98] sm:$0xff] %vm313, %v3415
    %v3436 = vld [vmem:[%s0 + $0xc] sm:$0x8]
    %v3437 = vld [vmem:[%s0 + $0x10] sm:$0xf]
    %v3438 = vld [vmem:[%s0 + $0x14] sm:$0xf]
    %v3439 = vld [vmem:[%s0 + $0x18] sm:$0xf]
    %v3440 = vld [vmem:[%s0 + $0x1c] sm:$0xf]
    %v3441 = vld [vmem:[%s0 + $0x20] sm:$0xf]
    %v3442 = vld [vmem:[%s0 + $0x24] sm:$0xf]
    %v3443 = vld [vmem:[%s0 + $0x28] sm:$0xf]
    %v3444 = vld [vmem:[%s0 + $0x2c] sm:$0xf]
    %v3445 = vld [vmem:[%s0 + $0x30] sm:$0xf]
    %v3446 = vld [vmem:[%s0 + $0x34] sm:$0xf]
    %v3447 = vld [vmem:[%s0 + $0x38] sm:$0xf]
    %v3448 = vld [vmem:[%s0 + $0x3c] sm:$0xf]
    %v3449 = vld [vmem:[%s0 + $0x40] sm:$0xf]
    %v3450 = vld [vmem:[%s0 + $0x44] sm:$0xf]
    %v3451 = vld [vmem:[%s0 + $0x48] sm:$0xf]
    %v3452 = vld [vmem:[%s0 + $0x4c] sm:$0xf]
    %v3453 = vld [vmem:[%s0 + $0x50] sm:$0xf]
    %v3454 = vld [vmem:[%s0 + $0x54] sm:$0xf]
    %v3455 = vld [vmem:[%s0 + $0x58] sm:$0xf]
    %v3456 = vld [vmem:[%s0 + $0x5c] sm:$0x7]
    %v3457 = vld [vmem:[#allocation2] sm:$0xff]
    %v3458 = vld [vmem:[#allocation2 + $0x8] sm:$0xff]
    %v3459 = vld [vmem:[#allocation2 + $0x10] sm:$0xff]
    %v3460 = vld [vmem:[#allocation2 + $0x18] sm:$0xff]
    %v3461 = vld [vmem:[#allocation2 + $0x20] sm:$0xff]
    %v3462 = vld [vmem:[#allocation2 + $0x28] sm:$0xff]
    %v3463 = vld [vmem:[#allocation2 + $0x30] sm:$0xff]
    %v3464 = vld [vmem:[#allocation2 + $0x38] sm:$0xff]
    %v3465 = vld [vmem:[#allocation2 + $0x40] sm:$0xff]
    %v3466 = vld [vmem:[#allocation2 + $0x48] sm:$0xff]
    %v3467 = vld [vmem:[#allocation2 + $0x50] sm:$0xff]
    %v3468 = vld [vmem:[#allocation2 + $0x58] sm:$0xff]
    %v3469 = vld [vmem:[#allocation2 + $0x60] sm:$0xff]
    %v3470 = vld [vmem:[#allocation2 + $0x68] sm:$0xff]
    %v3471 = vld [vmem:[#allocation2 + $0x70] sm:$0xff]
    %v3472 = vld [vmem:[#allocation2 + $0x78] sm:$0xff]
    %v3473 = vld [vmem:[#allocation2 + $0x80] sm:$0xff]
    %v3474 = vld [vmem:[#allocation2 + $0x88] sm:$0xff]
    %v3475 = vld [vmem:[#allocation2 + $0x90] sm:$0xff]
    %v3476 = vld [vmem:[#allocation2 + $0x98] sm:$0xff]
    %s3477 = scalar_lea.vmem [#allocation3], 80
    %v3478 = vld [vmem:[%s3477] sm:$0xf]
    %v3479 = vld [vmem:[%s3477 + $0x4] sm:$0xf]
    %v3501 = vunpack.c.l.b16 %v3436
    %v3502 = vunpack.c.l.b16 %v3437
    %v3503 = vunpack.c.l.b16 %v3438
    %v3504 = vunpack.c.l.b16 %v3439
    %v3505 = vunpack.c.l.b16 %v3440
    %v3506 = vunpack.c.l.b16 %v3441
    %v3507 = vunpack.c.l.b16 %v3442
    %v3508 = vunpack.c.l.b16 %v3443
    %v3509 = vunpack.c.l.b16 %v3444
    %v3510 = vunpack.c.l.b16 %v3445
    %v3511 = vunpack.c.l.b16 %v3446
    %v3512 = vunpack.c.l.b16 %v3447
    %v3513 = vunpack.c.l.b16 %v3448
    %v3514 = vunpack.c.l.b16 %v3449
    %v3515 = vunpack.c.l.b16 %v3450
    %v3516 = vunpack.c.l.b16 %v3451
    %v3517 = vunpack.c.l.b16 %v3452
    %v3518 = vunpack.c.l.b16 %v3453
    %v3519 = vunpack.c.l.b16 %v3454
    %v3520 = vunpack.c.l.b16 %v3455
    %v3521 = vunpack.c.l.b16 %v3456
    %v3522 = vpack.c.b16 %v3502, %v3501
    %v3523 = vpack.c.b16 %v3504, %v3503
    %v3524 = vpack.c.b16 %v3506, %v3505
    %v3525 = vpack.c.b16 %v3508, %v3507
    %v3526 = vpack.c.b16 %v3510, %v3509
    %v3527 = vpack.c.b16 %v3512, %v3511
    %v3528 = vpack.c.b16 %v3514, %v3513
    %v3529 = vpack.c.b16 %v3516, %v3515
    %v3530 = vpack.c.b16 %v3518, %v3517
    %v3531 = vpack.c.b16 %v3520, %v3519
    %v3532 = vpack.c.b16 %v3521, %v3521
    %v3533 = vrot.slane %v3522, 3
    %v3534 = vrot.slane %v3523, 3
    %v3535 = vsel %vm1495, %v3533, %v3534
    %v3536 = vrot.slane %v3524, 3
    %v3537 = vsel %vm1495, %v3534, %v3536
    %v3538 = vrot.slane %v3525, 3
    %v3539 = vsel %vm1495, %v3536, %v3538
    %v3540 = vrot.slane %v3526, 3
    %v3541 = vsel %vm1495, %v3538, %v3540
    %v3542 = vrot.slane %v3527, 3
    %v3543 = vsel %vm1495, %v3540, %v3542
    %v3544 = vrot.slane %v3528, 3
    %v3545 = vsel %vm1495, %v3542, %v3544
    %v3546 = vrot.slane %v3529, 3
    %v3547 = vsel %vm1495, %v3544, %v3546
    %v3548 = vrot.slane %v3530, 3
    %v3549 = vsel %vm1495, %v3546, %v3548
    %v3550 = vrot.slane %v3531, 3
    %v3551 = vsel %vm1495, %v3548, %v3550
    %v3552 = vrot.slane %v3532, 3
    %v3553 = vsel %vm1495, %v3550, %v3552
    %v3556 = vunpack.c.l.b16 %v3478
    %v3557 = vunpack.c.l.b16 %v3479
    %v3558 = vpack.c.b16 %v3557, %v3556
    %v3561 = vsel %vm149, %v3535, 0
    %v3564 = vsel %vm149, %v3537, 0
    %v3567 = vsel %vm149, %v3539, 0
    %v3570 = vsel %vm149, %v3541, 0
    %v3573 = vsel %vm149, %v3543, 0
    %v3576 = vsel %vm149, %v3545, 0
    %v3579 = vsel %vm149, %v3547, 0
    %v3582 = vsel %vm149, %v3549, 0
    %v3585 = vsel %vm149, %v3551, 0
    %v3588 = vsel %vm149, %v3553, 0
    %3590 = vmatprep.subr.bf16.mxu0 0
    %3591 = vmatpush1.bf16.msra.mxu0 %v3558
    %3592 = vmatprep.subr.bf16.mxu0 0
    %3593 = vmatpush1.bf16.msra.mxu0 0
    %3594 = vmatprep.subr.bf16.mxu0 0
    %3595 = vmatpush1.bf16.msra.mxu0 0
    %3596 = vmatprep.subr.bf16.mxu0 0
    %3597 = vmatpush1.bf16.msra.mxu0 0
    %3598 = vmatprep.subr.bf16.mxu0 0
    %3599 = vmatpush1.bf16.msra.mxu0 0
    %3600 = vmatprep.subr.bf16.mxu0 0
    %3601 = vmatpush1.bf16.msra.mxu0 0
    %3602 = vmatprep.subr.bf16.mxu0 0
    %3603 = vmatpush1.bf16.msra.mxu0 0
    %3604 = vmatprep.subr.bf16.mxu0 0
    %3605 = vmatpush1.bf16.msra.mxu0 0
    %3606 = vmatprep.subr.bf16.mxu0 0
    %3607 = vmatpush1.bf16.msra.mxu0 0
    %3608 = vmatprep.subr.bf16.mxu0 0
    %3609 = vmatpush1.bf16.msra.mxu0 0
    %3610 = vmatprep.subr.bf16.mxu0 0
    %3611 = vmatpush1.bf16.msra.mxu0 0
    %3612 = vmatprep.subr.bf16.mxu0 0
    %3613 = vmatpush1.bf16.msra.mxu0 0
    %3614 = vmatprep.subr.bf16.mxu0 0
    %3615 = vmatpush1.bf16.msra.mxu0 0
    %3616 = vmatprep.subr.bf16.mxu0 0
    %3617 = vmatpush1.bf16.msra.mxu0 0
    %3618 = vmatprep.subr.bf16.mxu0 0
    %3619 = vmatpush1.bf16.msra.mxu0 0
    %3620 = vmatprep.subr.bf16.mxu0 0
    %3621 = vmatpush1.bf16.msra.mxu0 0
    %3622 = vmatprep.mubr.bf16.mxu0 0
    %3623 = vmatmul.mubr.bf16.gmra.mrb[0].mxu0 %v3561
    %v3624 = vpop.f32.mrb[0].mxu0
    %v3625 = vadd.f32 0.0, %v3624
    %v3626 = vpop.f32.mrb[0].mxu0
    %v3627 = vpop.f32.mrb[0].mxu0
    %v3628 = vadd.f32 0.0, %v3627
    %v3629 = vpop.f32.mrb[0].mxu0
    %3630 = vmatprep.mubr.bf16.mxu0 0
    %3631 = vmatmul.mubr.bf16.gmra.mrb[0].mxu0 %v3564
    %v3632 = vpop.f32.mrb[0].mxu0
    %v3633 = vadd.f32 0.0, %v3632
    %v3634 = vpop.f32.mrb[0].mxu0
    %v3635 = vpop.f32.mrb[0].mxu0
    %v3636 = vadd.f32 0.0, %v3635
    %v3637 = vpop.f32.mrb[0].mxu0
    %3638 = vmatprep.mubr.bf16.mxu0 0
    %3639 = vmatmul.mubr.bf16.gmra.mrb[0].mxu0 %v3567
    %v3640 = vpop.f32.mrb[0].mxu0
    %v3641 = vadd.f32 0.0, %v3640
    %v3642 = vpop.f32.mrb[0].mxu0
    %v3643 = vpop.f32.mrb[0].mxu0
    %v3644 = vadd.f32 0.0, %v3643
    %v3645 = vpop.f32.mrb[0].mxu0
    %3646 = vmatprep.mubr.bf16.mxu0 0
    %3647 = vmatmul.mubr.bf16.gmra.mrb[0].mxu0 %v3570
    %v3648 = vpop.f32.mrb[0].mxu0
    %v3649 = vadd.f32 0.0, %v3648
    %v3650 = vpop.f32.mrb[0].mxu0
    %v3651 = vpop.f32.mrb[0].mxu0
    %v3652 = vadd.f32 0.0, %v3651
    %v3653 = vpop.f32.mrb[0].mxu0
    %3654 = vmatprep.mubr.bf16.mxu0 0
    %3655 = vmatmul.mubr.bf16.gmra.mrb[0].mxu0 %v3573
    %v3656 = vpop.f32.mrb[0].mxu0
    %v3657 = vadd.f32 0.0, %v3656
    %v3658 = vpop.f32.mrb[0].mxu0
    %v3659 = vpop.f32.mrb[0].mxu0
    %v3660 = vadd.f32 0.0, %v3659
    %v3661 = vpop.f32.mrb[0].mxu0
    %3662 = vmatprep.mubr.bf16.mxu0 0
    %3663 = vmatmul.mubr.bf16.gmra.mrb[0].mxu0 %v3576
    %v3664 = vpop.f32.mrb[0].mxu0
    %v3665 = vadd.f32 0.0, %v3664
    %v3666 = vpop.f32.mrb[0].mxu0
    %v3667 = vpop.f32.mrb[0].mxu0
    %v3668 = vadd.f32 0.0, %v3667
    %v3669 = vpop.f32.mrb[0].mxu0
    %3670 = vmatprep.mubr.bf16.mxu0 0
    %3671 = vmatmul.mubr.bf16.gmra.mrb[0].mxu0 %v3579
    %v3672 = vpop.f32.mrb[0].mxu0
    %v3673 = vadd.f32 0.0, %v3672
    %v3674 = vpop.f32.mrb[0].mxu0
    %v3675 = vpop.f32.mrb[0].mxu0
    %v3676 = vadd.f32 0.0, %v3675
    %v3677 = vpop.f32.mrb[0].mxu0
    %3678 = vmatprep.mubr.bf16.mxu0 0
    %3679 = vmatmul.mubr.bf16.gmra.mrb[0].mxu0 %v3582
    %v3680 = vpop.f32.mrb[0].mxu0
    %v3681 = vadd.f32 0.0, %v3680
    %v3682 = vpop.f32.mrb[0].mxu0
    %v3683 = vpop.f32.mrb[0].mxu0
    %v3684 = vadd.f32 0.0, %v3683
    %v3685 = vpop.f32.mrb[0].mxu0
    %3686 = vmatprep.mubr.bf16.mxu0 0
    %3687 = vmatmul.mubr.bf16.gmra.mrb[0].mxu0 %v3585
    %v3688 = vpop.f32.mrb[0].mxu0
    %v3689 = vadd.f32 0.0, %v3688
    %v3690 = vpop.f32.mrb[0].mxu0
    %v3691 = vpop.f32.mrb[0].mxu0
    %v3692 = vadd.f32 0.0, %v3691
    %v3693 = vpop.f32.mrb[0].mxu0
    %3694 = vmatprep.mubr.bf16.mxu0 0
    %3695 = vmatmul.mubr.bf16.gmra.mrb[0].mxu0 %v3588
    %v3696 = vpop.f32.mrb[0].mxu0
    %v3697 = vadd.f32 0.0, %v3696
    %v3698 = vpop.f32.mrb[0].mxu0
    %v3699 = vpop.f32.mrb[0].mxu0
    %v3700 = vadd.f32 0.0, %v3699
    %v3701 = vpop.f32.mrb[0].mxu0
    %3702 = vdwg.mxu0
    %v3703 = vadd.f32 %v3457, %v3625
    %v3704 = vadd.f32 %v3458, %v3628
    %v3705 = vadd.f32 %v3459, %v3633
    %v3706 = vadd.f32 %v3460, %v3636
    %v3707 = vadd.f32 %v3461, %v3641
    %v3708 = vadd.f32 %v3462, %v3644
    %v3709 = vadd.f32 %v3463, %v3649
    %v3710 = vadd.f32 %v3464, %v3652
    %v3711 = vadd.f32 %v3465, %v3657
    %v3712 = vadd.f32 %v3466, %v3660
    %v3713 = vadd.f32 %v3467, %v3665
    %v3714 = vadd.f32 %v3468, %v3668
    %v3715 = vadd.f32 %v3469, %v3673
    %v3716 = vadd.f32 %v3470, %v3676
    %v3717 = vadd.f32 %v3471, %v3681
    %v3718 = vadd.f32 %v3472, %v3684
    %v3719 = vadd.f32 %v3473, %v3689
    %v3720 = vadd.f32 %v3474, %v3692
    %v3721 = vadd.f32 %v3475, %v3697
    %v3722 = vadd.f32 %v3476, %v3700
    %3723 = vst.msk [vmem:[#allocation2] sm:$0xff] %vm313, %v3703
    %3724 = vst.msk [vmem:[#allocation2 + $0x8] sm:$0xff] %vm313, %v3704
    %3725 = vst.msk [vmem:[#allocation2 + $0x10] sm:$0xff] %vm313, %v3705
    %3726 = vst.msk [vmem:[#allocation2 + $0x18] sm:$0xff] %vm313, %v3706
    %3727 = vst.msk [vmem:[#allocation2 + $0x20] sm:$0xff] %vm313, %v3707
    %3728 = vst.msk [vmem:[#allocation2 + $0x28] sm:$0xff] %vm313, %v3708
    %3729 = vst.msk [vmem:[#allocation2 + $0x30] sm:$0xff] %vm313, %v3709
    %3730 = vst.msk [vmem:[#allocation2 + $0x38] sm:$0xff] %vm313, %v3710
    %3731 = vst.msk [vmem:[#allocation2 + $0x40] sm:$0xff] %vm313, %v3711
    %3732 = vst.msk [vmem:[#allocation2 + $0x48] sm:$0xff] %vm313, %v3712
    %3733 = vst.msk [vmem:[#allocation2 + $0x50] sm:$0xff] %vm313, %v3713
    %3734 = vst.msk [vmem:[#allocation2 + $0x58] sm:$0xff] %vm313, %v3714
    %3735 = vst.msk [vmem:[#allocation2 + $0x60] sm:$0xff] %vm313, %v3715
    %3736 = vst.msk [vmem:[#allocation2 + $0x68] sm:$0xff] %vm313, %v3716
    %3737 = vst.msk [vmem:[#allocation2 + $0x70] sm:$0xff] %vm313, %v3717
    %3738 = vst.msk [vmem:[#allocation2 + $0x78] sm:$0xff] %vm313, %v3718
    %3739 = vst.msk [vmem:[#allocation2 + $0x80] sm:$0xff] %vm313, %v3719
    %3740 = vst.msk [vmem:[#allocation2 + $0x88] sm:$0xff] %vm313, %v3720
    %3741 = vst.msk [vmem:[#allocation2 + $0x90] sm:$0xff] %vm313, %v3721
    %3742 = vst.msk [vmem:[#allocation2 + $0x98] sm:$0xff] %vm313, %v3722
    %v3743 = vld [vmem:[%s0 + $0xc] sm:$0x8]
    %v3744 = vld [vmem:[%s0 + $0x10] sm:$0xf]
    %v3745 = vld [vmem:[%s0 + $0x14] sm:$0xf]
    %v3746 = vld [vmem:[%s0 + $0x18] sm:$0xf]
    %v3747 = vld [vmem:[%s0 + $0x1c] sm:$0xf]
    %v3748 = vld [vmem:[%s0 + $0x20] sm:$0xf]
    %v3749 = vld [vmem:[%s0 + $0x24] sm:$0xf]
    %v3750 = vld [vmem:[%s0 + $0x28] sm:$0xf]
    %v3751 = vld [vmem:[%s0 + $0x2c] sm:$0xf]
    %v3752 = vld [vmem:[%s0 + $0x30] sm:$0xf]
    %v3753 = vld [vmem:[%s0 + $0x34] sm:$0xf]
    %v3754 = vld [vmem:[%s0 + $0x38] sm:$0xf]
    %v3755 = vld [vmem:[%s0 + $0x3c] sm:$0xf]
    %v3756 = vld [vmem:[%s0 + $0x40] sm:$0xf]
    %v3757 = vld [vmem:[%s0 + $0x44] sm:$0xf]
    %v3758 = vld [vmem:[%s0 + $0x48] sm:$0xf]
    %v3759 = vld [vmem:[%s0 + $0x4c] sm:$0xf]
    %v3760 = vld [vmem:[%s0 + $0x50] sm:$0xf]
    %v3761 = vld [vmem:[%s0 + $0x54] sm:$0xf]
    %v3762 = vld [vmem:[%s0 + $0x58] sm:$0xf]
    %v3763 = vld [vmem:[%s0 + $0x5c] sm:$0xf]
    %v3764 = vld [vmem:[#allocation2] sm:$0xff]
    %v3765 = vld [vmem:[#allocation2 + $0x8] sm:$0xff]
    %v3766 = vld [vmem:[#allocation2 + $0x10] sm:$0xff]
    %v3767 = vld [vmem:[#allocation2 + $0x18] sm:$0xff]
    %v3768 = vld [vmem:[#allocation2 + $0x20] sm:$0xff]
    %v3769 = vld [vmem:[#allocation2 + $0x28] sm:$0xff]
    %v3770 = vld [vmem:[#allocation2 + $0x30] sm:$0xff]
    %v3771 = vld [vmem:[#allocation2 + $0x38] sm:$0xff]
    %v3772 = vld [vmem:[#allocation2 + $0x40] sm:$0xff]
    %v3773 = vld [vmem:[#allocation2 + $0x48] sm:$0xff]
    %v3774 = vld [vmem:[#allocation2 + $0x50] sm:$0xff]
    %v3775 = vld [vmem:[#allocation2 + $0x58] sm:$0xff]
    %v3776 = vld [vmem:[#allocation2 + $0x60] sm:$0xff]
    %v3777 = vld [vmem:[#allocation2 + $0x68] sm:$0xff]
    %v3778 = vld [vmem:[#allocation2 + $0x70] sm:$0xff]
    %v3779 = vld [vmem:[#allocation2 + $0x78] sm:$0xff]
    %v3780 = vld [vmem:[#allocation2 + $0x80] sm:$0xff]
    %v3781 = vld [vmem:[#allocation2 + $0x88] sm:$0xff]
    %v3782 = vld [vmem:[#allocation2 + $0x90] sm:$0xff]
    %v3783 = vld [vmem:[#allocation2 + $0x98] sm:$0xff]
    %s3784 = scalar_lea.vmem [#allocation3], 88
    %v3785 = vld [vmem:[%s3784] sm:$0xf]
    %v3786 = vld [vmem:[%s3784 + $0x4] sm:$0xf]
    %v3808 = vunpack.c.l.b16 %v3743
    %v3809 = vunpack.c.l.b16 %v3744
    %v3810 = vunpack.c.l.b16 %v3745
    %v3811 = vunpack.c.l.b16 %v3746
    %v3812 = vunpack.c.l.b16 %v3747
    %v3813 = vunpack.c.l.b16 %v3748
    %v3814 = vunpack.c.l.b16 %v3749
    %v3815 = vunpack.c.l.b16 %v3750
    %v3816 = vunpack.c.l.b16 %v3751
    %v3817 = vunpack.c.l.b16 %v3752
    %v3818 = vunpack.c.l.b16 %v3753
    %v3819 = vunpack.c.l.b16 %v3754
    %v3820 = vunpack.c.l.b16 %v3755
    %v3821 = vunpack.c.l.b16 %v3756
    %v3822 = vunpack.c.l.b16 %v3757
    %v3823 = vunpack.c.l.b16 %v3758
    %v3824 = vunpack.c.l.b16 %v3759
    %v3825 = vunpack.c.l.b16 %v3760
    %v3826 = vunpack.c.l.b16 %v3761
    %v3827 = vunpack.c.l.b16 %v3762
    %v3828 = vunpack.c.l.b16 %v3763
    %v3829 = vpack.c.b16 %v3809, %v3808
    %v3830 = vpack.c.b16 %v3811, %v3810
    %v3831 = vpack.c.b16 %v3813, %v3812
    %v3832 = vpack.c.b16 %v3815, %v3814
    %v3833 = vpack.c.b16 %v3817, %v3816
    %v3834 = vpack.c.b16 %v3819, %v3818
    %v3835 = vpack.c.b16 %v3821, %v3820
    %v3836 = vpack.c.b16 %v3823, %v3822
    %v3837 = vpack.c.b16 %v3825, %v3824
    %v3838 = vpack.c.b16 %v3827, %v3826
    %v3839 = vpack.c.b16 %v3828, %v3828
    %v3841 = vshrl.u32 %v3829, 16
    %v3843 = vrot.slane %v3841, 3
    %v3844 = vshll.u32 %v3829, 16
    %v3846 = vrot.slane %v3844, 4
    %v3847 = vor.u32 %v3843, %v3846
    %v3849 = vshrl.u32 %v3830, 16
    %v3851 = vrot.slane %v3849, 3
    %v3852 = vshll.u32 %v3830, 16
    %v3854 = vrot.slane %v3852, 4
    %v3855 = vor.u32 %v3851, %v3854
    %v3856 = vsel %vm1803, %v3847, %v3855
    %v3858 = vshrl.u32 %v3831, 16
    %v3860 = vrot.slane %v3858, 3
    %v3861 = vshll.u32 %v3831, 16
    %v3863 = vrot.slane %v3861, 4
    %v3864 = vor.u32 %v3860, %v3863
    %v3865 = vsel %vm1803, %v3855, %v3864
    %v3867 = vshrl.u32 %v3832, 16
    %v3869 = vrot.slane %v3867, 3
    %v3870 = vshll.u32 %v3832, 16
    %v3872 = vrot.slane %v3870, 4
    %v3873 = vor.u32 %v3869, %v3872
    %v3874 = vsel %vm1803, %v3864, %v3873
    %v3876 = vshrl.u32 %v3833, 16
    %v3878 = vrot.slane %v3876, 3
    %v3879 = vshll.u32 %v3833, 16
    %v3881 = vrot.slane %v3879, 4
    %v3882 = vor.u32 %v3878, %v3881
    %v3883 = vsel %vm1803, %v3873, %v3882
    %v3885 = vshrl.u32 %v3834, 16
    %v3887 = vrot.slane %v3885, 3
    %v3888 = vshll.u32 %v3834, 16
    %v3890 = vrot.slane %v3888, 4
    %v3891 = vor.u32 %v3887, %v3890
    %v3892 = vsel %vm1803, %v3882, %v3891
    %v3894 = vshrl.u32 %v3835, 16
    %v3896 = vrot.slane %v3894, 3
    %v3897 = vshll.u32 %v3835, 16
    %v3899 = vrot.slane %v3897, 4
    %v3900 = vor.u32 %v3896, %v3899
    %v3901 = vsel %vm1803, %v3891, %v3900
    %v3903 = vshrl.u32 %v3836, 16
    %v3905 = vrot.slane %v3903, 3
    %v3906 = vshll.u32 %v3836, 16
    %v3908 = vrot.slane %v3906, 4
    %v3909 = vor.u32 %v3905, %v3908
    %v3910 = vsel %vm1803, %v3900, %v3909
    %v3912 = vshrl.u32 %v3837, 16
    %v3914 = vrot.slane %v3912, 3
    %v3915 = vshll.u32 %v3837, 16
    %v3917 = vrot.slane %v3915, 4
    %v3918 = vor.u32 %v3914, %v3917
    %v3919 = vsel %vm1803, %v3909, %v3918
    %v3921 = vshrl.u32 %v3838, 16
    %v3923 = vrot.slane %v3921, 3
    %v3924 = vshll.u32 %v3838, 16
    %v3926 = vrot.slane %v3924, 4
    %v3927 = vor.u32 %v3923, %v3926
    %v3928 = vsel %vm1803, %v3918, %v3927
    %v3930 = vshrl.u32 %v3839, 16
    %v3932 = vrot.slane %v3930, 3
    %v3933 = vshll.u32 %v3839, 16
    %v3935 = vrot.slane %v3933, 4
    %v3936 = vor.u32 %v3932, %v3935
    %v3937 = vsel %vm1803, %v3927, %v3936
    %v3940 = vunpack.c.l.b16 %v3785
    %v3941 = vunpack.c.l.b16 %v3786
    %v3942 = vpack.c.b16 %v3941, %v3940
    %v3945 = vsel %vm149, %v3856, 0
    %v3948 = vsel %vm149, %v3865, 0
    %v3951 = vsel %vm149, %v3874, 0
    %v3954 = vsel %vm149, %v3883, 0
    %v3957 = vsel %vm149, %v3892, 0
    %v3960 = vsel %vm149, %v3901, 0
    %v3963 = vsel %vm149, %v3910, 0
    %v3966 = vsel %vm149, %v3919, 0
    %v3969 = vsel %vm149, %v3928, 0
    %v3972 = vsel %vm149, %v3937, 0
    %3974 = vmatprep.subr.bf16.mxu0 0
    %3975 = vmatpush1.bf16.msra.mxu0 %v3942
    %3976 = vmatprep.subr.bf16.mxu0 0
    %3977 = vmatpush1.bf16.msra.mxu0 0
    %3978 = vmatprep.subr.bf16.mxu0 0
    %3979 = vmatpush1.bf16.msra.mxu0 0
    %3980 = vmatprep.subr.bf16.mxu0 0
    %3981 = vmatpush1.bf16.msra.mxu0 0
    %3982 = vmatprep.subr.bf16.mxu0 0
    %3983 = vmatpush1.bf16.msra.mxu0 0
    %3984 = vmatprep.subr.bf16.mxu0 0
    %3985 = vmatpush1.bf16.msra.mxu0 0
    %3986 = vmatprep.subr.bf16.mxu0 0
    %3987 = vmatpush1.bf16.msra.mxu0 0
    %3988 = vmatprep.subr.bf16.mxu0 0
    %3989 = vmatpush1.bf16.msra.mxu0 0
    %3990 = vmatprep.subr.bf16.mxu0 0
    %3991 = vmatpush1.bf16.msra.mxu0 0
    %3992 = vmatprep.subr.bf16.mxu0 0
    %3993 = vmatpush1.bf16.msra.mxu0 0
    %3994 = vmatprep.subr.bf16.mxu0 0
    %3995 = vmatpush1.bf16.msra.mxu0 0
    %3996 = vmatprep.subr.bf16.mxu0 0
    %3997 = vmatpush1.bf16.msra.mxu0 0
    %3998 = vmatprep.subr.bf16.mxu0 0
    %3999 = vmatpush1.bf16.msra.mxu0 0
    %4000 = vmatprep.subr.bf16.mxu0 0
    %4001 = vmatpush1.bf16.msra.mxu0 0
    %4002 = vmatprep.subr.bf16.mxu0 0
    %4003 = vmatpush1.bf16.msra.mxu0 0
    %4004 = vmatprep.subr.bf16.mxu0 0
    %4005 = vmatpush1.bf16.msra.mxu0 0
    %4006 = vmatprep.mubr.bf16.mxu0 0
    %4007 = vmatmul.mubr.bf16.gmra.mrb[0].mxu0 %v3945
    %v4008 = vpop.f32.mrb[0].mxu0
    %v4009 = vadd.f32 0.0, %v4008
    %v4010 = vpop.f32.mrb[0].mxu0
    %v4011 = vpop.f32.mrb[0].mxu0
    %v4012 = vadd.f32 0.0, %v4011
    %v4013 = vpop.f32.mrb[0].mxu0
    %4014 = vmatprep.mubr.bf16.mxu0 0
    %4015 = vmatmul.mubr.bf16.gmra.mrb[0].mxu0 %v3948
    %v4016 = vpop.f32.mrb[0].mxu0
    %v4017 = vadd.f32 0.0, %v4016
    %v4018 = vpop.f32.mrb[0].mxu0
    %v4019 = vpop.f32.mrb[0].mxu0
    %v4020 = vadd.f32 0.0, %v4019
    %v4021 = vpop.f32.mrb[0].mxu0
    %4022 = vmatprep.mubr.bf16.mxu0 0
    %4023 = vmatmul.mubr.bf16.gmra.mrb[0].mxu0 %v3951
    %v4024 = vpop.f32.mrb[0].mxu0
    %v4025 = vadd.f32 0.0, %v4024
    %v4026 = vpop.f32.mrb[0].mxu0
    %v4027 = vpop.f32.mrb[0].mxu0
    %v4028 = vadd.f32 0.0, %v4027
    %v4029 = vpop.f32.mrb[0].mxu0
    %4030 = vmatprep.mubr.bf16.mxu0 0
    %4031 = vmatmul.mubr.bf16.gmra.mrb[0].mxu0 %v3954
    %v4032 = vpop.f32.mrb[0].mxu0
    %v4033 = vadd.f32 0.0, %v4032
    %v4034 = vpop.f32.mrb[0].mxu0
    %v4035 = vpop.f32.mrb[0].mxu0
    %v4036 = vadd.f32 0.0, %v4035
    %v4037 = vpop.f32.mrb[0].mxu0
    %4038 = vmatprep.mubr.bf16.mxu0 0
    %4039 = vmatmul.mubr.bf16.gmra.mrb[0].mxu0 %v3957
    %v4040 = vpop.f32.mrb[0].mxu0
    %v4041 = vadd.f32 0.0, %v4040
    %v4042 = vpop.f32.mrb[0].mxu0
    %v4043 = vpop.f32.mrb[0].mxu0
    %v4044 = vadd.f32 0.0, %v4043
    %v4045 = vpop.f32.mrb[0].mxu0
    %4046 = vmatprep.mubr.bf16.mxu0 0
    %4047 = vmatmul.mubr.bf16.gmra.mrb[0].mxu0 %v3960
    %v4048 = vpop.f32.mrb[0].mxu0
    %v4049 = vadd.f32 0.0, %v4048
    %v4050 = vpop.f32.mrb[0].mxu0
    %v4051 = vpop.f32.mrb[0].mxu0
    %v4052 = vadd.f32 0.0, %v4051
    %v4053 = vpop.f32.mrb[0].mxu0
    %4054 = vmatprep.mubr.bf16.mxu0 0
    %4055 = vmatmul.mubr.bf16.gmra.mrb[0].mxu0 %v3963
    %v4056 = vpop.f32.mrb[0].mxu0
    %v4057 = vadd.f32 0.0, %v4056
    %v4058 = vpop.f32.mrb[0].mxu0
    %v4059 = vpop.f32.mrb[0].mxu0
    %v4060 = vadd.f32 0.0, %v4059
    %v4061 = vpop.f32.mrb[0].mxu0
    %4062 = vmatprep.mubr.bf16.mxu0 0
    %4063 = vmatmul.mubr.bf16.gmra.mrb[0].mxu0 %v3966
    %v4064 = vpop.f32.mrb[0].mxu0
    %v4065 = vadd.f32 0.0, %v4064
    %v4066 = vpop.f32.mrb[0].mxu0
    %v4067 = vpop.f32.mrb[0].mxu0
    %v4068 = vadd.f32 0.0, %v4067
    %v4069 = vpop.f32.mrb[0].mxu0
    %4070 = vmatprep.mubr.bf16.mxu0 0
    %4071 = vmatmul.mubr.bf16.gmra.mrb[0].mxu0 %v3969
    %v4072 = vpop.f32.mrb[0].mxu0
    %v4073 = vadd.f32 0.0, %v4072
    %v4074 = vpop.f32.mrb[0].mxu0
    %v4075 = vpop.f32.mrb[0].mxu0
    %v4076 = vadd.f32 0.0, %v4075
    %v4077 = vpop.f32.mrb[0].mxu0
    %4078 = vmatprep.mubr.bf16.mxu0 0
    %4079 = vmatmul.mubr.bf16.gmra.mrb[0].mxu0 %v3972
    %v4080 = vpop.f32.mrb[0].mxu0
    %v4081 = vadd.f32 0.0, %v4080
    %v4082 = vpop.f32.mrb[0].mxu0
    %v4083 = vpop.f32.mrb[0].mxu0
    %v4084 = vadd.f32 0.0, %v4083
    %v4085 = vpop.f32.mrb[0].mxu0
    %4086 = vdwg.mxu0
    %v4087 = vadd.f32 %v3764, %v4009
    %v4088 = vadd.f32 %v3765, %v4012
    %v4089 = vadd.f32 %v3766, %v4017
    %v4090 = vadd.f32 %v3767, %v4020
    %v4091 = vadd.f32 %v3768, %v4025
    %v4092 = vadd.f32 %v3769, %v4028
    %v4093 = vadd.f32 %v3770, %v4033
    %v4094 = vadd.f32 %v3771, %v4036
    %v4095 = vadd.f32 %v3772, %v4041
    %v4096 = vadd.f32 %v3773, %v4044
    %v4097 = vadd.f32 %v3774, %v4049
    %v4098 = vadd.f32 %v3775, %v4052
    %v4099 = vadd.f32 %v3776, %v4057
    %v4100 = vadd.f32 %v3777, %v4060
    %v4101 = vadd.f32 %v3778, %v4065
    %v4102 = vadd.f32 %v3779, %v4068
    %v4103 = vadd.f32 %v3780, %v4073
    %v4104 = vadd.f32 %v3781, %v4076
    %v4105 = vadd.f32 %v3782, %v4081
    %v4106 = vadd.f32 %v3783, %v4084
    %4107 = vst.msk [vmem:[#allocation2] sm:$0xff] %vm313, %v4087
    %4108 = vst.msk [vmem:[#allocation2 + $0x8] sm:$0xff] %vm313, %v4088
    %4109 = vst.msk [vmem:[#allocation2 + $0x10] sm:$0xff] %vm313, %v4089
    %4110 = vst.msk [vmem:[#allocation2 + $0x18] sm:$0xff] %vm313, %v4090
    %4111 = vst.msk [vmem:[#allocation2 + $0x20] sm:$0xff] %vm313, %v4091
    %4112 = vst.msk [vmem:[#allocation2 + $0x28] sm:$0xff] %vm313, %v4092
    %4113 = vst.msk [vmem:[#allocation2 + $0x30] sm:$0xff] %vm313, %v4093
    %4114 = vst.msk [vmem:[#allocation2 + $0x38] sm:$0xff] %vm313, %v4094
    %4115 = vst.msk [vmem:[#allocation2 + $0x40] sm:$0xff] %vm313, %v4095
    %4116 = vst.msk [vmem:[#allocation2 + $0x48] sm:$0xff] %vm313, %v4096
    %4117 = vst.msk [vmem:[#allocation2 + $0x50] sm:$0xff] %vm313, %v4097
    %4118 = vst.msk [vmem:[#allocation2 + $0x58] sm:$0xff] %vm313, %v4098
    %4119 = vst.msk [vmem:[#allocation2 + $0x60] sm:$0xff] %vm313, %v4099
    %4120 = vst.msk [vmem:[#allocation2 + $0x68] sm:$0xff] %vm313, %v4100
    %4121 = vst.msk [vmem:[#allocation2 + $0x70] sm:$0xff] %vm313, %v4101
    %4122 = vst.msk [vmem:[#allocation2 + $0x78] sm:$0xff] %vm313, %v4102
    %4123 = vst.msk [vmem:[#allocation2 + $0x80] sm:$0xff] %vm313, %v4103
    %4124 = vst.msk [vmem:[#allocation2 + $0x88] sm:$0xff] %vm313, %v4104
    %4125 = vst.msk [vmem:[#allocation2 + $0x90] sm:$0xff] %vm313, %v4105
    %4126 = vst.msk [vmem:[#allocation2 + $0x98] sm:$0xff] %vm313, %v4106
    %v4127 = vld [vmem:[%s0 + $0x14] sm:$0xe]
    %v4128 = vld [vmem:[%s0 + $0x18] sm:$0xf]
    %v4129 = vld [vmem:[%s0 + $0x1c] sm:$0xf]
    %v4130 = vld [vmem:[%s0 + $0x20] sm:$0xf]
    %v4131 = vld [vmem:[%s0 + $0x24] sm:$0xf]
    %v4132 = vld [vmem:[%s0 + $0x28] sm:$0xf]
    %v4133 = vld [vmem:[%s0 + $0x2c] sm:$0xf]
    %v4134 = vld [vmem:[%s0 + $0x30] sm:$0xf]
    %v4135 = vld [vmem:[%s0 + $0x34] sm:$0xf]
    %v4136 = vld [vmem:[%s0 + $0x38] sm:$0xf]
    %v4137 = vld [vmem:[%s0 + $0x3c] sm:$0xf]
    %v4138 = vld [vmem:[%s0 + $0x40] sm:$0xf]
    %v4139 = vld [vmem:[%s0 + $0x44] sm:$0xf]
    %v4140 = vld [vmem:[%s0 + $0x48] sm:$0xf]
    %v4141 = vld [vmem:[%s0 + $0x4c] sm:$0xf]
    %v4142 = vld [vmem:[%s0 + $0x50] sm:$0xf]
    %v4143 = vld [vmem:[%s0 + $0x54] sm:$0xf]
    %v4144 = vld [vmem:[%s0 + $0x58] sm:$0xf]
    %v4145 = vld [vmem:[%s0 + $0x5c] sm:$0xf]
    %v4146 = vld [vmem:[%s0 + $0x60] sm:$0xf]
    %v4147 = vld [vmem:[%s0 + $0x64] sm:$0x1]
    %v4148 = vld [vmem:[#allocation2] sm:$0xff]
    %v4149 = vld [vmem:[#allocation2 + $0x8] sm:$0xff]
    %v4150 = vld [vmem:[#allocation2 + $0x10] sm:$0xff]
    %v4151 = vld [vmem:[#allocation2 + $0x18] sm:$0xff]
    %v4152 = vld [vmem:[#allocation2 + $0x20] sm:$0xff]
    %v4153 = vld [vmem:[#allocation2 + $0x28] sm:$0xff]
    %v4154 = vld [vmem:[#allocation2 + $0x30] sm:$0xff]
    %v4155 = vld [vmem:[#allocation2 + $0x38] sm:$0xff]
    %v4156 = vld [vmem:[#allocation2 + $0x40] sm:$0xff]
    %v4157 = vld [vmem:[#allocation2 + $0x48] sm:$0xff]
    %v4158 = vld [vmem:[#allocation2 + $0x50] sm:$0xff]
    %v4159 = vld [vmem:[#allocation2 + $0x58] sm:$0xff]
    %v4160 = vld [vmem:[#allocation2 + $0x60] sm:$0xff]
    %v4161 = vld [vmem:[#allocation2 + $0x68] sm:$0xff]
    %v4162 = vld [vmem:[#allocation2 + $0x70] sm:$0xff]
    %v4163 = vld [vmem:[#allocation2 + $0x78] sm:$0xff]
    %v4164 = vld [vmem:[#allocation2 + $0x80] sm:$0xff]
    %v4165 = vld [vmem:[#allocation2 + $0x88] sm:$0xff]
    %v4166 = vld [vmem:[#allocation2 + $0x90] sm:$0xff]
    %v4167 = vld [vmem:[#allocation2 + $0x98] sm:$0xff]
    %s4168 = scalar_lea.vmem [#allocation3], 96
    %v4169 = vld [vmem:[%s4168] sm:$0xf]
    %v4170 = vld [vmem:[%s4168 + $0x4] sm:$0xf]
    %v4192 = vunpack.c.l.b16 %v4127
    %v4193 = vunpack.c.l.b16 %v4128
    %v4194 = vunpack.c.l.b16 %v4129
    %v4195 = vunpack.c.l.b16 %v4130
    %v4196 = vunpack.c.l.b16 %v4131
    %v4197 = vunpack.c.l.b16 %v4132
    %v4198 = vunpack.c.l.b16 %v4133
    %v4199 = vunpack.c.l.b16 %v4134
    %v4200 = vunpack.c.l.b16 %v4135
    %v4201 = vunpack.c.l.b16 %v4136
    %v4202 = vunpack.c.l.b16 %v4137
    %v4203 = vunpack.c.l.b16 %v4138
    %v4204 = vunpack.c.l.b16 %v4139
    %v4205 = vunpack.c.l.b16 %v4140
    %v4206 = vunpack.c.l.b16 %v4141
    %v4207 = vunpack.c.l.b16 %v4142
    %v4208 = vunpack.c.l.b16 %v4143
    %v4209 = vunpack.c.l.b16 %v4144
    %v4210 = vunpack.c.l.b16 %v4145
    %v4211 = vunpack.c.l.b16 %v4146
    %v4212 = vunpack.c.l.b16 %v4147
    %v4213 = vpack.c.b16 %v4193, %v4192
    %v4214 = vpack.c.b16 %v4195, %v4194
    %v4215 = vpack.c.b16 %v4197, %v4196
    %v4216 = vpack.c.b16 %v4199, %v4198
    %v4217 = vpack.c.b16 %v4201, %v4200
    %v4218 = vpack.c.b16 %v4203, %v4202
    %v4219 = vpack.c.b16 %v4205, %v4204
    %v4220 = vpack.c.b16 %v4207, %v4206
    %v4221 = vpack.c.b16 %v4209, %v4208
    %v4222 = vpack.c.b16 %v4211, %v4210
    %v4223 = vpack.c.b16 %v4212, %v4212
    %v4224 = vrot.slane %v4213, 1
    %v4225 = vrot.slane %v4214, 1
    %v4226 = vsel %vm802, %v4224, %v4225
    %v4227 = vrot.slane %v4215, 1
    %v4228 = vsel %vm802, %v4225, %v4227
    %v4229 = vrot.slane %v4216, 1
    %v4230 = vsel %vm802, %v4227, %v4229
    %v4231 = vrot.slane %v4217, 1
    %v4232 = vsel %vm802, %v4229, %v4231
    %v4233 = vrot.slane %v4218, 1
    %v4234 = vsel %vm802, %v4231, %v4233
    %v4235 = vrot.slane %v4219, 1
    %v4236 = vsel %vm802, %v4233, %v4235
    %v4237 = vrot.slane %v4220, 1
    %v4238 = vsel %vm802, %v4235, %v4237
    %v4239 = vrot.slane %v4221, 1
    %v4240 = vsel %vm802, %v4237, %v4239
    %v4241 = vrot.slane %v4222, 1
    %v4242 = vsel %vm802, %v4239, %v4241
    %v4243 = vrot.slane %v4223, 1
    %v4244 = vsel %vm802, %v4241, %v4243
    %v4247 = vunpack.c.l.b16 %v4169
    %v4248 = vunpack.c.l.b16 %v4170
    %v4249 = vpack.c.b16 %v4248, %v4247
    %v4252 = vsel %vm149, %v4226, 0
    %v4255 = vsel %vm149, %v4228, 0
    %v4258 = vsel %vm149, %v4230, 0
    %v4261 = vsel %vm149, %v4232, 0
    %v4264 = vsel %vm149, %v4234, 0
    %v4267 = vsel %vm149, %v4236, 0
    %v4270 = vsel %vm149, %v4238, 0
    %v4273 = vsel %vm149, %v4240, 0
    %v4276 = vsel %vm149, %v4242, 0
    %v4279 = vsel %vm149, %v4244, 0
    %4281 = vmatprep.subr.bf16.mxu0 0
    %4282 = vmatpush1.bf16.msra.mxu0 %v4249
    %4283 = vmatprep.subr.bf16.mxu0 0
    %4284 = vmatpush1.bf16.msra.mxu0 0
    %4285 = vmatprep.subr.bf16.mxu0 0
    %4286 = vmatpush1.bf16.msra.mxu0 0
    %4287 = vmatprep.subr.bf16.mxu0 0
    %4288 = vmatpush1.bf16.msra.mxu0 0
    %4289 = vmatprep.subr.bf16.mxu0 0
    %4290 = vmatpush1.bf16.msra.mxu0 0
    %4291 = vmatprep.subr.bf16.mxu0 0
    %4292 = vmatpush1.bf16.msra.mxu0 0
    %4293 = vmatprep.subr.bf16.mxu0 0
    %4294 = vmatpush1.bf16.msra.mxu0 0
    %4295 = vmatprep.subr.bf16.mxu0 0
    %4296 = vmatpush1.bf16.msra.mxu0 0
    %4297 = vmatprep.subr.bf16.mxu0 0
    %4298 = vmatpush1.bf16.msra.mxu0 0
    %4299 = vmatprep.subr.bf16.mxu0 0
    %4300 = vmatpush1.bf16.msra.mxu0 0
    %4301 = vmatprep.subr.bf16.mxu0 0
    %4302 = vmatpush1.bf16.msra.mxu0 0
    %4303 = vmatprep.subr.bf16.mxu0 0
    %4304 = vmatpush1.bf16.msra.mxu0 0
    %4305 = vmatprep.subr.bf16.mxu0 0
    %4306 = vmatpush1.bf16.msra.mxu0 0
    %4307 = vmatprep.subr.bf16.mxu0 0
    %4308 = vmatpush1.bf16.msra.mxu0 0
    %4309 = vmatprep.subr.bf16.mxu0 0
    %4310 = vmatpush1.bf16.msra.mxu0 0
    %4311 = vmatprep.subr.bf16.mxu0 0
    %4312 = vmatpush1.bf16.msra.mxu0 0
    %4313 = vmatprep.mubr.bf16.mxu0 0
    %4314 = vmatmul.mubr.bf16.gmra.mrb[0].mxu0 %v4252
    %v4315 = vpop.f32.mrb[0].mxu0
    %v4316 = vadd.f32 0.0, %v4315
    %v4317 = vpop.f32.mrb[0].mxu0
    %v4318 = vpop.f32.mrb[0].mxu0
    %v4319 = vadd.f32 0.0, %v4318
    %v4320 = vpop.f32.mrb[0].mxu0
    %4321 = vmatprep.mubr.bf16.mxu0 0
    %4322 = vmatmul.mubr.bf16.gmra.mrb[0].mxu0 %v4255
    %v4323 = vpop.f32.mrb[0].mxu0
    %v4324 = vadd.f32 0.0, %v4323
    %v4325 = vpop.f32.mrb[0].mxu0
    %v4326 = vpop.f32.mrb[0].mxu0
    %v4327 = vadd.f32 0.0, %v4326
    %v4328 = vpop.f32.mrb[0].mxu0
    %4329 = vmatprep.mubr.bf16.mxu0 0
    %4330 = vmatmul.mubr.bf16.gmra.mrb[0].mxu0 %v4258
    %v4331 = vpop.f32.mrb[0].mxu0
    %v4332 = vadd.f32 0.0, %v4331
    %v4333 = vpop.f32.mrb[0].mxu0
    %v4334 = vpop.f32.mrb[0].mxu0
    %v4335 = vadd.f32 0.0, %v4334
    %v4336 = vpop.f32.mrb[0].mxu0
    %4337 = vmatprep.mubr.bf16.mxu0 0
    %4338 = vmatmul.mubr.bf16.gmra.mrb[0].mxu0 %v4261
    %v4339 = vpop.f32.mrb[0].mxu0
    %v4340 = vadd.f32 0.0, %v4339
    %v4341 = vpop.f32.mrb[0].mxu0
    %v4342 = vpop.f32.mrb[0].mxu0
    %v4343 = vadd.f32 0.0, %v4342
    %v4344 = vpop.f32.mrb[0].mxu0
    %4345 = vmatprep.mubr.bf16.mxu0 0
    %4346 = vmatmul.mubr.bf16.gmra.mrb[0].mxu0 %v4264
    %v4347 = vpop.f32.mrb[0].mxu0
    %v4348 = vadd.f32 0.0, %v4347
    %v4349 = vpop.f32.mrb[0].mxu0
    %v4350 = vpop.f32.mrb[0].mxu0
    %v4351 = vadd.f32 0.0, %v4350
    %v4352 = vpop.f32.mrb[0].mxu0
    %4353 = vmatprep.mubr.bf16.mxu0 0
    %4354 = vmatmul.mubr.bf16.gmra.mrb[0].mxu0 %v4267
    %v4355 = vpop.f32.mrb[0].mxu0
    %v4356 = vadd.f32 0.0, %v4355
    %v4357 = vpop.f32.mrb[0].mxu0
    %v4358 = vpop.f32.mrb[0].mxu0
    %v4359 = vadd.f32 0.0, %v4358
    %v4360 = vpop.f32.mrb[0].mxu0
    %4361 = vmatprep.mubr.bf16.mxu0 0
    %4362 = vmatmul.mubr.bf16.gmra.mrb[0].mxu0 %v4270
    %v4363 = vpop.f32.mrb[0].mxu0
    %v4364 = vadd.f32 0.0, %v4363
    %v4365 = vpop.f32.mrb[0].mxu0
    %v4366 = vpop.f32.mrb[0].mxu0
    %v4367 = vadd.f32 0.0, %v4366
    %v4368 = vpop.f32.mrb[0].mxu0
    %4369 = vmatprep.mubr.bf16.mxu0 0
    %4370 = vmatmul.mubr.bf16.gmra.mrb[0].mxu0 %v4273
    %v4371 = vpop.f32.mrb[0].mxu0
    %v4372 = vadd.f32 0.0, %v4371
    %v4373 = vpop.f32.mrb[0].mxu0
    %v4374 = vpop.f32.mrb[0].mxu0
    %v4375 = vadd.f32 0.0, %v4374
    %v4376 = vpop.f32.mrb[0].mxu0
    %4377 = vmatprep.mubr.bf16.mxu0 0
    %4378 = vmatmul.mubr.bf16.gmra.mrb[0].mxu0 %v4276
    %v4379 = vpop.f32.mrb[0].mxu0
    %v4380 = vadd.f32 0.0, %v4379
    %v4381 = vpop.f32.mrb[0].mxu0
    %v4382 = vpop.f32.mrb[0].mxu0
    %v4383 = vadd.f32 0.0, %v4382
    %v4384 = vpop.f32.mrb[0].mxu0
    %4385 = vmatprep.mubr.bf16.mxu0 0
    %4386 = vmatmul.mubr.bf16.gmra.mrb[0].mxu0 %v4279
    %v4387 = vpop.f32.mrb[0].mxu0
    %v4388 = vadd.f32 0.0, %v4387
    %v4389 = vpop.f32.mrb[0].mxu0
    %v4390 = vpop.f32.mrb[0].mxu0
    %v4391 = vadd.f32 0.0, %v4390
    %v4392 = vpop.f32.mrb[0].mxu0
    %4393 = vdwg.mxu0
    %v4394 = vadd.f32 %v4148, %v4316
    %v4395 = vadd.f32 %v4149, %v4319
    %v4396 = vadd.f32 %v4150, %v4324
    %v4397 = vadd.f32 %v4151, %v4327
    %v4398 = vadd.f32 %v4152, %v4332
    %v4399 = vadd.f32 %v4153, %v4335
    %v4400 = vadd.f32 %v4154, %v4340
    %v4401 = vadd.f32 %v4155, %v4343
    %v4402 = vadd.f32 %v4156, %v4348
    %v4403 = vadd.f32 %v4157, %v4351
    %v4404 = vadd.f32 %v4158, %v4356
    %v4405 = vadd.f32 %v4159, %v4359
    %v4406 = vadd.f32 %v4160, %v4364
    %v4407 = vadd.f32 %v4161, %v4367
    %v4408 = vadd.f32 %v4162, %v4372
    %v4409 = vadd.f32 %v4163, %v4375
    %v4410 = vadd.f32 %v4164, %v4380
    %v4411 = vadd.f32 %v4165, %v4383
    %v4412 = vadd.f32 %v4166, %v4388
    %v4413 = vadd.f32 %v4167, %v4391
    %4414 = vst.msk [vmem:[#allocation2] sm:$0xff] %vm313, %v4394
    %4415 = vst.msk [vmem:[#allocation2 + $0x8] sm:$0xff] %vm313, %v4395
    %4416 = vst.msk [vmem:[#allocation2 + $0x10] sm:$0xff] %vm313, %v4396
    %4417 = vst.msk [vmem:[#allocation2 + $0x18] sm:$0xff] %vm313, %v4397
    %4418 = vst.msk [vmem:[#allocation2 + $0x20] sm:$0xff] %vm313, %v4398
    %4419 = vst.msk [vmem:[#allocation2 + $0x28] sm:$0xff] %vm313, %v4399
    %4420 = vst.msk [vmem:[#allocation2 + $0x30] sm:$0xff] %vm313, %v4400
    %4421 = vst.msk [vmem:[#allocation2 + $0x38] sm:$0xff] %vm313, %v4401
    %4422 = vst.msk [vmem:[#allocation2 + $0x40] sm:$0xff] %vm313, %v4402
    %4423 = vst.msk [vmem:[#allocation2 + $0x48] sm:$0xff] %vm313, %v4403
    %4424 = vst.msk [vmem:[#allocation2 + $0x50] sm:$0xff] %vm313, %v4404
    %4425 = vst.msk [vmem:[#allocation2 + $0x58] sm:$0xff] %vm313, %v4405
    %4426 = vst.msk [vmem:[#allocation2 + $0x60] sm:$0xff] %vm313, %v4406
    %4427 = vst.msk [vmem:[#allocation2 + $0x68] sm:$0xff] %vm313, %v4407
    %4428 = vst.msk [vmem:[#allocation2 + $0x70] sm:$0xff] %vm313, %v4408
    %4429 = vst.msk [vmem:[#allocation2 + $0x78] sm:$0xff] %vm313, %v4409
    %4430 = vst.msk [vmem:[#allocation2 + $0x80] sm:$0xff] %vm313, %v4410
    %4431 = vst.msk [vmem:[#allocation2 + $0x88] sm:$0xff] %vm313, %v4411
    %4432 = vst.msk [vmem:[#allocation2 + $0x90] sm:$0xff] %vm313, %v4412
    %4433 = vst.msk [vmem:[#allocation2 + $0x98] sm:$0xff] %vm313, %v4413
    %v4434 = vld [vmem:[%s0 + $0x14] sm:$0xe]
    %v4435 = vld [vmem:[%s0 + $0x18] sm:$0xf]
    %v4436 = vld [vmem:[%s0 + $0x1c] sm:$0xf]
    %v4437 = vld [vmem:[%s0 + $0x20] sm:$0xf]
    %v4438 = vld [vmem:[%s0 + $0x24] sm:$0xf]
    %v4439 = vld [vmem:[%s0 + $0x28] sm:$0xf]
    %v4440 = vld [vmem:[%s0 + $0x2c] sm:$0xf]
    %v4441 = vld [vmem:[%s0 + $0x30] sm:$0xf]
    %v4442 = vld [vmem:[%s0 + $0x34] sm:$0xf]
    %v4443 = vld [vmem:[%s0 + $0x38] sm:$0xf]
    %v4444 = vld [vmem:[%s0 + $0x3c] sm:$0xf]
    %v4445 = vld [vmem:[%s0 + $0x40] sm:$0xf]
    %v4446 = vld [vmem:[%s0 + $0x44] sm:$0xf]
    %v4447 = vld [vmem:[%s0 + $0x48] sm:$0xf]
    %v4448 = vld [vmem:[%s0 + $0x4c] sm:$0xf]
    %v4449 = vld [vmem:[%s0 + $0x50] sm:$0xf]
    %v4450 = vld [vmem:[%s0 + $0x54] sm:$0xf]
    %v4451 = vld [vmem:[%s0 + $0x58] sm:$0xf]
    %v4452 = vld [vmem:[%s0 + $0x5c] sm:$0xf]
    %v4453 = vld [vmem:[%s0 + $0x60] sm:$0xf]
    %v4454 = vld [vmem:[%s0 + $0x64] sm:$0x3]
    %v4455 = vld [vmem:[#allocation2] sm:$0xff]
    %v4456 = vld [vmem:[#allocation2 + $0x8] sm:$0xff]
    %v4457 = vld [vmem:[#allocation2 + $0x10] sm:$0xff]
    %v4458 = vld [vmem:[#allocation2 + $0x18] sm:$0xff]
    %v4459 = vld [vmem:[#allocation2 + $0x20] sm:$0xff]
    %v4460 = vld [vmem:[#allocation2 + $0x28] sm:$0xff]
    %v4461 = vld [vmem:[#allocation2 + $0x30] sm:$0xff]
    %v4462 = vld [vmem:[#allocation2 + $0x38] sm:$0xff]
    %v4463 = vld [vmem:[#allocation2 + $0x40] sm:$0xff]
    %v4464 = vld [vmem:[#allocation2 + $0x48] sm:$0xff]
    %v4465 = vld [vmem:[#allocation2 + $0x50] sm:$0xff]
    %v4466 = vld [vmem:[#allocation2 + $0x58] sm:$0xff]
    %v4467 = vld [vmem:[#allocation2 + $0x60] sm:$0xff]
    %v4468 = vld [vmem:[#allocation2 + $0x68] sm:$0xff]
    %v4469 = vld [vmem:[#allocation2 + $0x70] sm:$0xff]
    %v4470 = vld [vmem:[#allocation2 + $0x78] sm:$0xff]
    %v4471 = vld [vmem:[#allocation2 + $0x80] sm:$0xff]
    %v4472 = vld [vmem:[#allocation2 + $0x88] sm:$0xff]
    %v4473 = vld [vmem:[#allocation2 + $0x90] sm:$0xff]
    %v4474 = vld [vmem:[#allocation2 + $0x98] sm:$0xff]
    %s4475 = scalar_lea.vmem [#allocation3], 104
    %v4476 = vld [vmem:[%s4475] sm:$0xf]
    %v4477 = vld [vmem:[%s4475 + $0x4] sm:$0xf]
    %v4499 = vunpack.c.l.b16 %v4434
    %v4500 = vunpack.c.l.b16 %v4435
    %v4501 = vunpack.c.l.b16 %v4436
    %v4502 = vunpack.c.l.b16 %v4437
    %v4503 = vunpack.c.l.b16 %v4438
    %v4504 = vunpack.c.l.b16 %v4439
    %v4505 = vunpack.c.l.b16 %v4440
    %v4506 = vunpack.c.l.b16 %v4441
    %v4507 = vunpack.c.l.b16 %v4442
    %v4508 = vunpack.c.l.b16 %v4443
    %v4509 = vunpack.c.l.b16 %v4444
    %v4510 = vunpack.c.l.b16 %v4445
    %v4511 = vunpack.c.l.b16 %v4446
    %v4512 = vunpack.c.l.b16 %v4447
    %v4513 = vunpack.c.l.b16 %v4448
    %v4514 = vunpack.c.l.b16 %v4449
    %v4515 = vunpack.c.l.b16 %v4450
    %v4516 = vunpack.c.l.b16 %v4451
    %v4517 = vunpack.c.l.b16 %v4452
    %v4518 = vunpack.c.l.b16 %v4453
    %v4519 = vunpack.c.l.b16 %v4454
    %v4520 = vpack.c.b16 %v4500, %v4499
    %v4521 = vpack.c.b16 %v4502, %v4501
    %v4522 = vpack.c.b16 %v4504, %v4503
    %v4523 = vpack.c.b16 %v4506, %v4505
    %v4524 = vpack.c.b16 %v4508, %v4507
    %v4525 = vpack.c.b16 %v4510, %v4509
    %v4526 = vpack.c.b16 %v4512, %v4511
    %v4527 = vpack.c.b16 %v4514, %v4513
    %v4528 = vpack.c.b16 %v4516, %v4515
    %v4529 = vpack.c.b16 %v4518, %v4517
    %v4530 = vpack.c.b16 %v4519, %v4519
    %v4532 = vshrl.u32 %v4520, 16
    %v4534 = vrot.slane %v4532, 1
    %v4535 = vshll.u32 %v4520, 16
    %v4537 = vrot.slane %v4535, 2
    %v4538 = vor.u32 %v4534, %v4537
    %v4540 = vshrl.u32 %v4521, 16
    %v4542 = vrot.slane %v4540, 1
    %v4543 = vshll.u32 %v4521, 16
    %v4545 = vrot.slane %v4543, 2
    %v4546 = vor.u32 %v4542, %v4545
    %v4547 = vsel %vm1110, %v4538, %v4546
    %v4549 = vshrl.u32 %v4522, 16
    %v4551 = vrot.slane %v4549, 1
    %v4552 = vshll.u32 %v4522, 16
    %v4554 = vrot.slane %v4552, 2
    %v4555 = vor.u32 %v4551, %v4554
    %v4556 = vsel %vm1110, %v4546, %v4555
    %v4558 = vshrl.u32 %v4523, 16
    %v4560 = vrot.slane %v4558, 1
    %v4561 = vshll.u32 %v4523, 16
    %v4563 = vrot.slane %v4561, 2
    %v4564 = vor.u32 %v4560, %v4563
    %v4565 = vsel %vm1110, %v4555, %v4564
    %v4567 = vshrl.u32 %v4524, 16
    %v4569 = vrot.slane %v4567, 1
    %v4570 = vshll.u32 %v4524, 16
    %v4572 = vrot.slane %v4570, 2
    %v4573 = vor.u32 %v4569, %v4572
    %v4574 = vsel %vm1110, %v4564, %v4573
    %v4576 = vshrl.u32 %v4525, 16
    %v4578 = vrot.slane %v4576, 1
    %v4579 = vshll.u32 %v4525, 16
    %v4581 = vrot.slane %v4579, 2
    %v4582 = vor.u32 %v4578, %v4581
    %v4583 = vsel %vm1110, %v4573, %v4582
    %v4585 = vshrl.u32 %v4526, 16
    %v4587 = vrot.slane %v4585, 1
    %v4588 = vshll.u32 %v4526, 16
    %v4590 = vrot.slane %v4588, 2
    %v4591 = vor.u32 %v4587, %v4590
    %v4592 = vsel %vm1110, %v4582, %v4591
    %v4594 = vshrl.u32 %v4527, 16
    %v4596 = vrot.slane %v4594, 1
    %v4597 = vshll.u32 %v4527, 16
    %v4599 = vrot.slane %v4597, 2
    %v4600 = vor.u32 %v4596, %v4599
    %v4601 = vsel %vm1110, %v4591, %v4600
    %v4603 = vshrl.u32 %v4528, 16
    %v4605 = vrot.slane %v4603, 1
    %v4606 = vshll.u32 %v4528, 16
    %v4608 = vrot.slane %v4606, 2
    %v4609 = vor.u32 %v4605, %v4608
    %v4610 = vsel %vm1110, %v4600, %v4609
    %v4612 = vshrl.u32 %v4529, 16
    %v4614 = vrot.slane %v4612, 1
    %v4615 = vshll.u32 %v4529, 16
    %v4617 = vrot.slane %v4615, 2
    %v4618 = vor.u32 %v4614, %v4617
    %v4619 = vsel %vm1110, %v4609, %v4618
    %v4621 = vshrl.u32 %v4530, 16
    %v4623 = vrot.slane %v4621, 1
    %v4624 = vshll.u32 %v4530, 16
    %v4626 = vrot.slane %v4624, 2
    %v4627 = vor.u32 %v4623, %v4626
    %v4628 = vsel %vm1110, %v4618, %v4627
    %v4631 = vunpack.c.l.b16 %v4476
    %v4632 = vunpack.c.l.b16 %v4477
    %v4633 = vpack.c.b16 %v4632, %v4631
    %v4636 = vsel %vm149, %v4547, 0
    %v4639 = vsel %vm149, %v4556, 0
    %v4642 = vsel %vm149, %v4565, 0
    %v4645 = vsel %vm149, %v4574, 0
    %v4648 = vsel %vm149, %v4583, 0
    %v4651 = vsel %vm149, %v4592, 0
    %v4654 = vsel %vm149, %v4601, 0
    %v4657 = vsel %vm149, %v4610, 0
    %v4660 = vsel %vm149, %v4619, 0
    %v4663 = vsel %vm149, %v4628, 0
    %4665 = vmatprep.subr.bf16.mxu0 0
    %4666 = vmatpush1.bf16.msra.mxu0 %v4633
    %4667 = vmatprep.subr.bf16.mxu0 0
    %4668 = vmatpush1.bf16.msra.mxu0 0
    %4669 = vmatprep.subr.bf16.mxu0 0
    %4670 = vmatpush1.bf16.msra.mxu0 0
    %4671 = vmatprep.subr.bf16.mxu0 0
    %4672 = vmatpush1.bf16.msra.mxu0 0
    %4673 = vmatprep.subr.bf16.mxu0 0
    %4674 = vmatpush1.bf16.msra.mxu0 0
    %4675 = vmatprep.subr.bf16.mxu0 0
    %4676 = vmatpush1.bf16.msra.mxu0 0
    %4677 = vmatprep.subr.bf16.mxu0 0
    %4678 = vmatpush1.bf16.msra.mxu0 0
    %4679 = vmatprep.subr.bf16.mxu0 0
    %4680 = vmatpush1.bf16.msra.mxu0 0
    %4681 = vmatprep.subr.bf16.mxu0 0
    %4682 = vmatpush1.bf16.msra.mxu0 0
    %4683 = vmatprep.subr.bf16.mxu0 0
    %4684 = vmatpush1.bf16.msra.mxu0 0
    %4685 = vmatprep.subr.bf16.mxu0 0
    %4686 = vmatpush1.bf16.msra.mxu0 0
    %4687 = vmatprep.subr.bf16.mxu0 0
    %4688 = vmatpush1.bf16.msra.mxu0 0
    %4689 = vmatprep.subr.bf16.mxu0 0
    %4690 = vmatpush1.bf16.msra.mxu0 0
    %4691 = vmatprep.subr.bf16.mxu0 0
    %4692 = vmatpush1.bf16.msra.mxu0 0
    %4693 = vmatprep.subr.bf16.mxu0 0
    %4694 = vmatpush1.bf16.msra.mxu0 0
    %4695 = vmatprep.subr.bf16.mxu0 0
    %4696 = vmatpush1.bf16.msra.mxu0 0
    %4697 = vmatprep.mubr.bf16.mxu0 0
    %4698 = vmatmul.mubr.bf16.gmra.mrb[0].mxu0 %v4636
    %v4699 = vpop.f32.mrb[0].mxu0
    %v4700 = vadd.f32 0.0, %v4699
    %v4701 = vpop.f32.mrb[0].mxu0
    %v4702 = vpop.f32.mrb[0].mxu0
    %v4703 = vadd.f32 0.0, %v4702
    %v4704 = vpop.f32.mrb[0].mxu0
    %4705 = vmatprep.mubr.bf16.mxu0 0
    %4706 = vmatmul.mubr.bf16.gmra.mrb[0].mxu0 %v4639
    %v4707 = vpop.f32.mrb[0].mxu0
    %v4708 = vadd.f32 0.0, %v4707
    %v4709 = vpop.f32.mrb[0].mxu0
    %v4710 = vpop.f32.mrb[0].mxu0
    %v4711 = vadd.f32 0.0, %v4710
    %v4712 = vpop.f32.mrb[0].mxu0
    %4713 = vmatprep.mubr.bf16.mxu0 0
    %4714 = vmatmul.mubr.bf16.gmra.mrb[0].mxu0 %v4642
    %v4715 = vpop.f32.mrb[0].mxu0
    %v4716 = vadd.f32 0.0, %v4715
    %v4717 = vpop.f32.mrb[0].mxu0
    %v4718 = vpop.f32.mrb[0].mxu0
    %v4719 = vadd.f32 0.0, %v4718
    %v4720 = vpop.f32.mrb[0].mxu0
    %4721 = vmatprep.mubr.bf16.mxu0 0
    %4722 = vmatmul.mubr.bf16.gmra.mrb[0].mxu0 %v4645
    %v4723 = vpop.f32.mrb[0].mxu0
    %v4724 = vadd.f32 0.0, %v4723
    %v4725 = vpop.f32.mrb[0].mxu0
    %v4726 = vpop.f32.mrb[0].mxu0
    %v4727 = vadd.f32 0.0, %v4726
    %v4728 = vpop.f32.mrb[0].mxu0
    %4729 = vmatprep.mubr.bf16.mxu0 0
    %4730 = vmatmul.mubr.bf16.gmra.mrb[0].mxu0 %v4648
    %v4731 = vpop.f32.mrb[0].mxu0
    %v4732 = vadd.f32 0.0, %v4731
    %v4733 = vpop.f32.mrb[0].mxu0
    %v4734 = vpop.f32.mrb[0].mxu0
    %v4735 = vadd.f32 0.0, %v4734
    %v4736 = vpop.f32.mrb[0].mxu0
    %4737 = vmatprep.mubr.bf16.mxu0 0
    %4738 = vmatmul.mubr.bf16.gmra.mrb[0].mxu0 %v4651
    %v4739 = vpop.f32.mrb[0].mxu0
    %v4740 = vadd.f32 0.0, %v4739
    %v4741 = vpop.f32.mrb[0].mxu0
    %v4742 = vpop.f32.mrb[0].mxu0
    %v4743 = vadd.f32 0.0, %v4742
    %v4744 = vpop.f32.mrb[0].mxu0
    %4745 = vmatprep.mubr.bf16.mxu0 0
    %4746 = vmatmul.mubr.bf16.gmra.mrb[0].mxu0 %v4654
    %v4747 = vpop.f32.mrb[0].mxu0
    %v4748 = vadd.f32 0.0, %v4747
    %v4749 = vpop.f32.mrb[0].mxu0
    %v4750 = vpop.f32.mrb[0].mxu0
    %v4751 = vadd.f32 0.0, %v4750
    %v4752 = vpop.f32.mrb[0].mxu0
    %4753 = vmatprep.mubr.bf16.mxu0 0
    %4754 = vmatmul.mubr.bf16.gmra.mrb[0].mxu0 %v4657
    %v4755 = vpop.f32.mrb[0].mxu0
    %v4756 = vadd.f32 0.0, %v4755
    %v4757 = vpop.f32.mrb[0].mxu0
    %v4758 = vpop.f32.mrb[0].mxu0
    %v4759 = vadd.f32 0.0, %v4758
    %v4760 = vpop.f32.mrb[0].mxu0
    %4761 = vmatprep.mubr.bf16.mxu0 0
    %4762 = vmatmul.mubr.bf16.gmra.mrb[0].mxu0 %v4660
    %v4763 = vpop.f32.mrb[0].mxu0
    %v4764 = vadd.f32 0.0, %v4763
    %v4765 = vpop.f32.mrb[0].mxu0
    %v4766 = vpop.f32.mrb[0].mxu0
    %v4767 = vadd.f32 0.0, %v4766
    %v4768 = vpop.f32.mrb[0].mxu0
    %4769 = vmatprep.mubr.bf16.mxu0 0
    %4770 = vmatmul.mubr.bf16.gmra.mrb[0].mxu0 %v4663
    %v4771 = vpop.f32.mrb[0].mxu0
    %v4772 = vadd.f32 0.0, %v4771
    %v4773 = vpop.f32.mrb[0].mxu0
    %v4774 = vpop.f32.mrb[0].mxu0
    %v4775 = vadd.f32 0.0, %v4774
    %v4776 = vpop.f32.mrb[0].mxu0
    %4777 = vdwg.mxu0
    %v4778 = vadd.f32 %v4455, %v4700
    %v4779 = vadd.f32 %v4456, %v4703
    %v4780 = vadd.f32 %v4457, %v4708
    %v4781 = vadd.f32 %v4458, %v4711
    %v4782 = vadd.f32 %v4459, %v4716
    %v4783 = vadd.f32 %v4460, %v4719
    %v4784 = vadd.f32 %v4461, %v4724
    %v4785 = vadd.f32 %v4462, %v4727
    %v4786 = vadd.f32 %v4463, %v4732
    %v4787 = vadd.f32 %v4464, %v4735
    %v4788 = vadd.f32 %v4465, %v4740
    %v4789 = vadd.f32 %v4466, %v4743
    %v4790 = vadd.f32 %v4467, %v4748
    %v4791 = vadd.f32 %v4468, %v4751
    %v4792 = vadd.f32 %v4469, %v4756
    %v4793 = vadd.f32 %v4470, %v4759
    %v4794 = vadd.f32 %v4471, %v4764
    %v4795 = vadd.f32 %v4472, %v4767
    %v4796 = vadd.f32 %v4473, %v4772
    %v4797 = vadd.f32 %v4474, %v4775
    %4798 = vst.msk [vmem:[#allocation2] sm:$0xff] %vm313, %v4778
    %4799 = vst.msk [vmem:[#allocation2 + $0x8] sm:$0xff] %vm313, %v4779
    %4800 = vst.msk [vmem:[#allocation2 + $0x10] sm:$0xff] %vm313, %v4780
    %4801 = vst.msk [vmem:[#allocation2 + $0x18] sm:$0xff] %vm313, %v4781
    %4802 = vst.msk [vmem:[#allocation2 + $0x20] sm:$0xff] %vm313, %v4782
    %4803 = vst.msk [vmem:[#allocation2 + $0x28] sm:$0xff] %vm313, %v4783
    %4804 = vst.msk [vmem:[#allocation2 + $0x30] sm:$0xff] %vm313, %v4784
    %4805 = vst.msk [vmem:[#allocation2 + $0x38] sm:$0xff] %vm313, %v4785
    %4806 = vst.msk [vmem:[#allocation2 + $0x40] sm:$0xff] %vm313, %v4786
    %4807 = vst.msk [vmem:[#allocation2 + $0x48] sm:$0xff] %vm313, %v4787
    %4808 = vst.msk [vmem:[#allocation2 + $0x50] sm:$0xff] %vm313, %v4788
    %4809 = vst.msk [vmem:[#allocation2 + $0x58] sm:$0xff] %vm313, %v4789
    %4810 = vst.msk [vmem:[#allocation2 + $0x60] sm:$0xff] %vm313, %v4790
    %4811 = vst.msk [vmem:[#allocation2 + $0x68] sm:$0xff] %vm313, %v4791
    %4812 = vst.msk [vmem:[#allocation2 + $0x70] sm:$0xff] %vm313, %v4792
    %4813 = vst.msk [vmem:[#allocation2 + $0x78] sm:$0xff] %vm313, %v4793
    %4814 = vst.msk [vmem:[#allocation2 + $0x80] sm:$0xff] %vm313, %v4794
    %4815 = vst.msk [vmem:[#allocation2 + $0x88] sm:$0xff] %vm313, %v4795
    %4816 = vst.msk [vmem:[#allocation2 + $0x90] sm:$0xff] %vm313, %v4796
    %4817 = vst.msk [vmem:[#allocation2 + $0x98] sm:$0xff] %vm313, %v4797
    %v4818 = vld [vmem:[%s0 + $0x14] sm:$0xc]
    %v4819 = vld [vmem:[%s0 + $0x18] sm:$0xf]
    %v4820 = vld [vmem:[%s0 + $0x1c] sm:$0xf]
    %v4821 = vld [vmem:[%s0 + $0x20] sm:$0xf]
    %v4822 = vld [vmem:[%s0 + $0x24] sm:$0xf]
    %v4823 = vld [vmem:[%s0 + $0x28] sm:$0xf]
    %v4824 = vld [vmem:[%s0 + $0x2c] sm:$0xf]
    %v4825 = vld [vmem:[%s0 + $0x30] sm:$0xf]
    %v4826 = vld [vmem:[%s0 + $0x34] sm:$0xf]
    %v4827 = vld [vmem:[%s0 + $0x38] sm:$0xf]
    %v4828 = vld [vmem:[%s0 + $0x3c] sm:$0xf]
    %v4829 = vld [vmem:[%s0 + $0x40] sm:$0xf]
    %v4830 = vld [vmem:[%s0 + $0x44] sm:$0xf]
    %v4831 = vld [vmem:[%s0 + $0x48] sm:$0xf]
    %v4832 = vld [vmem:[%s0 + $0x4c] sm:$0xf]
    %v4833 = vld [vmem:[%s0 + $0x50] sm:$0xf]
    %v4834 = vld [vmem:[%s0 + $0x54] sm:$0xf]
    %v4835 = vld [vmem:[%s0 + $0x58] sm:$0xf]
    %v4836 = vld [vmem:[%s0 + $0x5c] sm:$0xf]
    %v4837 = vld [vmem:[%s0 + $0x60] sm:$0xf]
    %v4838 = vld [vmem:[%s0 + $0x64] sm:$0x3]
    %v4839 = vld [vmem:[#allocation2] sm:$0xff]
    %v4840 = vld [vmem:[#allocation2 + $0x8] sm:$0xff]
    %v4841 = vld [vmem:[#allocation2 + $0x10] sm:$0xff]
    %v4842 = vld [vmem:[#allocation2 + $0x18] sm:$0xff]
    %v4843 = vld [vmem:[#allocation2 + $0x20] sm:$0xff]
    %v4844 = vld [vmem:[#allocation2 + $0x28] sm:$0xff]
    %v4845 = vld [vmem:[#allocation2 + $0x30] sm:$0xff]
    %v4846 = vld [vmem:[#allocation2 + $0x38] sm:$0xff]
    %v4847 = vld [vmem:[#allocation2 + $0x40] sm:$0xff]
    %v4848 = vld [vmem:[#allocation2 + $0x48] sm:$0xff]
    %v4849 = vld [vmem:[#allocation2 + $0x50] sm:$0xff]
    %v4850 = vld [vmem:[#allocation2 + $0x58] sm:$0xff]
    %v4851 = vld [vmem:[#allocation2 + $0x60] sm:$0xff]
    %v4852 = vld [vmem:[#allocation2 + $0x68] sm:$0xff]
    %v4853 = vld [vmem:[#allocation2 + $0x70] sm:$0xff]
    %v4854 = vld [vmem:[#allocation2 + $0x78] sm:$0xff]
    %v4855 = vld [vmem:[#allocation2 + $0x80] sm:$0xff]
    %v4856 = vld [vmem:[#allocation2 + $0x88] sm:$0xff]
    %v4857 = vld [vmem:[#allocation2 + $0x90] sm:$0xff]
    %v4858 = vld [vmem:[#allocation2 + $0x98] sm:$0xff]
    %s4859 = scalar_lea.vmem [#allocation3], 112
    %v4860 = vld [vmem:[%s4859] sm:$0xf]
    %v4861 = vld [vmem:[%s4859 + $0x4] sm:$0xf]
    %v4883 = vunpack.c.l.b16 %v4818
    %v4884 = vunpack.c.l.b16 %v4819
    %v4885 = vunpack.c.l.b16 %v4820
    %v4886 = vunpack.c.l.b16 %v4821
    %v4887 = vunpack.c.l.b16 %v4822
    %v4888 = vunpack.c.l.b16 %v4823
    %v4889 = vunpack.c.l.b16 %v4824
    %v4890 = vunpack.c.l.b16 %v4825
    %v4891 = vunpack.c.l.b16 %v4826
    %v4892 = vunpack.c.l.b16 %v4827
    %v4893 = vunpack.c.l.b16 %v4828
    %v4894 = vunpack.c.l.b16 %v4829
    %v4895 = vunpack.c.l.b16 %v4830
    %v4896 = vunpack.c.l.b16 %v4831
    %v4897 = vunpack.c.l.b16 %v4832
    %v4898 = vunpack.c.l.b16 %v4833
    %v4899 = vunpack.c.l.b16 %v4834
    %v4900 = vunpack.c.l.b16 %v4835
    %v4901 = vunpack.c.l.b16 %v4836
    %v4902 = vunpack.c.l.b16 %v4837
    %v4903 = vunpack.c.l.b16 %v4838
    %v4904 = vpack.c.b16 %v4884, %v4883
    %v4905 = vpack.c.b16 %v4886, %v4885
    %v4906 = vpack.c.b16 %v4888, %v4887
    %v4907 = vpack.c.b16 %v4890, %v4889
    %v4908 = vpack.c.b16 %v4892, %v4891
    %v4909 = vpack.c.b16 %v4894, %v4893
    %v4910 = vpack.c.b16 %v4896, %v4895
    %v4911 = vpack.c.b16 %v4898, %v4897
    %v4912 = vpack.c.b16 %v4900, %v4899
    %v4913 = vpack.c.b16 %v4902, %v4901
    %v4914 = vpack.c.b16 %v4903, %v4903
    %v4915 = vrot.slane %v4904, 2
    %v4916 = vrot.slane %v4905, 2
    %v4917 = vsel %vm2840, %v4915, %v4916
    %v4918 = vrot.slane %v4906, 2
    %v4919 = vsel %vm2840, %v4916, %v4918
    %v4920 = vrot.slane %v4907, 2
    %v4921 = vsel %vm2840, %v4918, %v4920
    %v4922 = vrot.slane %v4908, 2
    %v4923 = vsel %vm2840, %v4920, %v4922
    %v4924 = vrot.slane %v4909, 2
    %v4925 = vsel %vm2840, %v4922, %v4924
    %v4926 = vrot.slane %v4910, 2
    %v4927 = vsel %vm2840, %v4924, %v4926
    %v4928 = vrot.slane %v4911, 2
    %v4929 = vsel %vm2840, %v4926, %v4928
    %v4930 = vrot.slane %v4912, 2
    %v4931 = vsel %vm2840, %v4928, %v4930
    %v4932 = vrot.slane %v4913, 2
    %v4933 = vsel %vm2840, %v4930, %v4932
    %v4934 = vrot.slane %v4914, 2
    %v4935 = vsel %vm2840, %v4932, %v4934
    %v4938 = vunpack.c.l.b16 %v4860
    %v4939 = vunpack.c.l.b16 %v4861
    %v4940 = vpack.c.b16 %v4939, %v4938
    %v4943 = vsel %vm149, %v4917, 0
    %v4946 = vsel %vm149, %v4919, 0
    %v4949 = vsel %vm149, %v4921, 0
    %v4952 = vsel %vm149, %v4923, 0
    %v4955 = vsel %vm149, %v4925, 0
    %v4958 = vsel %vm149, %v4927, 0
    %v4961 = vsel %vm149, %v4929, 0
    %v4964 = vsel %vm149, %v4931, 0
    %v4967 = vsel %vm149, %v4933, 0
    %v4970 = vsel %vm149, %v4935, 0
    %4972 = vmatprep.subr.bf16.mxu0 0
    %4973 = vmatpush1.bf16.msra.mxu0 %v4940
    %4974 = vmatprep.subr.bf16.mxu0 0
    %4975 = vmatpush1.bf16.msra.mxu0 0
    %4976 = vmatprep.subr.bf16.mxu0 0
    %4977 = vmatpush1.bf16.msra.mxu0 0
    %4978 = vmatprep.subr.bf16.mxu0 0
    %4979 = vmatpush1.bf16.msra.mxu0 0
    %4980 = vmatprep.subr.bf16.mxu0 0
    %4981 = vmatpush1.bf16.msra.mxu0 0
    %4982 = vmatprep.subr.bf16.mxu0 0
    %4983 = vmatpush1.bf16.msra.mxu0 0
    %4984 = vmatprep.subr.bf16.mxu0 0
    %4985 = vmatpush1.bf16.msra.mxu0 0
    %4986 = vmatprep.subr.bf16.mxu0 0
    %4987 = vmatpush1.bf16.msra.mxu0 0
    %4988 = vmatprep.subr.bf16.mxu0 0
    %4989 = vmatpush1.bf16.msra.mxu0 0
    %4990 = vmatprep.subr.bf16.mxu0 0
    %4991 = vmatpush1.bf16.msra.mxu0 0
    %4992 = vmatprep.subr.bf16.mxu0 0
    %4993 = vmatpush1.bf16.msra.mxu0 0
    %4994 = vmatprep.subr.bf16.mxu0 0
    %4995 = vmatpush1.bf16.msra.mxu0 0
    %4996 = vmatprep.subr.bf16.mxu0 0
    %4997 = vmatpush1.bf16.msra.mxu0 0
    %4998 = vmatprep.subr.bf16.mxu0 0
    %4999 = vmatpush1.bf16.msra.mxu0 0
    %5000 = vmatprep.subr.bf16.mxu0 0
    %5001 = vmatpush1.bf16.msra.mxu0 0
    %5002 = vmatprep.subr.bf16.mxu0 0
    %5003 = vmatpush1.bf16.msra.mxu0 0
    %5004 = vmatprep.mubr.bf16.mxu0 0
    %5005 = vmatmul.mubr.bf16.gmra.mrb[0].mxu0 %v4943
    %v5006 = vpop.f32.mrb[0].mxu0
    %v5007 = vadd.f32 0.0, %v5006
    %v5008 = vpop.f32.mrb[0].mxu0
    %v5009 = vpop.f32.mrb[0].mxu0
    %v5010 = vadd.f32 0.0, %v5009
    %v5011 = vpop.f32.mrb[0].mxu0
    %5012 = vmatprep.mubr.bf16.mxu0 0
    %5013 = vmatmul.mubr.bf16.gmra.mrb[0].mxu0 %v4946
    %v5014 = vpop.f32.mrb[0].mxu0
    %v5015 = vadd.f32 0.0, %v5014
    %v5016 = vpop.f32.mrb[0].mxu0
    %v5017 = vpop.f32.mrb[0].mxu0
    %v5018 = vadd.f32 0.0, %v5017
    %v5019 = vpop.f32.mrb[0].mxu0
    %5020 = vmatprep.mubr.bf16.mxu0 0
    %5021 = vmatmul.mubr.bf16.gmra.mrb[0].mxu0 %v4949
    %v5022 = vpop.f32.mrb[0].mxu0
    %v5023 = vadd.f32 0.0, %v5022
    %v5024 = vpop.f32.mrb[0].mxu0
    %v5025 = vpop.f32.mrb[0].mxu0
    %v5026 = vadd.f32 0.0, %v5025
    %v5027 = vpop.f32.mrb[0].mxu0
    %5028 = vmatprep.mubr.bf16.mxu0 0
    %5029 = vmatmul.mubr.bf16.gmra.mrb[0].mxu0 %v4952
    %v5030 = vpop.f32.mrb[0].mxu0
    %v5031 = vadd.f32 0.0, %v5030
    %v5032 = vpop.f32.mrb[0].mxu0
    %v5033 = vpop.f32.mrb[0].mxu0
    %v5034 = vadd.f32 0.0, %v5033
    %v5035 = vpop.f32.mrb[0].mxu0
    %5036 = vmatprep.mubr.bf16.mxu0 0
    %5037 = vmatmul.mubr.bf16.gmra.mrb[0].mxu0 %v4955
    %v5038 = vpop.f32.mrb[0].mxu0
    %v5039 = vadd.f32 0.0, %v5038
    %v5040 = vpop.f32.mrb[0].mxu0
    %v5041 = vpop.f32.mrb[0].mxu0
    %v5042 = vadd.f32 0.0, %v5041
    %v5043 = vpop.f32.mrb[0].mxu0
    %5044 = vmatprep.mubr.bf16.mxu0 0
    %5045 = vmatmul.mubr.bf16.gmra.mrb[0].mxu0 %v4958
    %v5046 = vpop.f32.mrb[0].mxu0
    %v5047 = vadd.f32 0.0, %v5046
    %v5048 = vpop.f32.mrb[0].mxu0
    %v5049 = vpop.f32.mrb[0].mxu0
    %v5050 = vadd.f32 0.0, %v5049
    %v5051 = vpop.f32.mrb[0].mxu0
    %5052 = vmatprep.mubr.bf16.mxu0 0
    %5053 = vmatmul.mubr.bf16.gmra.mrb[0].mxu0 %v4961
    %v5054 = vpop.f32.mrb[0].mxu0
    %v5055 = vadd.f32 0.0, %v5054
    %v5056 = vpop.f32.mrb[0].mxu0
    %v5057 = vpop.f32.mrb[0].mxu0
    %v5058 = vadd.f32 0.0, %v5057
    %v5059 = vpop.f32.mrb[0].mxu0
    %5060 = vmatprep.mubr.bf16.mxu0 0
    %5061 = vmatmul.mubr.bf16.gmra.mrb[0].mxu0 %v4964
    %v5062 = vpop.f32.mrb[0].mxu0
    %v5063 = vadd.f32 0.0, %v5062
    %v5064 = vpop.f32.mrb[0].mxu0
    %v5065 = vpop.f32.mrb[0].mxu0
    %v5066 = vadd.f32 0.0, %v5065
    %v5067 = vpop.f32.mrb[0].mxu0
    %5068 = vmatprep.mubr.bf16.mxu0 0
    %5069 = vmatmul.mubr.bf16.gmra.mrb[0].mxu0 %v4967
    %v5070 = vpop.f32.mrb[0].mxu0
    %v5071 = vadd.f32 0.0, %v5070
    %v5072 = vpop.f32.mrb[0].mxu0
    %v5073 = vpop.f32.mrb[0].mxu0
    %v5074 = vadd.f32 0.0, %v5073
    %v5075 = vpop.f32.mrb[0].mxu0
    %5076 = vmatprep.mubr.bf16.mxu0 0
    %5077 = vmatmul.mubr.bf16.gmra.mrb[0].mxu0 %v4970
    %v5078 = vpop.f32.mrb[0].mxu0
    %v5079 = vadd.f32 0.0, %v5078
    %v5080 = vpop.f32.mrb[0].mxu0
    %v5081 = vpop.f32.mrb[0].mxu0
    %v5082 = vadd.f32 0.0, %v5081
    %v5083 = vpop.f32.mrb[0].mxu0
    %5084 = vdwg.mxu0
    %v5085 = vadd.f32 %v4839, %v5007
    %v5086 = vadd.f32 %v4840, %v5010
    %v5087 = vadd.f32 %v4841, %v5015
    %v5088 = vadd.f32 %v4842, %v5018
    %v5089 = vadd.f32 %v4843, %v5023
    %v5090 = vadd.f32 %v4844, %v5026
    %v5091 = vadd.f32 %v4845, %v5031
    %v5092 = vadd.f32 %v4846, %v5034
    %v5093 = vadd.f32 %v4847, %v5039
    %v5094 = vadd.f32 %v4848, %v5042
    %v5095 = vadd.f32 %v4849, %v5047
    %v5096 = vadd.f32 %v4850, %v5050
    %v5097 = vadd.f32 %v4851, %v5055
    %v5098 = vadd.f32 %v4852, %v5058
    %v5099 = vadd.f32 %v4853, %v5063
    %v5100 = vadd.f32 %v4854, %v5066
    %v5101 = vadd.f32 %v4855, %v5071
    %v5102 = vadd.f32 %v4856, %v5074
    %v5103 = vadd.f32 %v4857, %v5079
    %v5104 = vadd.f32 %v4858, %v5082
    %5105 = vst.msk [vmem:[#allocation2] sm:$0xff] %vm313, %v5085
    %5106 = vst.msk [vmem:[#allocation2 + $0x8] sm:$0xff] %vm313, %v5086
    %5107 = vst.msk [vmem:[#allocation2 + $0x10] sm:$0xff] %vm313, %v5087
    %5108 = vst.msk [vmem:[#allocation2 + $0x18] sm:$0xff] %vm313, %v5088
    %5109 = vst.msk [vmem:[#allocation2 + $0x20] sm:$0xff] %vm313, %v5089
    %5110 = vst.msk [vmem:[#allocation2 + $0x28] sm:$0xff] %vm313, %v5090
    %5111 = vst.msk [vmem:[#allocation2 + $0x30] sm:$0xff] %vm313, %v5091
    %5112 = vst.msk [vmem:[#allocation2 + $0x38] sm:$0xff] %vm313, %v5092
    %5113 = vst.msk [vmem:[#allocation2 + $0x40] sm:$0xff] %vm313, %v5093
    %5114 = vst.msk [vmem:[#allocation2 + $0x48] sm:$0xff] %vm313, %v5094
    %5115 = vst.msk [vmem:[#allocation2 + $0x50] sm:$0xff] %vm313, %v5095
    %5116 = vst.msk [vmem:[#allocation2 + $0x58] sm:$0xff] %vm313, %v5096
    %5117 = vst.msk [vmem:[#allocation2 + $0x60] sm:$0xff] %vm313, %v5097
    %5118 = vst.msk [vmem:[#allocation2 + $0x68] sm:$0xff] %vm313, %v5098
    %5119 = vst.msk [vmem:[#allocation2 + $0x70] sm:$0xff] %vm313, %v5099
    %5120 = vst.msk [vmem:[#allocation2 + $0x78] sm:$0xff] %vm313, %v5100
    %5121 = vst.msk [vmem:[#allocation2 + $0x80] sm:$0xff] %vm313, %v5101
    %5122 = vst.msk [vmem:[#allocation2 + $0x88] sm:$0xff] %vm313, %v5102
    %5123 = vst.msk [vmem:[#allocation2 + $0x90] sm:$0xff] %vm313, %v5103
    %5124 = vst.msk [vmem:[#allocation2 + $0x98] sm:$0xff] %vm313, %v5104
    %v5125 = vld [vmem:[%s0 + $0x14] sm:$0xc]
    %v5126 = vld [vmem:[%s0 + $0x18] sm:$0xf]
    %v5127 = vld [vmem:[%s0 + $0x1c] sm:$0xf]
    %v5128 = vld [vmem:[%s0 + $0x20] sm:$0xf]
    %v5129 = vld [vmem:[%s0 + $0x24] sm:$0xf]
    %v5130 = vld [vmem:[%s0 + $0x28] sm:$0xf]
    %v5131 = vld [vmem:[%s0 + $0x2c] sm:$0xf]
    %v5132 = vld [vmem:[%s0 + $0x30] sm:$0xf]
    %v5133 = vld [vmem:[%s0 + $0x34] sm:$0xf]
    %v5134 = vld [vmem:[%s0 + $0x38] sm:$0xf]
    %v5135 = vld [vmem:[%s0 + $0x3c] sm:$0xf]
    %v5136 = vld [vmem:[%s0 + $0x40] sm:$0xf]
    %v5137 = vld [vmem:[%s0 + $0x44] sm:$0xf]
    %v5138 = vld [vmem:[%s0 + $0x48] sm:$0xf]
    %v5139 = vld [vmem:[%s0 + $0x4c] sm:$0xf]
    %v5140 = vld [vmem:[%s0 + $0x50] sm:$0xf]
    %v5141 = vld [vmem:[%s0 + $0x54] sm:$0xf]
    %v5142 = vld [vmem:[%s0 + $0x58] sm:$0xf]
    %v5143 = vld [vmem:[%s0 + $0x5c] sm:$0xf]
    %v5144 = vld [vmem:[%s0 + $0x60] sm:$0xf]
    %v5145 = vld [vmem:[%s0 + $0x64] sm:$0x7]
    %v5146 = vld [vmem:[#allocation2] sm:$0xff]
    %v5147 = vld [vmem:[#allocation2 + $0x8] sm:$0xff]
    %v5148 = vld [vmem:[#allocation2 + $0x10] sm:$0xff]
    %v5149 = vld [vmem:[#allocation2 + $0x18] sm:$0xff]
    %v5150 = vld [vmem:[#allocation2 + $0x20] sm:$0xff]
    %v5151 = vld [vmem:[#allocation2 + $0x28] sm:$0xff]
    %v5152 = vld [vmem:[#allocation2 + $0x30] sm:$0xff]
    %v5153 = vld [vmem:[#allocation2 + $0x38] sm:$0xff]
    %v5154 = vld [vmem:[#allocation2 + $0x40] sm:$0xff]
    %v5155 = vld [vmem:[#allocation2 + $0x48] sm:$0xff]
    %v5156 = vld [vmem:[#allocation2 + $0x50] sm:$0xff]
    %v5157 = vld [vmem:[#allocation2 + $0x58] sm:$0xff]
    %v5158 = vld [vmem:[#allocation2 + $0x60] sm:$0xff]
    %v5159 = vld [vmem:[#allocation2 + $0x68] sm:$0xff]
    %v5160 = vld [vmem:[#allocation2 + $0x70] sm:$0xff]
    %v5161 = vld [vmem:[#allocation2 + $0x78] sm:$0xff]
    %v5162 = vld [vmem:[#allocation2 + $0x80] sm:$0xff]
    %v5163 = vld [vmem:[#allocation2 + $0x88] sm:$0xff]
    %v5164 = vld [vmem:[#allocation2 + $0x90] sm:$0xff]
    %v5165 = vld [vmem:[#allocation2 + $0x98] sm:$0xff]
    %s5166 = scalar_lea.vmem [#allocation3], 120
    %v5167 = vld [vmem:[%s5166] sm:$0xf]
    %v5168 = vld [vmem:[%s5166 + $0x4] sm:$0xf]
    %v5190 = vunpack.c.l.b16 %v5125
    %v5191 = vunpack.c.l.b16 %v5126
    %v5192 = vunpack.c.l.b16 %v5127
    %v5193 = vunpack.c.l.b16 %v5128
    %v5194 = vunpack.c.l.b16 %v5129
    %v5195 = vunpack.c.l.b16 %v5130
    %v5196 = vunpack.c.l.b16 %v5131
    %v5197 = vunpack.c.l.b16 %v5132
    %v5198 = vunpack.c.l.b16 %v5133
    %v5199 = vunpack.c.l.b16 %v5134
    %v5200 = vunpack.c.l.b16 %v5135
    %v5201 = vunpack.c.l.b16 %v5136
    %v5202 = vunpack.c.l.b16 %v5137
    %v5203 = vunpack.c.l.b16 %v5138
    %v5204 = vunpack.c.l.b16 %v5139
    %v5205 = vunpack.c.l.b16 %v5140
    %v5206 = vunpack.c.l.b16 %v5141
    %v5207 = vunpack.c.l.b16 %v5142
    %v5208 = vunpack.c.l.b16 %v5143
    %v5209 = vunpack.c.l.b16 %v5144
    %v5210 = vunpack.c.l.b16 %v5145
    %v5211 = vpack.c.b16 %v5191, %v5190
    %v5212 = vpack.c.b16 %v5193, %v5192
    %v5213 = vpack.c.b16 %v5195, %v5194
    %v5214 = vpack.c.b16 %v5197, %v5196
    %v5215 = vpack.c.b16 %v5199, %v5198
    %v5216 = vpack.c.b16 %v5201, %v5200
    %v5217 = vpack.c.b16 %v5203, %v5202
    %v5218 = vpack.c.b16 %v5205, %v5204
    %v5219 = vpack.c.b16 %v5207, %v5206
    %v5220 = vpack.c.b16 %v5209, %v5208
    %v5221 = vpack.c.b16 %v5210, %v5210
    %v5223 = vshrl.u32 %v5211, 16
    %v5225 = vrot.slane %v5223, 2
    %v5226 = vshll.u32 %v5211, 16
    %v5228 = vrot.slane %v5226, 3
    %v5229 = vor.u32 %v5225, %v5228
    %v5231 = vshrl.u32 %v5212, 16
    %v5233 = vrot.slane %v5231, 2
    %v5234 = vshll.u32 %v5212, 16
    %v5236 = vrot.slane %v5234, 3
    %v5237 = vor.u32 %v5233, %v5236
    %v5238 = vsel %vm3148, %v5229, %v5237
    %v5240 = vshrl.u32 %v5213, 16
    %v5242 = vrot.slane %v5240, 2
    %v5243 = vshll.u32 %v5213, 16
    %v5245 = vrot.slane %v5243, 3
    %v5246 = vor.u32 %v5242, %v5245
    %v5247 = vsel %vm3148, %v5237, %v5246
    %v5249 = vshrl.u32 %v5214, 16
    %v5251 = vrot.slane %v5249, 2
    %v5252 = vshll.u32 %v5214, 16
    %v5254 = vrot.slane %v5252, 3
    %v5255 = vor.u32 %v5251, %v5254
    %v5256 = vsel %vm3148, %v5246, %v5255
    %v5258 = vshrl.u32 %v5215, 16
    %v5260 = vrot.slane %v5258, 2
    %v5261 = vshll.u32 %v5215, 16
    %v5263 = vrot.slane %v5261, 3
    %v5264 = vor.u32 %v5260, %v5263
    %v5265 = vsel %vm3148, %v5255, %v5264
    %v5267 = vshrl.u32 %v5216, 16
    %v5269 = vrot.slane %v5267, 2
    %v5270 = vshll.u32 %v5216, 16
    %v5272 = vrot.slane %v5270, 3
    %v5273 = vor.u32 %v5269, %v5272
    %v5274 = vsel %vm3148, %v5264, %v5273
    %v5276 = vshrl.u32 %v5217, 16
    %v5278 = vrot.slane %v5276, 2
    %v5279 = vshll.u32 %v5217, 16
    %v5281 = vrot.slane %v5279, 3
    %v5282 = vor.u32 %v5278, %v5281
    %v5283 = vsel %vm3148, %v5273, %v5282
    %v5285 = vshrl.u32 %v5218, 16
    %v5287 = vrot.slane %v5285, 2
    %v5288 = vshll.u32 %v5218, 16
    %v5290 = vrot.slane %v5288, 3
    %v5291 = vor.u32 %v5287, %v5290
    %v5292 = vsel %vm3148, %v5282, %v5291
    %v5294 = vshrl.u32 %v5219, 16
    %v5296 = vrot.slane %v5294, 2
    %v5297 = vshll.u32 %v5219, 16
    %v5299 = vrot.slane %v5297, 3
    %v5300 = vor.u32 %v5296, %v5299
    %v5301 = vsel %vm3148, %v5291, %v5300
    %v5303 = vshrl.u32 %v5220, 16
    %v5305 = vrot.slane %v5303, 2
    %v5306 = vshll.u32 %v5220, 16
    %v5308 = vrot.slane %v5306, 3
    %v5309 = vor.u32 %v5305, %v5308
    %v5310 = vsel %vm3148, %v5300, %v5309
    %v5312 = vshrl.u32 %v5221, 16
    %v5314 = vrot.slane %v5312, 2
    %v5315 = vshll.u32 %v5221, 16
    %v5317 = vrot.slane %v5315, 3
    %v5318 = vor.u32 %v5314, %v5317
    %v5319 = vsel %vm3148, %v5309, %v5318
    %v5322 = vunpack.c.l.b16 %v5167
    %v5323 = vunpack.c.l.b16 %v5168
    %v5324 = vpack.c.b16 %v5323, %v5322
    %v5327 = vsel %vm149, %v5238, 0
    %v5330 = vsel %vm149, %v5247, 0
    %v5333 = vsel %vm149, %v5256, 0
    %v5336 = vsel %vm149, %v5265, 0
    %v5339 = vsel %vm149, %v5274, 0
    %v5342 = vsel %vm149, %v5283, 0
    %v5345 = vsel %vm149, %v5292, 0
    %v5348 = vsel %vm149, %v5301, 0
    %v5351 = vsel %vm149, %v5310, 0
    %v5354 = vsel %vm149, %v5319, 0
    %5356 = vmatprep.subr.bf16.mxu0 0
    %5357 = vmatpush1.bf16.msra.mxu0 %v5324
    %5358 = vmatprep.subr.bf16.mxu0 0
    %5359 = vmatpush1.bf16.msra.mxu0 0
    %5360 = vmatprep.subr.bf16.mxu0 0
    %5361 = vmatpush1.bf16.msra.mxu0 0
    %5362 = vmatprep.subr.bf16.mxu0 0
    %5363 = vmatpush1.bf16.msra.mxu0 0
    %5364 = vmatprep.subr.bf16.mxu0 0
    %5365 = vmatpush1.bf16.msra.mxu0 0
    %5366 = vmatprep.subr.bf16.mxu0 0
    %5367 = vmatpush1.bf16.msra.mxu0 0
    %5368 = vmatprep.subr.bf16.mxu0 0
    %5369 = vmatpush1.bf16.msra.mxu0 0
    %5370 = vmatprep.subr.bf16.mxu0 0
    %5371 = vmatpush1.bf16.msra.mxu0 0
    %5372 = vmatprep.subr.bf16.mxu0 0
    %5373 = vmatpush1.bf16.msra.mxu0 0
    %5374 = vmatprep.subr.bf16.mxu0 0
    %5375 = vmatpush1.bf16.msra.mxu0 0
    %5376 = vmatprep.subr.bf16.mxu0 0
    %5377 = vmatpush1.bf16.msra.mxu0 0
    %5378 = vmatprep.subr.bf16.mxu0 0
    %5379 = vmatpush1.bf16.msra.mxu0 0
    %5380 = vmatprep.subr.bf16.mxu0 0
    %5381 = vmatpush1.bf16.msra.mxu0 0
    %5382 = vmatprep.subr.bf16.mxu0 0
    %5383 = vmatpush1.bf16.msra.mxu0 0
    %5384 = vmatprep.subr.bf16.mxu0 0
    %5385 = vmatpush1.bf16.msra.mxu0 0
    %5386 = vmatprep.subr.bf16.mxu0 0
    %5387 = vmatpush1.bf16.msra.mxu0 0
    %5388 = vmatprep.mubr.bf16.mxu0 0
    %5389 = vmatmul.mubr.bf16.gmra.mrb[0].mxu0 %v5327
    %v5390 = vpop.f32.mrb[0].mxu0
    %v5391 = vadd.f32 0.0, %v5390
    %v5392 = vpop.f32.mrb[0].mxu0
    %v5393 = vpop.f32.mrb[0].mxu0
    %v5394 = vadd.f32 0.0, %v5393
    %v5395 = vpop.f32.mrb[0].mxu0
    %5396 = vmatprep.mubr.bf16.mxu0 0
    %5397 = vmatmul.mubr.bf16.gmra.mrb[0].mxu0 %v5330
    %v5398 = vpop.f32.mrb[0].mxu0
    %v5399 = vadd.f32 0.0, %v5398
    %v5400 = vpop.f32.mrb[0].mxu0
    %v5401 = vpop.f32.mrb[0].mxu0
    %v5402 = vadd.f32 0.0, %v5401
    %v5403 = vpop.f32.mrb[0].mxu0
    %5404 = vmatprep.mubr.bf16.mxu0 0
    %5405 = vmatmul.mubr.bf16.gmra.mrb[0].mxu0 %v5333
    %v5406 = vpop.f32.mrb[0].mxu0
    %v5407 = vadd.f32 0.0, %v5406
    %v5408 = vpop.f32.mrb[0].mxu0
    %v5409 = vpop.f32.mrb[0].mxu0
    %v5410 = vadd.f32 0.0, %v5409
    %v5411 = vpop.f32.mrb[0].mxu0
    %5412 = vmatprep.mubr.bf16.mxu0 0
    %5413 = vmatmul.mubr.bf16.gmra.mrb[0].mxu0 %v5336
    %v5414 = vpop.f32.mrb[0].mxu0
    %v5415 = vadd.f32 0.0, %v5414
    %v5416 = vpop.f32.mrb[0].mxu0
    %v5417 = vpop.f32.mrb[0].mxu0
    %v5418 = vadd.f32 0.0, %v5417
    %v5419 = vpop.f32.mrb[0].mxu0
    %5420 = vmatprep.mubr.bf16.mxu0 0
    %5421 = vmatmul.mubr.bf16.gmra.mrb[0].mxu0 %v5339
    %v5422 = vpop.f32.mrb[0].mxu0
    %v5423 = vadd.f32 0.0, %v5422
    %v5424 = vpop.f32.mrb[0].mxu0
    %v5425 = vpop.f32.mrb[0].mxu0
    %v5426 = vadd.f32 0.0, %v5425
    %v5427 = vpop.f32.mrb[0].mxu0
    %5428 = vmatprep.mubr.bf16.mxu0 0
    %5429 = vmatmul.mubr.bf16.gmra.mrb[0].mxu0 %v5342
    %v5430 = vpop.f32.mrb[0].mxu0
    %v5431 = vadd.f32 0.0, %v5430
    %v5432 = vpop.f32.mrb[0].mxu0
    %v5433 = vpop.f32.mrb[0].mxu0
    %v5434 = vadd.f32 0.0, %v5433
    %v5435 = vpop.f32.mrb[0].mxu0
    %5436 = vmatprep.mubr.bf16.mxu0 0
    %5437 = vmatmul.mubr.bf16.gmra.mrb[0].mxu0 %v5345
    %v5438 = vpop.f32.mrb[0].mxu0
    %v5439 = vadd.f32 0.0, %v5438
    %v5440 = vpop.f32.mrb[0].mxu0
    %v5441 = vpop.f32.mrb[0].mxu0
    %v5442 = vadd.f32 0.0, %v5441
    %v5443 = vpop.f32.mrb[0].mxu0
    %5444 = vmatprep.mubr.bf16.mxu0 0
    %5445 = vmatmul.mubr.bf16.gmra.mrb[0].mxu0 %v5348
    %v5446 = vpop.f32.mrb[0].mxu0
    %v5447 = vadd.f32 0.0, %v5446
    %v5448 = vpop.f32.mrb[0].mxu0
    %v5449 = vpop.f32.mrb[0].mxu0
    %v5450 = vadd.f32 0.0, %v5449
    %v5451 = vpop.f32.mrb[0].mxu0
    %5452 = vmatprep.mubr.bf16.mxu0 0
    %5453 = vmatmul.mubr.bf16.gmra.mrb[0].mxu0 %v5351
    %v5454 = vpop.f32.mrb[0].mxu0
    %v5455 = vadd.f32 0.0, %v5454
    %v5456 = vpop.f32.mrb[0].mxu0
    %v5457 = vpop.f32.mrb[0].mxu0
    %v5458 = vadd.f32 0.0, %v5457
    %v5459 = vpop.f32.mrb[0].mxu0
    %5460 = vmatprep.mubr.bf16.mxu0 0
    %5461 = vmatmul.mubr.bf16.gmra.mrb[0].mxu0 %v5354
    %v5462 = vpop.f32.mrb[0].mxu0
    %v5463 = vadd.f32 0.0, %v5462
    %v5464 = vpop.f32.mrb[0].mxu0
    %v5465 = vpop.f32.mrb[0].mxu0
    %v5466 = vadd.f32 0.0, %v5465
    %v5467 = vpop.f32.mrb[0].mxu0
    %5468 = vdwg.mxu0
    %v5469 = vadd.f32 %v5146, %v5391
    %v5470 = vadd.f32 %v5147, %v5394
    %v5471 = vadd.f32 %v5148, %v5399
    %v5472 = vadd.f32 %v5149, %v5402
    %v5473 = vadd.f32 %v5150, %v5407
    %v5474 = vadd.f32 %v5151, %v5410
    %v5475 = vadd.f32 %v5152, %v5415
    %v5476 = vadd.f32 %v5153, %v5418
    %v5477 = vadd.f32 %v5154, %v5423
    %v5478 = vadd.f32 %v5155, %v5426
    %v5479 = vadd.f32 %v5156, %v5431
    %v5480 = vadd.f32 %v5157, %v5434
    %v5481 = vadd.f32 %v5158, %v5439
    %v5482 = vadd.f32 %v5159, %v5442
    %v5483 = vadd.f32 %v5160, %v5447
    %v5484 = vadd.f32 %v5161, %v5450
    %v5485 = vadd.f32 %v5162, %v5455
    %v5486 = vadd.f32 %v5163, %v5458
    %v5487 = vadd.f32 %v5164, %v5463
    %v5488 = vadd.f32 %v5165, %v5466
    %5489 = vst.msk [vmem:[#allocation2] sm:$0xff] %vm313, %v5469
    %5490 = vst.msk [vmem:[#allocation2 + $0x8] sm:$0xff] %vm313, %v5470
    %5491 = vst.msk [vmem:[#allocation2 + $0x10] sm:$0xff] %vm313, %v5471
    %5492 = vst.msk [vmem:[#allocation2 + $0x18] sm:$0xff] %vm313, %v5472
    %5493 = vst.msk [vmem:[#allocation2 + $0x20] sm:$0xff] %vm313, %v5473
    %5494 = vst.msk [vmem:[#allocation2 + $0x28] sm:$0xff] %vm313, %v5474
    %5495 = vst.msk [vmem:[#allocation2 + $0x30] sm:$0xff] %vm313, %v5475
    %5496 = vst.msk [vmem:[#allocation2 + $0x38] sm:$0xff] %vm313, %v5476
    %5497 = vst.msk [vmem:[#allocation2 + $0x40] sm:$0xff] %vm313, %v5477
    %5498 = vst.msk [vmem:[#allocation2 + $0x48] sm:$0xff] %vm313, %v5478
    %5499 = vst.msk [vmem:[#allocation2 + $0x50] sm:$0xff] %vm313, %v5479
    %5500 = vst.msk [vmem:[#allocation2 + $0x58] sm:$0xff] %vm313, %v5480
    %5501 = vst.msk [vmem:[#allocation2 + $0x60] sm:$0xff] %vm313, %v5481
    %5502 = vst.msk [vmem:[#allocation2 + $0x68] sm:$0xff] %vm313, %v5482
    %5503 = vst.msk [vmem:[#allocation2 + $0x70] sm:$0xff] %vm313, %v5483
    %5504 = vst.msk [vmem:[#allocation2 + $0x78] sm:$0xff] %vm313, %v5484
    %5505 = vst.msk [vmem:[#allocation2 + $0x80] sm:$0xff] %vm313, %v5485
    %5506 = vst.msk [vmem:[#allocation2 + $0x88] sm:$0xff] %vm313, %v5486
    %5507 = vst.msk [vmem:[#allocation2 + $0x90] sm:$0xff] %vm313, %v5487
    %5508 = vst.msk [vmem:[#allocation2 + $0x98] sm:$0xff] %vm313, %v5488
    // Predicated region
    $region18: #{tpu_custom_call.1} parent=1 // pred_check
      %p5509 = pneg %p26
    $region19: #{tpu_custom_call.1} parent=1 // pred_check_branch
      %5511 = sbr.rel (%p5509) target = $region21
    $region20: #{tpu_custom_call.1} parent=1 // pred_region
      %v5512 = vld [vmem:[#allocation2] sm:$0xff]
      %v5513 = vld [vmem:[#allocation2 + $0x8] sm:$0xff]
      %v5514 = vld [vmem:[#allocation2 + $0x10] sm:$0xff]
      %v5515 = vld [vmem:[#allocation2 + $0x18] sm:$0xff]
      %v5516 = vld [vmem:[#allocation2 + $0x20] sm:$0xff]
      %v5517 = vld [vmem:[#allocation2 + $0x28] sm:$0xff]
      %v5518 = vld [vmem:[#allocation2 + $0x30] sm:$0xff]
      %v5519 = vld [vmem:[#allocation2 + $0x38] sm:$0xff]
      %v5520 = vld [vmem:[#allocation2 + $0x40] sm:$0xff]
      %v5521 = vld [vmem:[#allocation2 + $0x48] sm:$0xff]
      %v5522 = vld [vmem:[#allocation2 + $0x50] sm:$0xff]
      %v5523 = vld [vmem:[#allocation2 + $0x58] sm:$0xff]
      %v5524 = vld [vmem:[#allocation2 + $0x60] sm:$0xff]
      %v5525 = vld [vmem:[#allocation2 + $0x68] sm:$0xff]
      %v5526 = vld [vmem:[#allocation2 + $0x70] sm:$0xff]
      %v5527 = vld [vmem:[#allocation2 + $0x78] sm:$0xff]
      %v5528 = vld [vmem:[#allocation2 + $0x80] sm:$0xff]
      %v5529 = vld [vmem:[#allocation2 + $0x88] sm:$0xff]
      %v5530 = vld [vmem:[#allocation2 + $0x90] sm:$0xff]
      %v5531 = vld [vmem:[#allocation2 + $0x98] sm:$0xff]
      %v5532 = vpack.c.bf16 %v5513, %v5512
      %v5533 = vpack.c.bf16 %v5515, %v5514
      %v5534 = vpack.c.bf16 %v5517, %v5516
      %v5535 = vpack.c.bf16 %v5519, %v5518
      %v5536 = vpack.c.bf16 %v5521, %v5520
      %v5537 = vpack.c.bf16 %v5523, %v5522
      %v5538 = vpack.c.bf16 %v5525, %v5524
      %v5539 = vpack.c.bf16 %v5527, %v5526
      %v5540 = vpack.c.bf16 %v5529, %v5528
      %v5541 = vpack.c.bf16 %v5531, %v5530
      %v5552 = vunpack.c.l.b16 %v5532
      %v5553 = vunpack.c.h.b16 %v5532
      %v5554 = vunpack.c.l.b16 %v5533
      %v5555 = vunpack.c.h.b16 %v5533
      %v5556 = vunpack.c.l.b16 %v5534
      %v5557 = vunpack.c.h.b16 %v5534
      %v5558 = vunpack.c.l.b16 %v5535
      %v5559 = vunpack.c.h.b16 %v5535
      %v5560 = vunpack.c.l.b16 %v5536
      %v5561 = vunpack.c.h.b16 %v5536
      %v5562 = vunpack.c.l.b16 %v5537
      %v5563 = vunpack.c.h.b16 %v5537
      %v5564 = vunpack.c.l.b16 %v5538
      %v5565 = vunpack.c.h.b16 %v5538
      %v5566 = vunpack.c.l.b16 %v5539
      %v5567 = vunpack.c.h.b16 %v5539
      %v5568 = vunpack.c.l.b16 %v5540
      %v5569 = vunpack.c.h.b16 %v5540
      %v5570 = vunpack.c.l.b16 %v5541
      %v5571 = vunpack.c.h.b16 %v5541
      %v5572 = vpack.c.b16 %v5552, %v5552
      %v5573 = vpack.c.b16 %v5553, %v5553
      %v5574 = vpack.c.b16 %v5554, %v5554
      %v5575 = vpack.c.b16 %v5555, %v5555
      %v5576 = vpack.c.b16 %v5556, %v5556
      %v5577 = vpack.c.b16 %v5557, %v5557
      %v5578 = vpack.c.b16 %v5558, %v5558
      %v5579 = vpack.c.b16 %v5559, %v5559
      %v5580 = vpack.c.b16 %v5560, %v5560
      %v5581 = vpack.c.b16 %v5561, %v5561
      %v5582 = vpack.c.b16 %v5562, %v5562
      %v5583 = vpack.c.b16 %v5563, %v5563
      %v5584 = vpack.c.b16 %v5564, %v5564
      %v5585 = vpack.c.b16 %v5565, %v5565
      %v5586 = vpack.c.b16 %v5566, %v5566
      %v5587 = vpack.c.b16 %v5567, %v5567
      %v5588 = vpack.c.b16 %v5568, %v5568
      %v5589 = vpack.c.b16 %v5569, %v5569
      %v5590 = vpack.c.b16 %v5570, %v5570
      %v5591 = vpack.c.b16 %v5571, %v5571
      %vm5612 = vcmask 257024
      %5613 = vst.msk [vmem:[%s2] sm:$0xf] %vm5612, %v5572
      %5614 = vst.msk [vmem:[%s2 + $0x4] sm:$0xf] %vm5612, %v5573
      %5615 = vst.msk [vmem:[%s2 + $0x8] sm:$0xf] %vm5612, %v5574
      %5616 = vst.msk [vmem:[%s2 + $0xc] sm:$0xf] %vm5612, %v5575
      %5617 = vst.msk [vmem:[%s2 + $0x10] sm:$0xf] %vm5612, %v5576
      %5618 = vst.msk [vmem:[%s2 + $0x14] sm:$0xf] %vm5612, %v5577
      %5619 = vst.msk [vmem:[%s2 + $0x18] sm:$0xf] %vm5612, %v5578
      %5620 = vst.msk [vmem:[%s2 + $0x1c] sm:$0xf] %vm5612, %v5579
      %5621 = vst.msk [vmem:[%s2 + $0x20] sm:$0xf] %vm5612, %v5580
      %5622 = vst.msk [vmem:[%s2 + $0x24] sm:$0xf] %vm5612, %v5581
      %5623 = vst.msk [vmem:[%s2 + $0x28] sm:$0xf] %vm5612, %v5582
      %5624 = vst.msk [vmem:[%s2 + $0x2c] sm:$0xf] %vm5612, %v5583
      %5625 = vst.msk [vmem:[%s2 + $0x30] sm:$0xf] %vm5612, %v5584
      %5626 = vst.msk [vmem:[%s2 + $0x34] sm:$0xf] %vm5612, %v5585
      %5627 = vst.msk [vmem:[%s2 + $0x38] sm:$0xf] %vm5612, %v5586
      %5628 = vst.msk [vmem:[%s2 + $0x3c] sm:$0xf] %vm5612, %v5587
      %5629 = vst.msk [vmem:[%s2 + $0x40] sm:$0xf] %vm5612, %v5588
      %5630 = vst.msk [vmem:[%s2 + $0x44] sm:$0xf] %vm5612, %v5589
      %5631 = vst.msk [vmem:[%s2 + $0x48] sm:$0xf] %vm5612, %v5590
      %5632 = vst.msk [vmem:[%s2 + $0x4c] sm:$0xf] %vm5612, %v5591
    $region21: #{tpu_custom_call.1} parent=1 // pred_fallthru
      _
    // Predicated region
    $region22: #{tpu_custom_call.1} parent=1 // pred_check
      _
    $region23: #{tpu_custom_call.1} parent=1 // pred_check_branch
      %5634 = sbr.rel (0) target = $region25
    $region24: #{tpu_custom_call.1} parent=1 // pred_region
      _
    $region25: #{tpu_custom_call.1} parent=1 // pred_fallthru
      _
    // Predicated region
    $region26: #{tpu_custom_call.1} parent=1 // pred_check
      _
    $region27: #{tpu_custom_call.1} parent=1 // pred_check_branch
      %5636 = sbr.rel (0) target = $region29
    $region28: #{tpu_custom_call.1} parent=1 // pred_region
      _
    $region29: #{tpu_custom_call.1} parent=1 // pred_fallthru
      _
    %5637 = vsyncpa [#allocation4], 1

</llo_original>
